<compile_context>
chip_gen: v6e
topology: v6e:2x2x1
jax: 0.10.0
libtpu: 0.0.40
codegen_flags: <defaults>
</compile_context>

<pallas_src>
import functools

import jax
import jax.numpy as jnp
from jax.experimental import pallas as pl
from jax.experimental.pallas import tpu as pltpu


# MXU operand dtype (f32 accumulation via preferred_element_type). bf16 is the right
# default on v6e/v7x; it is also fine on v5e because only matmul operands are bf16.
_MM_DTYPE = jnp.bfloat16


# =============================================================================
# Fused GAT layer kernel: projection + all heads' attention + residual + act
# =============================================================================

def _gat_layer_kernel(x_ref, w_ref, a_ref, adj_ref, o_ref, *,
                      n_heads, head_dim, negative_slope, activation):
    x = x_ref[0]                                   # [N, Din]   (bf16 operands)
    mm_dt = x.dtype
    hf = n_heads * head_dim

    # Single matmul for W and W_res (concatenated along the output axis).
    proj = jnp.dot(x, w_ref[...], preferred_element_type=jnp.float32)  # [N, 2*H*F] f32
    wh = proj[:, :hf].astype(mm_dt)                # projected features (MXU operand copy)
    res = proj[:, hf:]                             # residual projection (f32)
    adj = adj_ref[0]                               # [N, N]

    # One matmul gives a_dst.Wh (cols 0..H-1) and a_src.Wh (cols H..2H-1) for ALL heads;
    # a_ref is a block-structured [H*F, max(2H, 8)] matrix built at init time.
    scores = jnp.dot(wh, a_ref[...], preferred_element_type=jnp.float32)  # [N, >=2H] f32
    scores_t = scores.T                            # single tiny transpose -> [>=2H, N]

    neg_big = jnp.float32(-1e30)
    outs = []
    for h in range(n_heads):                       # all heads fused: static unroll
        lo, hi = h * head_dim, (h + 1) * head_dim
        wh_h = wh[:, lo:hi]                        # [N, F]
        e_dst = scores[:, h:h + 1]                 # [N, 1]  a_dst . Wh_i
        e_src = scores_t[n_heads + h:n_heads + h + 1, :]   # [1, N]  a_src . Wh_j
        logits = e_dst + e_src                     # edge j -> i
        logits = jnp.where(logits > 0, logits, negative_slope * logits)   # LeakyReLU
        logits = jnp.where(adj > 0, logits, neg_big)                      # mask non-edges
        logits = logits - jnp.max(logits, axis=-1, keepdims=True)
        p = jnp.exp(logits)                        # f32 softmax (self-loops keep rows valid)
        attn = p / jnp.sum(p, axis=-1, keepdims=True)
        outs.append(jnp.dot(attn.astype(mm_dt), wh_h,
                            preferred_element_type=jnp.float32))          # [N, F]

    out = (outs[0] if n_heads == 1 else jnp.concatenate(outs, axis=-1)) + res
    if activation == "relu":
        out = jnp.maximum(out, 0.0)
    o_ref[0] = out.astype(o_ref.dtype)             # one lane-dense [N, H*F] store


def gat_layer(x_b, w_cat, a_cat, adj_b, *, n_heads, head_dim, activation,
              negative_slope):
    """Batched fused GAT layer.

    x_b:   [B, N, Din]   node features per graph
    w_cat: [Din, 2*H*F]  concat(W, W_res)
    a_cat: [H*F, C]      block-structured attention vectors (C = max(2H, 8))
    adj_b: [B, N, N]     dense adjacency adj[dst, src] per graph
    returns [B, N, H*F]
    """
    B, N, din = x_b.shape
    hf = n_heads * head_dim
    cols = a_cat.shape[1]
    kern = functools.partial(_gat_layer_kernel, n_heads=n_heads, head_dim=head_dim,
                             negative_slope=negative_slope, activation=activation)
    return pl.pallas_call(
        kern,
        out_shape=jax.ShapeDtypeStruct((B, N, hf), jnp.float32),
        grid=(B,),
        in_specs=[
            pl.BlockSpec((1, N, din), lambda b: (b, 0, 0)),
            pl.BlockSpec((din, 2 * hf), lambda b: (0, 0)),
            pl.BlockSpec((hf, cols), lambda b: (0, 0)),
            pl.BlockSpec((1, N, N), lambda b: (b, 0, 0)),
        ],
        out_specs=pl.BlockSpec((1, N, hf), lambda b: (b, 0, 0)),
        compiler_params=pltpu.CompilerParams(
            # On v7x the two graphs of the batched encoder map to the two TensorCores.
            dimension_semantics=("parallel",)),
    )(x_b.astype(_MM_DTYPE), w_cat.astype(_MM_DTYPE),
      a_cat.astype(_MM_DTYPE), adj_b.astype(jnp.float32))


# =============================================================================
# Fused edge-reconstruction MLP + sigmoid + BCE (scalar output)
# =============================================================================

def _edge_bce_kernel(feat_ref, w1_ref, b1_ref, w2_ref, b2_ref, o_ref, *,
                     threshold, negative_slope):
    h = jnp.dot(feat_ref[...], w1_ref[...], preferred_element_type=jnp.float32)
    h = h + b1_ref[...]
    h = jnp.where(h > 0, h, negative_slope * h)                    # LeakyReLU
    # fc2 (output width 1) as a lane reduction instead of a 1-wide matmul / store.
    logit = jnp.sum(h * w2_ref[...], axis=-1, keepdims=True) + b2_ref[...]   # [M, 1]
    p = jax.nn.sigmoid(logit)
    p = jnp.clip(p, 1e-12, 1.0 - 1e-12)
    row = jax.lax.broadcasted_iota(jnp.int32, p.shape, 0)
    y = jnp.where(row < threshold, 1.0, 0.0)                       # first half = positives
    loss = -(y * jnp.log(p) + (1.0 - y) * jnp.log(1.0 - p))
    o_ref[...] = jnp.sum(loss, axis=(0, 1), keepdims=True) / loss.shape[0]


def edge_recon_bce_loss(feat, w1, b1, w2, b2, *, threshold, negative_slope):
    m, d = feat.shape
    hdim = w1.shape[1]
    out = pl.pallas_call(
        functools.partial(_edge_bce_kernel, threshold=threshold,
                          negative_slope=negative_slope),
        out_shape=jax.ShapeDtypeStruct((1, 1), jnp.float32),
        in_specs=[pl.BlockSpec((m, d), lambda: (0, 0)),
                  pl.BlockSpec((d, hdim), lambda: (0, 0)),
                  pl.BlockSpec((1, hdim), lambda: (0, 0)),
                  pl.BlockSpec((1, hdim), lambda: (0, 0)),
                  pl.BlockSpec((1, 1), lambda: (0, 0))],
        out_specs=pl.BlockSpec((1, 1), lambda: (0, 0)),
    )(feat.astype(_MM_DTYPE), w1.astype(_MM_DTYPE),
      b1.reshape(1, -1).astype(jnp.float32),
      w2.reshape(1, -1).astype(jnp.float32),
      b2.reshape(1, 1).astype(jnp.float32))
    return out[0, 0]


# =============================================================================
# Fused classifier MLP + cross-entropy (broadcast label, scalar output)
# =============================================================================

def _classifier_ce_kernel(x_ref, w1_ref, b1_ref, w2_ref, b2_ref, o_ref, *, label):
    h = jnp.dot(x_ref[...], w1_ref[...], preferred_element_type=jnp.float32)
    h = jnp.maximum(h + b1_ref[...], 0.0)                          # ReLU
    logits = jnp.dot(h, w2_ref[...], preferred_element_type=jnp.float32) + b2_ref[...]
    m = jnp.max(logits, axis=-1, keepdims=True)
    lse = m + jnp.log(jnp.sum(jnp.exp(logits - m), axis=-1, keepdims=True))
    logp = logits[:, label:label + 1] - lse                        # [N, 1]
    o_ref[...] = -jnp.sum(logp, axis=(0, 1), keepdims=True) / logp.shape[0]


def classifier_ce_loss(x, w1, b1, w2, b2, *, label):
    n, d = x.shape
    hdim = w1.shape[1]
    c = w2.shape[1]
    out = pl.pallas_call(
        functools.partial(_classifier_ce_kernel, label=int(label)),
        out_shape=jax.ShapeDtypeStruct((1, 1), jnp.float32),
        in_specs=[pl.BlockSpec((n, d), lambda: (0, 0)),
                  pl.BlockSpec((d, hdim), lambda: (0, 0)),
                  pl.BlockSpec((1, hdim), lambda: (0, 0)),
                  pl.BlockSpec((hdim, c), lambda: (0, 0)),
                  pl.BlockSpec((1, c), lambda: (0, 0))],
        out_specs=pl.BlockSpec((1, 1), lambda: (0, 0)),
    )(x.astype(_MM_DTYPE), w1.astype(_MM_DTYPE),
      b1.reshape(1, -1).astype(jnp.float32),
      w2.astype(jnp.float32), b2.reshape(1, -1).astype(jnp.float32))
    return out[0, 0]


# =============================================================================
# Tiny losses left to XLA (a dedicated launch for a ~KB reduction is pure overhead)
# =============================================================================

def _l2_normalize(v, eps=1e-12):
    return v * jax.lax.rsqrt(jnp.sum(v * v, axis=-1, keepdims=True) + eps)


def sce_loss(x, y, alpha):
    cos = jnp.sum(_l2_normalize(x) * _l2_normalize(y), axis=-1)
    return jnp.mean((1.0 - cos) ** alpha)


def cosine_embedding_neg_loss(x, y):
    # nn.CosineEmbeddingLoss with target = -1, margin = 0
    cos = jnp.sum(_l2_normalize(x) * _l2_normalize(y), axis=-1)
    return jnp.mean(jnp.maximum(cos, 0.0))


# =============================================================================
# Parameters
# =============================================================================

def xavier_uniform(key, shape):
    fan_in, fan_out = shape[-2], shape[-1]
    a = (6.0 / (fan_in + fan_out)) ** 0.5
    return jax.random.uniform(key, shape, jnp.float32, -a, a)


def _attn_matrix(a_dst, a_src, n_h, f):
    """Block-structured [H*F, max(2H, 8)] matrix so one matmul yields all heads'
    a_dst.Wh (cols 0..H-1) and a_src.Wh (cols H..2H-1)."""
    hf = n_h * f
    cols = max(2 * n_h, 8)
    A = jnp.zeros((hf, cols), jnp.float32)
    for h in range(n_h):
        A = A.at[h * f:(h + 1) * f, h].set(a_dst[h])
        A = A.at[h * f:(h + 1) * f, n_h + h].set(a_src[h])
    return A


def init_params(key, *, n_dim, hidden_dim, n_layers, n_heads):
    f_enc = hidden_dim // n_heads
    keys = iter(jax.random.split(key, 64))
    nk = lambda: next(keys)

    def gat_params(in_dim, n_h, f):
        W = xavier_uniform(nk(), (in_dim, n_h * f))
        W_res = xavier_uniform(nk(), (in_dim, n_h * f))
        a_dst = xavier_uniform(nk(), (n_h, f))
        a_src = xavier_uniform(nk(), (n_h, f))
        return dict(W_cat=jnp.concatenate([W, W_res], axis=1),   # [in, 2*H*F]
                    A_attn=_attn_matrix(a_dst, a_src, n_h, f))   # [H*F, max(2H, 8)]

    enc_layers = []
    in_dim = n_dim
    for _ in range(n_layers):
        enc_layers.append(gat_params(in_dim, n_heads, f_enc))
        in_dim = n_heads * f_enc

    decoder = gat_params(hidden_dim, 1, n_dim)                   # 1 layer, 1 output head

    hl = hidden_dim * n_layers
    return dict(
        encoder=enc_layers,
        decoder=decoder,
        enc_mask_token=jnp.zeros((1, n_dim), jnp.float32),
        W_e2d=xavier_uniform(nk(), (hl, hidden_dim)),            # no bias
        edge_fc1_w=xavier_uniform(nk(), (hl * 2, hidden_dim)),
        edge_fc1_b=jnp.zeros((hidden_dim,), jnp.float32),
        edge_fc2_w=xavier_uniform(nk(), (hidden_dim, 1)),
        edge_fc2_b=jnp.zeros((1,), jnp.float32),
        cls1_w=xavier_uniform(nk(), (hl, hidden_dim)),
        cls1_b=jnp.zeros((hidden_dim,), jnp.float32),
        cls2_w=xavier_uniform(nk(), (hidden_dim, 2)),
        cls2_b=jnp.zeros((2,), jnp.float32),
    )


# =============================================================================
# GMAEModel.forward(g, label, dif_g) -> scalar loss
# =============================================================================

def gmae_forward(params, key, x, adj, edges_src, edges_dst, x_dif, adj_dif, *,
                 cfg, label):
    n_heads = cfg["n_heads"]
    ns = cfg["negative_slope"]
    hidden_dim = cfg["hidden_dim"]
    n_dim = cfg["n_dim"]
    f_enc = hidden_dim // n_heads
    N = x.shape[0]
    Nd = x_dif.shape[0]
    k_mask, k_pos, k_negs, k_negd, k_mal, k_ben = jax.random.split(key, 6)

    # --- encoding_mask_noise --------------------------------------------------
    perm = jax.random.permutation(k_mask, N)
    num_mask = int(cfg["mask_rate"] * N)
    mask_nodes = perm[:num_mask]
    x_masked = x.at[mask_nodes].set(params["enc_mask_token"])

    # --- batch the two graphs so both encoder passes share each pallas_call ----
    n_max = max(N, Nd)

    def pad_graph(xg, ag, n):
        p = n_max - n
        xg = jnp.pad(xg, ((0, p), (0, 0)))
        ag = jnp.pad(ag, ((0, p), (0, p)))
        if p:   # self-loops on padded rows keep the masked softmax well defined
            ag = ag.at[jnp.arange(n, n_max), jnp.arange(n, n_max)].set(1.0)
        return xg, ag

    x0, a0 = pad_graph(x_masked, adj, N)
    x1, a1 = pad_graph(x_dif, adj_dif, Nd)
    xb = jnp.stack([x0, x1])                      # [2, Nmax, n_dim]
    ab = jnp.stack([a0, a1])                      # [2, Nmax, Nmax]

    # --- encoder: one fused pallas_call per layer for BOTH graphs --------------
    hidden_b = []
    h = xb
    for lp in params["encoder"]:
        h = gat_layer(h, lp["W_cat"], lp["A_attn"], ab, n_heads=n_heads,
                      head_dim=f_enc, activation="relu", negative_slope=ns)
        hidden_b.append(h)
    enc_rep = jnp.concatenate([hb[0, :N] for hb in hidden_b], axis=1)    # [N, hl]
    dif_rep = jnp.concatenate([hb[1, :Nd] for hb in hidden_b], axis=1)   # [Nd, hl]

    # --- encoder_to_decoder folded into the decoder projection (associativity) -
    dec = params["decoder"]
    w_dec_fold = jnp.dot(params["W_e2d"], dec["W_cat"])                  # [hl, 2*n_dim]
    recon = gat_layer(enc_rep[None], w_dec_fold, dec["A_attn"], adj[None],
                      n_heads=1, head_dim=n_dim, activation="none",
                      negative_slope=ns)[0]                              # [N, n_dim]

    # --- masked-node SCE reconstruction loss ----------------------------------
    x_init = jnp.take(x, mask_nodes, axis=0)
    x_rec = jnp.take(recon, mask_nodes, axis=0)
    recon_rec_val = sce_loss(x_rec, x_init, cfg["alpha_l"])

    # --- edge reconstruction (fused MLP + sigmoid + BCE) -----------------------
    threshold = min(10000, N)
    E = edges_src.shape[0]
    # TODO(synk): reference uses random.sample w/o replacement and DGL
    # global_uniform_negative_sampling (true non-edges); approximated with
    # uniform sampling with replacement here.
    pos_idx = jax.random.randint(k_pos, (threshold,), 0, E)
    pos_src = jnp.take(edges_src, pos_idx)
    pos_dst = jnp.take(edges_dst, pos_idx)
    neg_src = jax.random.randint(k_negs, (threshold,), 0, N)
    neg_dst = jax.random.randint(k_negd, (threshold,), 0, N)
    src = jnp.concatenate([pos_src, neg_src])
    dst = jnp.concatenate([pos_dst, neg_dst])
    feat = jnp.concatenate([jnp.take(enc_rep, src, axis=0),
                            jnp.take(enc_rep, dst, axis=0)], axis=-1)    # [2T, 2*hl]
    recon_loss_val = edge_recon_bce_loss(
        feat, params["edge_fc1_w"], params["edge_fc1_b"],
        params["edge_fc2_w"], params["edge_fc2_b"],
        threshold=threshold, negative_slope=ns)

    # --- supervised classification (fused MLP + CrossEntropy vs broadcast label)
    supervised_loss = classifier_ce_loss(
        enc_rep, params["cls1_w"], params["cls1_b"],
        params["cls2_w"], params["cls2_b"], label=label)

    # --- contrastive loss vs the different graph (CosineEmbedding, target -1) --
    n_s = min(1024, Nd, N)
    mal_idx = jax.random.permutation(k_mal, Nd)[:n_s]
    ben_idx = jax.random.permutation(k_ben, N)[:n_s]
    contrastive_loss_val = cosine_embedding_neg_loss(
        jnp.take(dif_rep, mal_idx, axis=0),
        jnp.take(enc_rep, ben_idx, axis=0))

    compactness_loss_val = 0.0   # `if False:` branch in the reference

    return (recon_rec_val + recon_loss_val + supervised_loss
            + contrastive_loss_val + compactness_loss_val)


# =============================================================================
# Main
# =============================================================================

if __name__ == "__main__":
    cfg = dict(n_dim=16, e_dim=16, hidden_dim=32, n_layers=2, n_heads=4,
               negative_slope=0.2, mask_rate=0.5, alpha_l=2)
    # TODO(synk): edge features (e_dim) and create_norm(norm) feed the upstream GAT
    # module whose code is not provided; a standard multi-head GAT with linear residual
    # (feat_drop / attn_drop = 0) is implemented instead.

    key = jax.random.PRNGKey(0)
    (k_param, k_x, k_e1, k_e2,
     k_xd, k_ed1, k_ed2, k_fwd) = jax.random.split(key, 8)

    params = init_params(k_param, n_dim=cfg["n_dim"], hidden_dim=cfg["hidden_dim"],
                         n_layers=cfg["n_layers"], n_heads=cfg["n_heads"])

    # graph g: N nodes, E directed edges, dense adjacency adj[dst, src] + self loops
    N, E = 64, 256
    x = jax.random.normal(k_x, (N, cfg["n_dim"]), jnp.float32)
    esrc = jax.random.randint(k_e1, (E,), 0, N)
    edst = jax.random.randint(k_e2, (E,), 0, N)
    adj = jnp.zeros((N, N), jnp.float32).at[edst, esrc].set(1.0)
    adj = adj.at[jnp.arange(N), jnp.arange(N)].set(1.0)

    # "different" graph for the contrastive term
    Nd = 48
    x_dif = jax.random.normal(k_xd, (Nd, cfg["n_dim"]), jnp.float32)
    dsrc = jax.random.randint(k_ed1, (E,), 0, Nd)
    ddst = jax.random.randint(k_ed2, (E,), 0, Nd)
    adj_dif = jnp.zeros((Nd, Nd), jnp.float32).at[ddst, dsrc].set(1.0)
    adj_dif = adj_dif.at[jnp.arange(Nd), jnp.arange(Nd)].set(1.0)

    label = 1

    fwd = jax.jit(functools.partial(gmae_forward, cfg=cfg, label=label))
    loss = fwd(params, k_fwd, x, adj, esrc, edst, x_dif, adj_dif)
    jax.block_until_ready(loss)
    print("KERNEL_OK")
</pallas_src>

<mosaic_0001>
module attributes {stable_mosaic.version = 11 : i64} {
  func.func @_gat_layer_kernel(%arg0: i32, %arg1: memref<1x64x16xbf16, #tpu.memory_space<vmem>>, %arg2: memref<16x64xbf16, #tpu.memory_space<vmem>>, %arg3: memref<32x8xbf16, #tpu.memory_space<vmem>>, %arg4: memref<1x64x64xf32, #tpu.memory_space<vmem>>, %arg5: memref<1x64x32xf32, #tpu.memory_space<vmem>>) attributes {dimension_semantics = [#tpu.dimension_semantics<parallel>], iteration_bounds = array<i64: 2>, scalar_prefetch = 0 : i64, scratch_operands = 0 : i64, tpu.core_type = #tpu.core_type<tc>, window_params = [{transform_indices = @transform_0, window_bounds = array<i64: 1, 64, 16>}, {pipeline_mode = #tpu.pipeline_mode<synchronous>, transform_indices = @transform_1, window_bounds = array<i64: 16, 64>}, {pipeline_mode = #tpu.pipeline_mode<synchronous>, transform_indices = @transform_2, window_bounds = array<i64: 32, 8>}, {transform_indices = @transform_3, window_bounds = array<i64: 1, 64, 64>}, {transform_indices = @transform_4, window_bounds = array<i64: 1, 64, 32>}]} {
    %c0 = arith.constant 0 : index
    %c0_0 = arith.constant 0 : index
    %c0_1 = arith.constant 0 : index
    %0 = vector.load %arg1[%c0, %c0_0, %c0_1] : memref<1x64x16xbf16, #tpu.memory_space<vmem>>, vector<1x64x16xbf16>
    %1 = vector.shape_cast %0 : vector<1x64x16xbf16> to vector<64x16xbf16>
    %c0_2 = arith.constant 0 : index
    %c0_3 = arith.constant 0 : index
    %2 = vector.load %arg2[%c0_2, %c0_3] : memref<16x64xbf16, #tpu.memory_space<vmem>>, vector<16x64xbf16>
    %cst = arith.constant dense<0.000000e+00> : vector<64x64xf32>
    %3 = tpu.matmul %1, %2, %cst {dimension_numbers = #tpu.dot_dimension_numbers<[1], [0], [0], [1], [0, 0, 1, 1], [], []>} : vector<64x16xbf16>, vector<16x64xbf16>, vector<64x64xf32> -> vector<64x64xf32>
    %4 = vector.extract_strided_slice %3 {offsets = [0, 0], sizes = [64, 32], strides = [1, 1]} : vector<64x64xf32> to vector<64x32xf32>
    %5 = arith.truncf %4 : vector<64x32xf32> to vector<64x32xbf16>
    %6 = vector.extract_strided_slice %3 {offsets = [0, 32], sizes = [64, 32], strides = [1, 1]} : vector<64x64xf32> to vector<64x32xf32>
    %c0_4 = arith.constant 0 : index
    %c0_5 = arith.constant 0 : index
    %c0_6 = arith.constant 0 : index
    %7 = vector.load %arg4[%c0_4, %c0_5, %c0_6] : memref<1x64x64xf32, #tpu.memory_space<vmem>>, vector<1x64x64xf32>
    %8 = vector.shape_cast %7 : vector<1x64x64xf32> to vector<64x64xf32>
    %c0_7 = arith.constant 0 : index
    %c0_8 = arith.constant 0 : index
    %9 = vector.load %arg3[%c0_7, %c0_8] : memref<32x8xbf16, #tpu.memory_space<vmem>>, vector<32x8xbf16>
    %cst_9 = arith.constant dense<0.000000e+00> : vector<64x8xf32>
    %10 = tpu.matmul %5, %9, %cst_9 {dimension_numbers = #tpu.dot_dimension_numbers<[1], [0], [0], [1], [0, 0, 1, 1], [], []>} : vector<64x32xbf16>, vector<32x8xbf16>, vector<64x8xf32> -> vector<64x8xf32>
    %11 = tpu.transpose %10, [1, 0] : vector<64x8xf32> -> vector<8x64xf32>
    %12 = vector.extract_strided_slice %5 {offsets = [0, 0], sizes = [64, 8], strides = [1, 1]} : vector<64x32xbf16> to vector<64x8xbf16>
    %13 = vector.extract_strided_slice %10 {offsets = [0, 0], sizes = [64, 1], strides = [1, 1]} : vector<64x8xf32> to vector<64x1xf32>
    %14 = vector.extract_strided_slice %11 {offsets = [4, 0], sizes = [1, 64], strides = [1, 1]} : vector<8x64xf32> to vector<1x64xf32>
    %15 = vector.broadcast %13 : vector<64x1xf32> to vector<64x64xf32>
    %16 = vector.broadcast %14 : vector<1x64xf32> to vector<64x64xf32>
    %17 = arith.addf %15, %16 : vector<64x64xf32>
    %cst_10 = arith.constant 0.000000e+00 : f32
    %18 = vector.broadcast %cst_10 : f32 to vector<64x64xf32>
    %19 = arith.cmpf ogt, %17, %18 : vector<64x64xf32>
    %cst_11 = arith.constant 2.000000e-01 : f32
    %20 = vector.broadcast %cst_11 : f32 to vector<64x64xf32>
    %21 = arith.mulf %20, %17 : vector<64x64xf32>
    %22 = arith.select %19, %17, %21 : vector<64x64xi1>, vector<64x64xf32>
    %cst_12 = arith.constant 0.000000e+00 : f32
    %23 = vector.broadcast %cst_12 : f32 to vector<64x64xf32>
    %24 = arith.cmpf ogt, %8, %23 : vector<64x64xf32>
    %cst_13 = arith.constant -1.000000e+30 : f32
    %25 = vector.broadcast %cst_13 : f32 to vector<64x64xf32>
    %26 = arith.select %24, %22, %25 : vector<64x64xi1>, vector<64x64xf32>
    %cst_14 = arith.constant dense<0xFF800000> : vector<64xf32>
    %27 = vector.multi_reduction <maximumf>, %26, %cst_14 [1] : vector<64x64xf32> to vector<64xf32>
    %28 = vector.shape_cast %27 : vector<64xf32> to vector<64x1xf32>
    %29 = vector.broadcast %28 : vector<64x1xf32> to vector<64x64xf32>
    %30 = arith.subf %26, %29 : vector<64x64xf32>
    %31 = math.exp %30 : vector<64x64xf32>
    %cst_15 = arith.constant dense<0.000000e+00> : vector<64xf32>
    %32 = vector.multi_reduction <add>, %31, %cst_15 [1] : vector<64x64xf32> to vector<64xf32>
    %33 = vector.shape_cast %32 : vector<64xf32> to vector<64x1xf32>
    %34 = vector.broadcast %33 : vector<64x1xf32> to vector<64x64xf32>
    %35 = arith.divf %31, %34 : vector<64x64xf32>
    %36 = arith.truncf %35 : vector<64x64xf32> to vector<64x64xbf16>
    %cst_16 = arith.constant dense<0.000000e+00> : vector<64x8xf32>
    %37 = tpu.matmul %36, %12, %cst_16 {dimension_numbers = #tpu.dot_dimension_numbers<[1], [0], [0], [1], [0, 0, 1, 1], [], []>} : vector<64x64xbf16>, vector<64x8xbf16>, vector<64x8xf32> -> vector<64x8xf32>
    %38 = vector.extract_strided_slice %5 {offsets = [0, 8], sizes = [64, 8], strides = [1, 1]} : vector<64x32xbf16> to vector<64x8xbf16>
    %39 = vector.extract_strided_slice %10 {offsets = [0, 1], sizes = [64, 1], strides = [1, 1]} : vector<64x8xf32> to vector<64x1xf32>
    %40 = vector.extract_strided_slice %11 {offsets = [5, 0], sizes = [1, 64], strides = [1, 1]} : vector<8x64xf32> to vector<1x64xf32>
    %41 = vector.broadcast %39 : vector<64x1xf32> to vector<64x64xf32>
    %42 = vector.broadcast %40 : vector<1x64xf32> to vector<64x64xf32>
    %43 = arith.addf %41, %42 : vector<64x64xf32>
    %cst_17 = arith.constant 0.000000e+00 : f32
    %44 = vector.broadcast %cst_17 : f32 to vector<64x64xf32>
    %45 = arith.cmpf ogt, %43, %44 : vector<64x64xf32>
    %cst_18 = arith.constant 2.000000e-01 : f32
    %46 = vector.broadcast %cst_18 : f32 to vector<64x64xf32>
    %47 = arith.mulf %46, %43 : vector<64x64xf32>
    %48 = arith.select %45, %43, %47 : vector<64x64xi1>, vector<64x64xf32>
    %cst_19 = arith.constant 0.000000e+00 : f32
    %49 = vector.broadcast %cst_19 : f32 to vector<64x64xf32>
    %50 = arith.cmpf ogt, %8, %49 : vector<64x64xf32>
    %cst_20 = arith.constant -1.000000e+30 : f32
    %51 = vector.broadcast %cst_20 : f32 to vector<64x64xf32>
    %52 = arith.select %50, %48, %51 : vector<64x64xi1>, vector<64x64xf32>
    %cst_21 = arith.constant dense<0xFF800000> : vector<64xf32>
    %53 = vector.multi_reduction <maximumf>, %52, %cst_21 [1] : vector<64x64xf32> to vector<64xf32>
    %54 = vector.shape_cast %53 : vector<64xf32> to vector<64x1xf32>
    %55 = vector.broadcast %54 : vector<64x1xf32> to vector<64x64xf32>
    %56 = arith.subf %52, %55 : vector<64x64xf32>
    %57 = math.exp %56 : vector<64x64xf32>
    %cst_22 = arith.constant dense<0.000000e+00> : vector<64xf32>
    %58 = vector.multi_reduction <add>, %57, %cst_22 [1] : vector<64x64xf32> to vector<64xf32>
    %59 = vector.shape_cast %58 : vector<64xf32> to vector<64x1xf32>
    %60 = vector.broadcast %59 : vector<64x1xf32> to vector<64x64xf32>
    %61 = arith.divf %57, %60 : vector<64x64xf32>
    %62 = arith.truncf %61 : vector<64x64xf32> to vector<64x64xbf16>
    %cst_23 = arith.constant dense<0.000000e+00> : vector<64x8xf32>
    %63 = tpu.matmul %62, %38, %cst_23 {dimension_numbers = #tpu.dot_dimension_numbers<[1], [0], [0], [1], [0, 0, 1, 1], [], []>} : vector<64x64xbf16>, vector<64x8xbf16>, vector<64x8xf32> -> vector<64x8xf32>
    %64 = vector.extract_strided_slice %5 {offsets = [0, 16], sizes = [64, 8], strides = [1, 1]} : vector<64x32xbf16> to vector<64x8xbf16>
    %65 = vector.extract_strided_slice %10 {offsets = [0, 2], sizes = [64, 1], strides = [1, 1]} : vector<64x8xf32> to vector<64x1xf32>
    %66 = vector.extract_strided_slice %11 {offsets = [6, 0], sizes = [1, 64], strides = [1, 1]} : vector<8x64xf32> to vector<1x64xf32>
    %67 = vector.broadcast %65 : vector<64x1xf32> to vector<64x64xf32>
    %68 = vector.broadcast %66 : vector<1x64xf32> to vector<64x64xf32>
    %69 = arith.addf %67, %68 : vector<64x64xf32>
    %cst_24 = arith.constant 0.000000e+00 : f32
    %70 = vector.broadcast %cst_24 : f32 to vector<64x64xf32>
    %71 = arith.cmpf ogt, %69, %70 : vector<64x64xf32>
    %cst_25 = arith.constant 2.000000e-01 : f32
    %72 = vector.broadcast %cst_25 : f32 to vector<64x64xf32>
    %73 = arith.mulf %72, %69 : vector<64x64xf32>
    %74 = arith.select %71, %69, %73 : vector<64x64xi1>, vector<64x64xf32>
    %cst_26 = arith.constant 0.000000e+00 : f32
    %75 = vector.broadcast %cst_26 : f32 to vector<64x64xf32>
    %76 = arith.cmpf ogt, %8, %75 : vector<64x64xf32>
    %cst_27 = arith.constant -1.000000e+30 : f32
    %77 = vector.broadcast %cst_27 : f32 to vector<64x64xf32>
    %78 = arith.select %76, %74, %77 : vector<64x64xi1>, vector<64x64xf32>
    %cst_28 = arith.constant dense<0xFF800000> : vector<64xf32>
    %79 = vector.multi_reduction <maximumf>, %78, %cst_28 [1] : vector<64x64xf32> to vector<64xf32>
    %80 = vector.shape_cast %79 : vector<64xf32> to vector<64x1xf32>
    %81 = vector.broadcast %80 : vector<64x1xf32> to vector<64x64xf32>
    %82 = arith.subf %78, %81 : vector<64x64xf32>
    %83 = math.exp %82 : vector<64x64xf32>
    %cst_29 = arith.constant dense<0.000000e+00> : vector<64xf32>
    %84 = vector.multi_reduction <add>, %83, %cst_29 [1] : vector<64x64xf32> to vector<64xf32>
    %85 = vector.shape_cast %84 : vector<64xf32> to vector<64x1xf32>
    %86 = vector.broadcast %85 : vector<64x1xf32> to vector<64x64xf32>
    %87 = arith.divf %83, %86 : vector<64x64xf32>
    %88 = arith.truncf %87 : vector<64x64xf32> to vector<64x64xbf16>
    %cst_30 = arith.constant dense<0.000000e+00> : vector<64x8xf32>
    %89 = tpu.matmul %88, %64, %cst_30 {dimension_numbers = #tpu.dot_dimension_numbers<[1], [0], [0], [1], [0, 0, 1, 1], [], []>} : vector<64x64xbf16>, vector<64x8xbf16>, vector<64x8xf32> -> vector<64x8xf32>
    %90 = vector.extract_strided_slice %5 {offsets = [0, 24], sizes = [64, 8], strides = [1, 1]} : vector<64x32xbf16> to vector<64x8xbf16>
    %91 = vector.extract_strided_slice %10 {offsets = [0, 3], sizes = [64, 1], strides = [1, 1]} : vector<64x8xf32> to vector<64x1xf32>
    %92 = vector.extract_strided_slice %11 {offsets = [7, 0], sizes = [1, 64], strides = [1, 1]} : vector<8x64xf32> to vector<1x64xf32>
    %93 = vector.broadcast %91 : vector<64x1xf32> to vector<64x64xf32>
    %94 = vector.broadcast %92 : vector<1x64xf32> to vector<64x64xf32>
    %95 = arith.addf %93, %94 : vector<64x64xf32>
    %cst_31 = arith.constant 0.000000e+00 : f32
    %96 = vector.broadcast %cst_31 : f32 to vector<64x64xf32>
    %97 = arith.cmpf ogt, %95, %96 : vector<64x64xf32>
    %cst_32 = arith.constant 2.000000e-01 : f32
    %98 = vector.broadcast %cst_32 : f32 to vector<64x64xf32>
    %99 = arith.mulf %98, %95 : vector<64x64xf32>
    %100 = arith.select %97, %95, %99 : vector<64x64xi1>, vector<64x64xf32>
    %cst_33 = arith.constant 0.000000e+00 : f32
    %101 = vector.broadcast %cst_33 : f32 to vector<64x64xf32>
    %102 = arith.cmpf ogt, %8, %101 : vector<64x64xf32>
    %cst_34 = arith.constant -1.000000e+30 : f32
    %103 = vector.broadcast %cst_34 : f32 to vector<64x64xf32>
    %104 = arith.select %102, %100, %103 : vector<64x64xi1>, vector<64x64xf32>
    %cst_35 = arith.constant dense<0xFF800000> : vector<64xf32>
    %105 = vector.multi_reduction <maximumf>, %104, %cst_35 [1] : vector<64x64xf32> to vector<64xf32>
    %106 = vector.shape_cast %105 : vector<64xf32> to vector<64x1xf32>
    %107 = vector.broadcast %106 : vector<64x1xf32> to vector<64x64xf32>
    %108 = arith.subf %104, %107 : vector<64x64xf32>
    %109 = math.exp %108 : vector<64x64xf32>
    %cst_36 = arith.constant dense<0.000000e+00> : vector<64xf32>
    %110 = vector.multi_reduction <add>, %109, %cst_36 [1] : vector<64x64xf32> to vector<64xf32>
    %111 = vector.shape_cast %110 : vector<64xf32> to vector<64x1xf32>
    %112 = vector.broadcast %111 : vector<64x1xf32> to vector<64x64xf32>
    %113 = arith.divf %109, %112 : vector<64x64xf32>
    %114 = arith.truncf %113 : vector<64x64xf32> to vector<64x64xbf16>
    %cst_37 = arith.constant dense<0.000000e+00> : vector<64x8xf32>
    %115 = tpu.matmul %114, %90, %cst_37 {dimension_numbers = #tpu.dot_dimension_numbers<[1], [0], [0], [1], [0, 0, 1, 1], [], []>} : vector<64x64xbf16>, vector<64x8xbf16>, vector<64x8xf32> -> vector<64x8xf32>
    %116 = tpu.concatenate %37, %63, %89, %115 in 1 : vector<64x8xf32>, vector<64x8xf32>, vector<64x8xf32>, vector<64x8xf32> -> vector<64x32xf32>
    %117 = arith.addf %116, %6 : vector<64x32xf32>
    %cst_38 = arith.constant 0.000000e+00 : f32
    %118 = vector.broadcast %cst_38 : f32 to vector<64x32xf32>
    %119 = arith.maximumf %117, %118 : vector<64x32xf32>
    %c0_39 = arith.constant 0 : index
    %c0_40 = arith.constant 0 : index
    %c0_41 = arith.constant 0 : index
    %120 = vector.load %arg5[%c0_39, %c0_40, %c0_41] : memref<1x64x32xf32, #tpu.memory_space<vmem>>, vector<1x64x32xf32>
    %121 = vector.shape_cast %120 : vector<1x64x32xf32> to vector<64x32xf32>
    %122 = vector.shape_cast %119 : vector<64x32xf32> to vector<1x64x32xf32>
    tpu.vector_store %arg5[%c0_39, %c0_40, %c0_41], %122 {strides = array<i32>} : memref<1x64x32xf32, #tpu.memory_space<vmem>>, vector<1x64x32xf32>,
    return
  }
  func.func @transform_0(%arg0: i32) -> (i32, i32, i32) {
    %c0_i32 = arith.constant 0 : i32
    %c0_i32_0 = arith.constant 0 : i32
    %c0_i32_1 = arith.constant 0 : i32
    return %arg0, %c0_i32, %c0_i32_0 : i32, i32, i32
  }
  func.func @transform_1(%arg0: i32) -> (i32, i32) {
    %c0_i32 = arith.constant 0 : i32
    %c0_i32_0 = arith.constant 0 : i32
    %c0_i32_1 = arith.constant 0 : i32
    return %c0_i32, %c0_i32_0 : i32, i32
  }
  func.func @transform_2(%arg0: i32) -> (i32, i32) {
    %c0_i32 = arith.constant 0 : i32
    %c0_i32_0 = arith.constant 0 : i32
    %c0_i32_1 = arith.constant 0 : i32
    return %c0_i32, %c0_i32_0 : i32, i32
  }
  func.func @transform_3(%arg0: i32) -> (i32, i32, i32) {
    %c0_i32 = arith.constant 0 : i32
    %c0_i32_0 = arith.constant 0 : i32
    %c0_i32_1 = arith.constant 0 : i32
    return %arg0, %c0_i32, %c0_i32_0 : i32, i32, i32
  }
  func.func @transform_4(%arg0: i32) -> (i32, i32, i32) {
    %c0_i32 = arith.constant 0 : i32
    %c0_i32_0 = arith.constant 0 : i32
    %c0_i32_1 = arith.constant 0 : i32
    return %arg0, %c0_i32, %c0_i32_0 : i32, i32, i32
  }
}

module attributes {stable_mosaic.version = 11 : i64} {
  func.func @_gat_layer_kernel(%arg0: i32, %arg1: memref<1x64x32xbf16, #tpu.memory_space<vmem>>, %arg2: memref<32x64xbf16, #tpu.memory_space<vmem>>, %arg3: memref<32x8xbf16, #tpu.memory_space<vmem>>, %arg4: memref<1x64x64xf32, #tpu.memory_space<vmem>>, %arg5: memref<1x64x32xf32, #tpu.memory_space<vmem>>) attributes {dimension_semantics = [#tpu.dimension_semantics<parallel>], iteration_bounds = array<i64: 2>, scalar_prefetch = 0 : i64, scratch_operands = 0 : i64, tpu.core_type = #tpu.core_type<tc>, window_params = [{transform_indices = @transform_0, window_bounds = array<i64: 1, 64, 32>}, {pipeline_mode = #tpu.pipeline_mode<synchronous>, transform_indices = @transform_1, window_bounds = array<i64: 32, 64>}, {pipeline_mode = #tpu.pipeline_mode<synchronous>, transform_indices = @transform_2, window_bounds = array<i64: 32, 8>}, {transform_indices = @transform_3, window_bounds = array<i64: 1, 64, 64>}, {transform_indices = @transform_4, window_bounds = array<i64: 1, 64, 32>}]} {
    %c0 = arith.constant 0 : index
    %c0_0 = arith.constant 0 : index
    %c0_1 = arith.constant 0 : index
    %0 = vector.load %arg1[%c0, %c0_0, %c0_1] : memref<1x64x32xbf16, #tpu.memory_space<vmem>>, vector<1x64x32xbf16>
    %1 = vector.shape_cast %0 : vector<1x64x32xbf16> to vector<64x32xbf16>
    %c0_2 = arith.constant 0 : index
    %c0_3 = arith.constant 0 : index
    %2 = vector.load %arg2[%c0_2, %c0_3] : memref<32x64xbf16, #tpu.memory_space<vmem>>, vector<32x64xbf16>
    %cst = arith.constant dense<0.000000e+00> : vector<64x64xf32>
    %3 = tpu.matmul %1, %2, %cst {dimension_numbers = #tpu.dot_dimension_numbers<[1], [0], [0], [1], [0, 0, 1, 1], [], []>} : vector<64x32xbf16>, vector<32x64xbf16>, vector<64x64xf32> -> vector<64x64xf32>
    %4 = vector.extract_strided_slice %3 {offsets = [0, 0], sizes = [64, 32], strides = [1, 1]} : vector<64x64xf32> to vector<64x32xf32>
    %5 = arith.truncf %4 : vector<64x32xf32> to vector<64x32xbf16>
    %6 = vector.extract_strided_slice %3 {offsets = [0, 32], sizes = [64, 32], strides = [1, 1]} : vector<64x64xf32> to vector<64x32xf32>
    %c0_4 = arith.constant 0 : index
    %c0_5 = arith.constant 0 : index
    %c0_6 = arith.constant 0 : index
    %7 = vector.load %arg4[%c0_4, %c0_5, %c0_6] : memref<1x64x64xf32, #tpu.memory_space<vmem>>, vector<1x64x64xf32>
    %8 = vector.shape_cast %7 : vector<1x64x64xf32> to vector<64x64xf32>
    %c0_7 = arith.constant 0 : index
    %c0_8 = arith.constant 0 : index
    %9 = vector.load %arg3[%c0_7, %c0_8] : memref<32x8xbf16, #tpu.memory_space<vmem>>, vector<32x8xbf16>
    %cst_9 = arith.constant dense<0.000000e+00> : vector<64x8xf32>
    %10 = tpu.matmul %5, %9, %cst_9 {dimension_numbers = #tpu.dot_dimension_numbers<[1], [0], [0], [1], [0, 0, 1, 1], [], []>} : vector<64x32xbf16>, vector<32x8xbf16>, vector<64x8xf32> -> vector<64x8xf32>
    %11 = tpu.transpose %10, [1, 0] : vector<64x8xf32> -> vector<8x64xf32>
    %12 = vector.extract_strided_slice %5 {offsets = [0, 0], sizes = [64, 8], strides = [1, 1]} : vector<64x32xbf16> to vector<64x8xbf16>
    %13 = vector.extract_strided_slice %10 {offsets = [0, 0], sizes = [64, 1], strides = [1, 1]} : vector<64x8xf32> to vector<64x1xf32>
    %14 = vector.extract_strided_slice %11 {offsets = [4, 0], sizes = [1, 64], strides = [1, 1]} : vector<8x64xf32> to vector<1x64xf32>
    %15 = vector.broadcast %13 : vector<64x1xf32> to vector<64x64xf32>
    %16 = vector.broadcast %14 : vector<1x64xf32> to vector<64x64xf32>
    %17 = arith.addf %15, %16 : vector<64x64xf32>
    %cst_10 = arith.constant 0.000000e+00 : f32
    %18 = vector.broadcast %cst_10 : f32 to vector<64x64xf32>
    %19 = arith.cmpf ogt, %17, %18 : vector<64x64xf32>
    %cst_11 = arith.constant 2.000000e-01 : f32
    %20 = vector.broadcast %cst_11 : f32 to vector<64x64xf32>
    %21 = arith.mulf %20, %17 : vector<64x64xf32>
    %22 = arith.select %19, %17, %21 : vector<64x64xi1>, vector<64x64xf32>
    %cst_12 = arith.constant 0.000000e+00 : f32
    %23 = vector.broadcast %cst_12 : f32 to vector<64x64xf32>
    %24 = arith.cmpf ogt, %8, %23 : vector<64x64xf32>
    %cst_13 = arith.constant -1.000000e+30 : f32
    %25 = vector.broadcast %cst_13 : f32 to vector<64x64xf32>
    %26 = arith.select %24, %22, %25 : vector<64x64xi1>, vector<64x64xf32>
    %cst_14 = arith.constant dense<0xFF800000> : vector<64xf32>
    %27 = vector.multi_reduction <maximumf>, %26, %cst_14 [1] : vector<64x64xf32> to vector<64xf32>
    %28 = vector.shape_cast %27 : vector<64xf32> to vector<64x1xf32>
    %29 = vector.broadcast %28 : vector<64x1xf32> to vector<64x64xf32>
    %30 = arith.subf %26, %29 : vector<64x64xf32>
    %31 = math.exp %30 : vector<64x64xf32>
    %cst_15 = arith.constant dense<0.000000e+00> : vector<64xf32>
    %32 = vector.multi_reduction <add>, %31, %cst_15 [1] : vector<64x64xf32> to vector<64xf32>
    %33 = vector.shape_cast %32 : vector<64xf32> to vector<64x1xf32>
    %34 = vector.broadcast %33 : vector<64x1xf32> to vector<64x64xf32>
    %35 = arith.divf %31, %34 : vector<64x64xf32>
    %36 = arith.truncf %35 : vector<64x64xf32> to vector<64x64xbf16>
    %cst_16 = arith.constant dense<0.000000e+00> : vector<64x8xf32>
    %37 = tpu.matmul %36, %12, %cst_16 {dimension_numbers = #tpu.dot_dimension_numbers<[1], [0], [0], [1], [0, 0, 1, 1], [], []>} : vector<64x64xbf16>, vector<64x8xbf16>, vector<64x8xf32> -> vector<64x8xf32>
    %38 = vector.extract_strided_slice %5 {offsets = [0, 8], sizes = [64, 8], strides = [1, 1]} : vector<64x32xbf16> to vector<64x8xbf16>
    %39 = vector.extract_strided_slice %10 {offsets = [0, 1], sizes = [64, 1], strides = [1, 1]} : vector<64x8xf32> to vector<64x1xf32>
    %40 = vector.extract_strided_slice %11 {offsets = [5, 0], sizes = [1, 64], strides = [1, 1]} : vector<8x64xf32> to vector<1x64xf32>
    %41 = vector.broadcast %39 : vector<64x1xf32> to vector<64x64xf32>
    %42 = vector.broadcast %40 : vector<1x64xf32> to vector<64x64xf32>
    %43 = arith.addf %41, %42 : vector<64x64xf32>
    %cst_17 = arith.constant 0.000000e+00 : f32
    %44 = vector.broadcast %cst_17 : f32 to vector<64x64xf32>
    %45 = arith.cmpf ogt, %43, %44 : vector<64x64xf32>
    %cst_18 = arith.constant 2.000000e-01 : f32
    %46 = vector.broadcast %cst_18 : f32 to vector<64x64xf32>
    %47 = arith.mulf %46, %43 : vector<64x64xf32>
    %48 = arith.select %45, %43, %47 : vector<64x64xi1>, vector<64x64xf32>
    %cst_19 = arith.constant 0.000000e+00 : f32
    %49 = vector.broadcast %cst_19 : f32 to vector<64x64xf32>
    %50 = arith.cmpf ogt, %8, %49 : vector<64x64xf32>
    %cst_20 = arith.constant -1.000000e+30 : f32
    %51 = vector.broadcast %cst_20 : f32 to vector<64x64xf32>
    %52 = arith.select %50, %48, %51 : vector<64x64xi1>, vector<64x64xf32>
    %cst_21 = arith.constant dense<0xFF800000> : vector<64xf32>
    %53 = vector.multi_reduction <maximumf>, %52, %cst_21 [1] : vector<64x64xf32> to vector<64xf32>
    %54 = vector.shape_cast %53 : vector<64xf32> to vector<64x1xf32>
    %55 = vector.broadcast %54 : vector<64x1xf32> to vector<64x64xf32>
    %56 = arith.subf %52, %55 : vector<64x64xf32>
    %57 = math.exp %56 : vector<64x64xf32>
    %cst_22 = arith.constant dense<0.000000e+00> : vector<64xf32>
    %58 = vector.multi_reduction <add>, %57, %cst_22 [1] : vector<64x64xf32> to vector<64xf32>
    %59 = vector.shape_cast %58 : vector<64xf32> to vector<64x1xf32>
    %60 = vector.broadcast %59 : vector<64x1xf32> to vector<64x64xf32>
    %61 = arith.divf %57, %60 : vector<64x64xf32>
    %62 = arith.truncf %61 : vector<64x64xf32> to vector<64x64xbf16>
    %cst_23 = arith.constant dense<0.000000e+00> : vector<64x8xf32>
    %63 = tpu.matmul %62, %38, %cst_23 {dimension_numbers = #tpu.dot_dimension_numbers<[1], [0], [0], [1], [0, 0, 1, 1], [], []>} : vector<64x64xbf16>, vector<64x8xbf16>, vector<64x8xf32> -> vector<64x8xf32>
    %64 = vector.extract_strided_slice %5 {offsets = [0, 16], sizes = [64, 8], strides = [1, 1]} : vector<64x32xbf16> to vector<64x8xbf16>
    %65 = vector.extract_strided_slice %10 {offsets = [0, 2], sizes = [64, 1], strides = [1, 1]} : vector<64x8xf32> to vector<64x1xf32>
    %66 = vector.extract_strided_slice %11 {offsets = [6, 0], sizes = [1, 64], strides = [1, 1]} : vector<8x64xf32> to vector<1x64xf32>
    %67 = vector.broadcast %65 : vector<64x1xf32> to vector<64x64xf32>
    %68 = vector.broadcast %66 : vector<1x64xf32> to vector<64x64xf32>
    %69 = arith.addf %67, %68 : vector<64x64xf32>
    %cst_24 = arith.constant 0.000000e+00 : f32
    %70 = vector.broadcast %cst_24 : f32 to vector<64x64xf32>
    %71 = arith.cmpf ogt, %69, %70 : vector<64x64xf32>
    %cst_25 = arith.constant 2.000000e-01 : f32
    %72 = vector.broadcast %cst_25 : f32 to vector<64x64xf32>
    %73 = arith.mulf %72, %69 : vector<64x64xf32>
    %74 = arith.select %71, %69, %73 : vector<64x64xi1>, vector<64x64xf32>
    %cst_26 = arith.constant 0.000000e+00 : f32
    %75 = vector.broadcast %cst_26 : f32 to vector<64x64xf32>
    %76 = arith.cmpf ogt, %8, %75 : vector<64x64xf32>
    %cst_27 = arith.constant -1.000000e+30 : f32
    %77 = vector.broadcast %cst_27 : f32 to vector<64x64xf32>
    %78 = arith.select %76, %74, %77 : vector<64x64xi1>, vector<64x64xf32>
    %cst_28 = arith.constant dense<0xFF800000> : vector<64xf32>
    %79 = vector.multi_reduction <maximumf>, %78, %cst_28 [1] : vector<64x64xf32> to vector<64xf32>
    %80 = vector.shape_cast %79 : vector<64xf32> to vector<64x1xf32>
    %81 = vector.broadcast %80 : vector<64x1xf32> to vector<64x64xf32>
    %82 = arith.subf %78, %81 : vector<64x64xf32>
    %83 = math.exp %82 : vector<64x64xf32>
    %cst_29 = arith.constant dense<0.000000e+00> : vector<64xf32>
    %84 = vector.multi_reduction <add>, %83, %cst_29 [1] : vector<64x64xf32> to vector<64xf32>
    %85 = vector.shape_cast %84 : vector<64xf32> to vector<64x1xf32>
    %86 = vector.broadcast %85 : vector<64x1xf32> to vector<64x64xf32>
    %87 = arith.divf %83, %86 : vector<64x64xf32>
    %88 = arith.truncf %87 : vector<64x64xf32> to vector<64x64xbf16>
    %cst_30 = arith.constant dense<0.000000e+00> : vector<64x8xf32>
    %89 = tpu.matmul %88, %64, %cst_30 {dimension_numbers = #tpu.dot_dimension_numbers<[1], [0], [0], [1], [0, 0, 1, 1], [], []>} : vector<64x64xbf16>, vector<64x8xbf16>, vector<64x8xf32> -> vector<64x8xf32>
    %90 = vector.extract_strided_slice %5 {offsets = [0, 24], sizes = [64, 8], strides = [1, 1]} : vector<64x32xbf16> to vector<64x8xbf16>
    %91 = vector.extract_strided_slice %10 {offsets = [0, 3], sizes = [64, 1], strides = [1, 1]} : vector<64x8xf32> to vector<64x1xf32>
    %92 = vector.extract_strided_slice %11 {offsets = [7, 0], sizes = [1, 64], strides = [1, 1]} : vector<8x64xf32> to vector<1x64xf32>
    %93 = vector.broadcast %91 : vector<64x1xf32> to vector<64x64xf32>
    %94 = vector.broadcast %92 : vector<1x64xf32> to vector<64x64xf32>
    %95 = arith.addf %93, %94 : vector<64x64xf32>
    %cst_31 = arith.constant 0.000000e+00 : f32
    %96 = vector.broadcast %cst_31 : f32 to vector<64x64xf32>
    %97 = arith.cmpf ogt, %95, %96 : vector<64x64xf32>
    %cst_32 = arith.constant 2.000000e-01 : f32
    %98 = vector.broadcast %cst_32 : f32 to vector<64x64xf32>
    %99 = arith.mulf %98, %95 : vector<64x64xf32>
    %100 = arith.select %97, %95, %99 : vector<64x64xi1>, vector<64x64xf32>
    %cst_33 = arith.constant 0.000000e+00 : f32
    %101 = vector.broadcast %cst_33 : f32 to vector<64x64xf32>
    %102 = arith.cmpf ogt, %8, %101 : vector<64x64xf32>
    %cst_34 = arith.constant -1.000000e+30 : f32
    %103 = vector.broadcast %cst_34 : f32 to vector<64x64xf32>
    %104 = arith.select %102, %100, %103 : vector<64x64xi1>, vector<64x64xf32>
    %cst_35 = arith.constant dense<0xFF800000> : vector<64xf32>
    %105 = vector.multi_reduction <maximumf>, %104, %cst_35 [1] : vector<64x64xf32> to vector<64xf32>
    %106 = vector.shape_cast %105 : vector<64xf32> to vector<64x1xf32>
    %107 = vector.broadcast %106 : vector<64x1xf32> to vector<64x64xf32>
    %108 = arith.subf %104, %107 : vector<64x64xf32>
    %109 = math.exp %108 : vector<64x64xf32>
    %cst_36 = arith.constant dense<0.000000e+00> : vector<64xf32>
    %110 = vector.multi_reduction <add>, %109, %cst_36 [1] : vector<64x64xf32> to vector<64xf32>
    %111 = vector.shape_cast %110 : vector<64xf32> to vector<64x1xf32>
    %112 = vector.broadcast %111 : vector<64x1xf32> to vector<64x64xf32>
    %113 = arith.divf %109, %112 : vector<64x64xf32>
    %114 = arith.truncf %113 : vector<64x64xf32> to vector<64x64xbf16>
    %cst_37 = arith.constant dense<0.000000e+00> : vector<64x8xf32>
    %115 = tpu.matmul %114, %90, %cst_37 {dimension_numbers = #tpu.dot_dimension_numbers<[1], [0], [0], [1], [0, 0, 1, 1], [], []>} : vector<64x64xbf16>, vector<64x8xbf16>, vector<64x8xf32> -> vector<64x8xf32>
    %116 = tpu.concatenate %37, %63, %89, %115 in 1 : vector<64x8xf32>, vector<64x8xf32>, vector<64x8xf32>, vector<64x8xf32> -> vector<64x32xf32>
    %117 = arith.addf %116, %6 : vector<64x32xf32>
    %cst_38 = arith.constant 0.000000e+00 : f32
    %118 = vector.broadcast %cst_38 : f32 to vector<64x32xf32>
    %119 = arith.maximumf %117, %118 : vector<64x32xf32>
    %c0_39 = arith.constant 0 : index
    %c0_40 = arith.constant 0 : index
    %c0_41 = arith.constant 0 : index
    %120 = vector.load %arg5[%c0_39, %c0_40, %c0_41] : memref<1x64x32xf32, #tpu.memory_space<vmem>>, vector<1x64x32xf32>
    %121 = vector.shape_cast %120 : vector<1x64x32xf32> to vector<64x32xf32>
    %122 = vector.shape_cast %119 : vector<64x32xf32> to vector<1x64x32xf32>
    tpu.vector_store %arg5[%c0_39, %c0_40, %c0_41], %122 {strides = array<i32>} : memref<1x64x32xf32, #tpu.memory_space<vmem>>, vector<1x64x32xf32>,
    return
  }
  func.func @transform_0(%arg0: i32) -> (i32, i32, i32) {
    %c0_i32 = arith.constant 0 : i32
    %c0_i32_0 = arith.constant 0 : i32
    %c0_i32_1 = arith.constant 0 : i32
    return %arg0, %c0_i32, %c0_i32_0 : i32, i32, i32
  }
  func.func @transform_1(%arg0: i32) -> (i32, i32) {
    %c0_i32 = arith.constant 0 : i32
    %c0_i32_0 = arith.constant 0 : i32
    %c0_i32_1 = arith.constant 0 : i32
    return %c0_i32, %c0_i32_0 : i32, i32
  }
  func.func @transform_2(%arg0: i32) -> (i32, i32) {
    %c0_i32 = arith.constant 0 : i32
    %c0_i32_0 = arith.constant 0 : i32
    %c0_i32_1 = arith.constant 0 : i32
    return %c0_i32, %c0_i32_0 : i32, i32
  }
  func.func @transform_3(%arg0: i32) -> (i32, i32, i32) {
    %c0_i32 = arith.constant 0 : i32
    %c0_i32_0 = arith.constant 0 : i32
    %c0_i32_1 = arith.constant 0 : i32
    return %arg0, %c0_i32, %c0_i32_0 : i32, i32, i32
  }
  func.func @transform_4(%arg0: i32) -> (i32, i32, i32) {
    %c0_i32 = arith.constant 0 : i32
    %c0_i32_0 = arith.constant 0 : i32
    %c0_i32_1 = arith.constant 0 : i32
    return %arg0, %c0_i32, %c0_i32_0 : i32, i32, i32
  }
}

module attributes {stable_mosaic.version = 11 : i64} {
  func.func @_gat_layer_kernel(%arg0: i32, %arg1: memref<1x64x64xbf16, #tpu.memory_space<vmem>>, %arg2: memref<64x32xbf16, #tpu.memory_space<vmem>>, %arg3: memref<16x8xbf16, #tpu.memory_space<vmem>>, %arg4: memref<1x64x64xf32, #tpu.memory_space<vmem>>, %arg5: memref<1x64x16xf32, #tpu.memory_space<vmem>>) attributes {dimension_semantics = [#tpu.dimension_semantics<parallel>], iteration_bounds = array<i64: 1>, scalar_prefetch = 0 : i64, scratch_operands = 0 : i64, tpu.core_type = #tpu.core_type<tc>, window_params = [{transform_indices = @transform_0, window_bounds = array<i64: 1, 64, 64>}, {pipeline_mode = #tpu.pipeline_mode<synchronous>, transform_indices = @transform_1, window_bounds = array<i64: 64, 32>}, {pipeline_mode = #tpu.pipeline_mode<synchronous>, transform_indices = @transform_2, window_bounds = array<i64: 16, 8>}, {transform_indices = @transform_3, window_bounds = array<i64: 1, 64, 64>}, {transform_indices = @transform_4, window_bounds = array<i64: 1, 64, 16>}]} {
    %c0 = arith.constant 0 : index
    %c0_0 = arith.constant 0 : index
    %c0_1 = arith.constant 0 : index
    %0 = vector.load %arg1[%c0, %c0_0, %c0_1] : memref<1x64x64xbf16, #tpu.memory_space<vmem>>, vector<1x64x64xbf16>
    %1 = vector.shape_cast %0 : vector<1x64x64xbf16> to vector<64x64xbf16>
    %c0_2 = arith.constant 0 : index
    %c0_3 = arith.constant 0 : index
    %2 = vector.load %arg2[%c0_2, %c0_3] : memref<64x32xbf16, #tpu.memory_space<vmem>>, vector<64x32xbf16>
    %cst = arith.constant dense<0.000000e+00> : vector<64x32xf32>
    %3 = tpu.matmul %1, %2, %cst {dimension_numbers = #tpu.dot_dimension_numbers<[1], [0], [0], [1], [0, 0, 1, 1], [], []>} : vector<64x64xbf16>, vector<64x32xbf16>, vector<64x32xf32> -> vector<64x32xf32>
    %4 = vector.extract_strided_slice %3 {offsets = [0, 0], sizes = [64, 16], strides = [1, 1]} : vector<64x32xf32> to vector<64x16xf32>
    %5 = arith.truncf %4 : vector<64x16xf32> to vector<64x16xbf16>
    %6 = vector.extract_strided_slice %3 {offsets = [0, 16], sizes = [64, 16], strides = [1, 1]} : vector<64x32xf32> to vector<64x16xf32>
    %c0_4 = arith.constant 0 : index
    %c0_5 = arith.constant 0 : index
    %c0_6 = arith.constant 0 : index
    %7 = vector.load %arg4[%c0_4, %c0_5, %c0_6] : memref<1x64x64xf32, #tpu.memory_space<vmem>>, vector<1x64x64xf32>
    %8 = vector.shape_cast %7 : vector<1x64x64xf32> to vector<64x64xf32>
    %c0_7 = arith.constant 0 : index
    %c0_8 = arith.constant 0 : index
    %9 = vector.load %arg3[%c0_7, %c0_8] : memref<16x8xbf16, #tpu.memory_space<vmem>>, vector<16x8xbf16>
    %cst_9 = arith.constant dense<0.000000e+00> : vector<64x8xf32>
    %10 = tpu.matmul %5, %9, %cst_9 {dimension_numbers = #tpu.dot_dimension_numbers<[1], [0], [0], [1], [0, 0, 1, 1], [], []>} : vector<64x16xbf16>, vector<16x8xbf16>, vector<64x8xf32> -> vector<64x8xf32>
    %11 = tpu.transpose %10, [1, 0] : vector<64x8xf32> -> vector<8x64xf32>
    %12 = vector.extract_strided_slice %10 {offsets = [0, 0], sizes = [64, 1], strides = [1, 1]} : vector<64x8xf32> to vector<64x1xf32>
    %13 = vector.extract_strided_slice %11 {offsets = [1, 0], sizes = [1, 64], strides = [1, 1]} : vector<8x64xf32> to vector<1x64xf32>
    %14 = vector.broadcast %12 : vector<64x1xf32> to vector<64x64xf32>
    %15 = vector.broadcast %13 : vector<1x64xf32> to vector<64x64xf32>
    %16 = arith.addf %14, %15 : vector<64x64xf32>
    %cst_10 = arith.constant 0.000000e+00 : f32
    %17 = vector.broadcast %cst_10 : f32 to vector<64x64xf32>
    %18 = arith.cmpf ogt, %16, %17 : vector<64x64xf32>
    %cst_11 = arith.constant 2.000000e-01 : f32
    %19 = vector.broadcast %cst_11 : f32 to vector<64x64xf32>
    %20 = arith.mulf %19, %16 : vector<64x64xf32>
    %21 = arith.select %18, %16, %20 : vector<64x64xi1>, vector<64x64xf32>
    %cst_12 = arith.constant 0.000000e+00 : f32
    %22 = vector.broadcast %cst_12 : f32 to vector<64x64xf32>
    %23 = arith.cmpf ogt, %8, %22 : vector<64x64xf32>
    %cst_13 = arith.constant -1.000000e+30 : f32
    %24 = vector.broadcast %cst_13 : f32 to vector<64x64xf32>
    %25 = arith.select %23, %21, %24 : vector<64x64xi1>, vector<64x64xf32>
    %cst_14 = arith.constant dense<0xFF800000> : vector<64xf32>
    %26 = vector.multi_reduction <maximumf>, %25, %cst_14 [1] : vector<64x64xf32> to vector<64xf32>
    %27 = vector.shape_cast %26 : vector<64xf32> to vector<64x1xf32>
    %28 = vector.broadcast %27 : vector<64x1xf32> to vector<64x64xf32>
    %29 = arith.subf %25, %28 : vector<64x64xf32>
    %30 = math.exp %29 : vector<64x64xf32>
    %cst_15 = arith.constant dense<0.000000e+00> : vector<64xf32>
    %31 = vector.multi_reduction <add>, %30, %cst_15 [1] : vector<64x64xf32> to vector<64xf32>
    %32 = vector.shape_cast %31 : vector<64xf32> to vector<64x1xf32>
    %33 = vector.broadcast %32 : vector<64x1xf32> to vector<64x64xf32>
    %34 = arith.divf %30, %33 : vector<64x64xf32>
    %35 = arith.truncf %34 : vector<64x64xf32> to vector<64x64xbf16>
    %cst_16 = arith.constant dense<0.000000e+00> : vector<64x16xf32>
    %36 = tpu.matmul %35, %5, %cst_16 {dimension_numbers = #tpu.dot_dimension_numbers<[1], [0], [0], [1], [0, 0, 1, 1], [], []>} : vector<64x64xbf16>, vector<64x16xbf16>, vector<64x16xf32> -> vector<64x16xf32>
    %37 = arith.addf %36, %6 : vector<64x16xf32>
    %c0_17 = arith.constant 0 : index
    %c0_18 = arith.constant 0 : index
    %c0_19 = arith.constant 0 : index
    %38 = vector.load %arg5[%c0_17, %c0_18, %c0_19] : memref<1x64x16xf32, #tpu.memory_space<vmem>>, vector<1x64x16xf32>
    %39 = vector.shape_cast %38 : vector<1x64x16xf32> to vector<64x16xf32>
    %40 = vector.shape_cast %37 : vector<64x16xf32> to vector<1x64x16xf32>
    tpu.vector_store %arg5[%c0_17, %c0_18, %c0_19], %40 {strides = array<i32>} : memref<1x64x16xf32, #tpu.memory_space<vmem>>, vector<1x64x16xf32>,
    return
  }
  func.func @transform_0(%arg0: i32) -> (i32, i32, i32) {
    %c0_i32 = arith.constant 0 : i32
    %c0_i32_0 = arith.constant 0 : i32
    %c0_i32_1 = arith.constant 0 : i32
    return %arg0, %c0_i32, %c0_i32_0 : i32, i32, i32
  }
  func.func @transform_1(%arg0: i32) -> (i32, i32) {
    %c0_i32 = arith.constant 0 : i32
    %c0_i32_0 = arith.constant 0 : i32
    %c0_i32_1 = arith.constant 0 : i32
    return %c0_i32, %c0_i32_0 : i32, i32
  }
  func.func @transform_2(%arg0: i32) -> (i32, i32) {
    %c0_i32 = arith.constant 0 : i32
    %c0_i32_0 = arith.constant 0 : i32
    %c0_i32_1 = arith.constant 0 : i32
    return %c0_i32, %c0_i32_0 : i32, i32
  }
  func.func @transform_3(%arg0: i32) -> (i32, i32, i32) {
    %c0_i32 = arith.constant 0 : i32
    %c0_i32_0 = arith.constant 0 : i32
    %c0_i32_1 = arith.constant 0 : i32
    return %arg0, %c0_i32, %c0_i32_0 : i32, i32, i32
  }
  func.func @transform_4(%arg0: i32) -> (i32, i32, i32) {
    %c0_i32 = arith.constant 0 : i32
    %c0_i32_0 = arith.constant 0 : i32
    %c0_i32_1 = arith.constant 0 : i32
    return %arg0, %c0_i32, %c0_i32_0 : i32, i32, i32
  }
}

module attributes {stable_mosaic.version = 11 : i64} {
  func.func @_edge_bce_kernel(%arg0: memref<128x128xbf16, #tpu.memory_space<vmem>>, %arg1: memref<128x32xbf16, #tpu.memory_space<vmem>>, %arg2: memref<1x32xf32, #tpu.memory_space<vmem>>, %arg3: memref<1x32xf32, #tpu.memory_space<vmem>>, %arg4: memref<1x1xf32, #tpu.memory_space<vmem>>, %arg5: memref<1x1xf32, #tpu.memory_space<vmem>>) attributes {dimension_semantics = [], scalar_prefetch = 0 : i64, scratch_operands = 0 : i64, tpu.core_type = #tpu.core_type<tc>} {
    %c0 = arith.constant 0 : index
    %c0_0 = arith.constant 0 : index
    %0 = vector.load %arg0[%c0, %c0_0] : memref<128x128xbf16, #tpu.memory_space<vmem>>, vector<128x128xbf16>
    %c0_1 = arith.constant 0 : index
    %c0_2 = arith.constant 0 : index
    %1 = vector.load %arg1[%c0_1, %c0_2] : memref<128x32xbf16, #tpu.memory_space<vmem>>, vector<128x32xbf16>
    %cst = arith.constant dense<0.000000e+00> : vector<128x32xf32>
    %2 = tpu.matmul %0, %1, %cst {dimension_numbers = #tpu.dot_dimension_numbers<[1], [0], [0], [1], [0, 0, 1, 1], [], []>} : vector<128x128xbf16>, vector<128x32xbf16>, vector<128x32xf32> -> vector<128x32xf32>
    %c0_3 = arith.constant 0 : index
    %c0_4 = arith.constant 0 : index
    %3 = vector.load %arg2[%c0_3, %c0_4] : memref<1x32xf32, #tpu.memory_space<vmem>>, vector<1x32xf32>
    %4 = vector.broadcast %3 : vector<1x32xf32> to vector<128x32xf32>
    %5 = arith.addf %2, %4 : vector<128x32xf32>
    %cst_5 = arith.constant 0.000000e+00 : f32
    %6 = vector.broadcast %cst_5 : f32 to vector<128x32xf32>
    %7 = arith.cmpf ogt, %5, %6 : vector<128x32xf32>
    %cst_6 = arith.constant 2.000000e-01 : f32
    %8 = vector.broadcast %cst_6 : f32 to vector<128x32xf32>
    %9 = arith.mulf %8, %5 : vector<128x32xf32>
    %10 = arith.select %7, %5, %9 : vector<128x32xi1>, vector<128x32xf32>
    %c0_7 = arith.constant 0 : index
    %c0_8 = arith.constant 0 : index
    %11 = vector.load %arg3[%c0_7, %c0_8] : memref<1x32xf32, #tpu.memory_space<vmem>>, vector<1x32xf32>
    %12 = vector.broadcast %11 : vector<1x32xf32> to vector<128x32xf32>
    %13 = arith.mulf %10, %12 : vector<128x32xf32>
    %cst_9 = arith.constant dense<0.000000e+00> : vector<128xf32>
    %14 = vector.multi_reduction <add>, %13, %cst_9 [1] : vector<128x32xf32> to vector<128xf32>
    %15 = vector.shape_cast %14 : vector<128xf32> to vector<128x1xf32>
    %c0_10 = arith.constant 0 : index
    %c0_11 = arith.constant 0 : index
    %16 = vector.load %arg4[%c0_10, %c0_11] : memref<1x1xf32, #tpu.memory_space<vmem>>, vector<1x1xf32>
    %17 = vector.broadcast %16 : vector<1x1xf32> to vector<128x1xf32>
    %18 = arith.addf %15, %17 : vector<128x1xf32>
    %19 = arith.negf %18 : vector<128x1xf32>
    %20 = math.exp %19 : vector<128x1xf32>
    %cst_12 = arith.constant 1.000000e+00 : f32
    %21 = vector.broadcast %cst_12 : f32 to vector<128x1xf32>
    %22 = arith.addf %21, %20 : vector<128x1xf32>
    %23 = arith.divf %21, %22 : vector<128x1xf32>
    %cst_13 = arith.constant 9.99999996E-13 : f32
    %cst_14 = arith.constant 1.000000e+00 : f32
    %24 = vector.broadcast %cst_13 : f32 to vector<128x1xf32>
    %25 = arith.maximumf %24, %23 : vector<128x1xf32>
    %26 = vector.broadcast %cst_14 : f32 to vector<128x1xf32>
    %27 = arith.minimumf %26, %25 : vector<128x1xf32>
    %28 = tpu.iota {dimensions = array<i32: 0>} : vector<128x1xi32>
    %c64_i32 = arith.constant 64 : i32
    %29 = vector.broadcast %c64_i32 : i32 to vector<128x1xi32>
    %30 = arith.cmpi slt, %28, %29 : vector<128x1xi32>
    %cst_15 = arith.constant 1.000000e+00 : f32
    %cst_16 = arith.constant 0.000000e+00 : f32
    %31 = vector.broadcast %cst_15 : f32 to vector<128x1xf32>
    %32 = vector.broadcast %cst_16 : f32 to vector<128x1xf32>
    %33 = arith.select %30, %31, %32 : vector<128x1xi1>, vector<128x1xf32>
    %34 = math.log %27 : vector<128x1xf32>
    %35 = arith.mulf %33, %34 : vector<128x1xf32>
    %cst_17 = arith.constant 1.000000e+00 : f32
    %36 = vector.broadcast %cst_17 : f32 to vector<128x1xf32>
    %37 = arith.subf %36, %33 : vector<128x1xf32>
    %cst_18 = arith.constant 1.000000e+00 : f32
    %38 = vector.broadcast %cst_18 : f32 to vector<128x1xf32>
    %39 = arith.subf %38, %27 : vector<128x1xf32>
    %40 = math.log %39 : vector<128x1xf32>
    %41 = arith.mulf %37, %40 : vector<128x1xf32>
    %42 = arith.addf %35, %41 : vector<128x1xf32>
    %cst_19 = arith.constant 0.000000e+00 : f32
    %43 = vector.broadcast %cst_19 : f32 to vector<128x1xf32>
    %44 = arith.subf %43, %42 : vector<128x1xf32>
    %45 = vector.shape_cast %44 : vector<128x1xf32> to vector<1x128x1xf32>
    %cst_20 = arith.constant dense<0.000000e+00> : vector<1xf32>
    %46 = vector.multi_reduction <add>, %45, %cst_20 [1, 2] : vector<1x128x1xf32> to vector<1xf32>
    %47 = vector.shape_cast %46 : vector<1xf32> to vector<1x1x1xf32>
    %48 = vector.extract %47[0, 0, 0] : f32 from vector<1x1x1xf32>
    %49 = vector.broadcast %48 : f32 to vector<1x1xf32>
    %cst_21 = arith.constant 1.280000e+02 : f32
    %50 = vector.broadcast %cst_21 : f32 to vector<1x1xf32>
    %51 = arith.divf %49, %50 : vector<1x1xf32>
    %c0_22 = arith.constant 0 : index
    %c0_23 = arith.constant 0 : index
    %52 = vector.load %arg5[%c0_22, %c0_23] : memref<1x1xf32, #tpu.memory_space<vmem>>, vector<1x1xf32>
    tpu.vector_store %arg5[%c0_22, %c0_23], %51 {strides = array<i32>} : memref<1x1xf32, #tpu.memory_space<vmem>>, vector<1x1xf32>,
    return
  }
}

module attributes {stable_mosaic.version = 11 : i64} {
  func.func @_classifier_ce_kernel(%arg0: memref<64x64xbf16, #tpu.memory_space<vmem>>, %arg1: memref<64x32xbf16, #tpu.memory_space<vmem>>, %arg2: memref<1x32xf32, #tpu.memory_space<vmem>>, %arg3: memref<32x2xf32, #tpu.memory_space<vmem>>, %arg4: memref<1x2xf32, #tpu.memory_space<vmem>>, %arg5: memref<1x1xf32, #tpu.memory_space<vmem>>) attributes {dimension_semantics = [], scalar_prefetch = 0 : i64, scratch_operands = 0 : i64, tpu.core_type = #tpu.core_type<tc>} {
    %c0 = arith.constant 0 : index
    %c0_0 = arith.constant 0 : index
    %0 = vector.load %arg0[%c0, %c0_0] : memref<64x64xbf16, #tpu.memory_space<vmem>>, vector<64x64xbf16>
    %c0_1 = arith.constant 0 : index
    %c0_2 = arith.constant 0 : index
    %1 = vector.load %arg1[%c0_1, %c0_2] : memref<64x32xbf16, #tpu.memory_space<vmem>>, vector<64x32xbf16>
    %cst = arith.constant dense<0.000000e+00> : vector<64x32xf32>
    %2 = tpu.matmul %0, %1, %cst {dimension_numbers = #tpu.dot_dimension_numbers<[1], [0], [0], [1], [0, 0, 1, 1], [], []>} : vector<64x64xbf16>, vector<64x32xbf16>, vector<64x32xf32> -> vector<64x32xf32>
    %c0_3 = arith.constant 0 : index
    %c0_4 = arith.constant 0 : index
    %3 = vector.load %arg2[%c0_3, %c0_4] : memref<1x32xf32, #tpu.memory_space<vmem>>, vector<1x32xf32>
    %4 = vector.broadcast %3 : vector<1x32xf32> to vector<64x32xf32>
    %5 = arith.addf %2, %4 : vector<64x32xf32>
    %cst_5 = arith.constant 0.000000e+00 : f32
    %6 = vector.broadcast %cst_5 : f32 to vector<64x32xf32>
    %7 = arith.maximumf %5, %6 : vector<64x32xf32>
    %c0_6 = arith.constant 0 : index
    %c0_7 = arith.constant 0 : index
    %8 = vector.load %arg3[%c0_6, %c0_7] : memref<32x2xf32, #tpu.memory_space<vmem>>, vector<32x2xf32>
    %cst_8 = arith.constant dense<0.000000e+00> : vector<64x2xf32>
    %9 = tpu.matmul %7, %8, %cst_8 {dimension_numbers = #tpu.dot_dimension_numbers<[1], [0], [0], [1], [0, 0, 1, 1], [], []>} : vector<64x32xf32>, vector<32x2xf32>, vector<64x2xf32> -> vector<64x2xf32>
    %c0_9 = arith.constant 0 : index
    %c0_10 = arith.constant 0 : index
    %10 = vector.load %arg4[%c0_9, %c0_10] : memref<1x2xf32, #tpu.memory_space<vmem>>, vector<1x2xf32>
    %11 = vector.broadcast %10 : vector<1x2xf32> to vector<64x2xf32>
    %12 = arith.addf %9, %11 : vector<64x2xf32>
    %cst_11 = arith.constant dense<0xFF800000> : vector<64xf32>
    %13 = vector.multi_reduction <maximumf>, %12, %cst_11 [1] : vector<64x2xf32> to vector<64xf32>
    %14 = vector.shape_cast %13 : vector<64xf32> to vector<64x1xf32>
    %15 = vector.broadcast %14 : vector<64x1xf32> to vector<64x2xf32>
    %16 = arith.subf %12, %15 : vector<64x2xf32>
    %17 = math.exp %16 : vector<64x2xf32>
    %cst_12 = arith.constant dense<0.000000e+00> : vector<64xf32>
    %18 = vector.multi_reduction <add>, %17, %cst_12 [1] : vector<64x2xf32> to vector<64xf32>
    %19 = vector.shape_cast %18 : vector<64xf32> to vector<64x1xf32>
    %20 = math.log %19 : vector<64x1xf32>
    %21 = arith.addf %14, %20 : vector<64x1xf32>
    %22 = vector.extract_strided_slice %12 {offsets = [0, 1], sizes = [64, 1], strides = [1, 1]} : vector<64x2xf32> to vector<64x1xf32>
    %23 = arith.subf %22, %21 : vector<64x1xf32>
    %24 = vector.shape_cast %23 : vector<64x1xf32> to vector<1x64x1xf32>
    %cst_13 = arith.constant dense<0.000000e+00> : vector<1xf32>
    %25 = vector.multi_reduction <add>, %24, %cst_13 [1, 2] : vector<1x64x1xf32> to vector<1xf32>
    %26 = vector.shape_cast %25 : vector<1xf32> to vector<1x1x1xf32>
    %27 = vector.extract %26[0, 0, 0] : f32 from vector<1x1x1xf32>
    %28 = vector.broadcast %27 : f32 to vector<1x1xf32>
    %cst_14 = arith.constant 0.000000e+00 : f32
    %29 = vector.broadcast %cst_14 : f32 to vector<1x1xf32>
    %30 = arith.subf %29, %28 : vector<1x1xf32>
    %cst_15 = arith.constant 6.400000e+01 : f32
    %31 = vector.broadcast %cst_15 : f32 to vector<1x1xf32>
    %32 = arith.divf %30, %31 : vector<1x1xf32>
    %c0_16 = arith.constant 0 : index
    %c0_17 = arith.constant 0 : index
    %33 = vector.load %arg5[%c0_16, %c0_17] : memref<1x1xf32, #tpu.memory_space<vmem>>, vector<1x1xf32>
    tpu.vector_store %arg5[%c0_16, %c0_17], %32 {strides = array<i32>} : memref<1x1xf32, #tpu.memory_space<vmem>>, vector<1x1xf32>,
    return
  }
}

</mosaic_0001>

<llo_original>
// kernel: gmae_forward.9
$region0: #{gmae_forward.9}
  #allocation0 [shape = 'u32[]', space=smem, size = 0x4, offset = 0x4, fixed_abs, tag = 'smem constant byte address 0x4 - core index']
  #allocation1 [shape = 'u32[144,128]{1,0:T(1,128)}', space=vmem, size = 0x12000, scoped, tag = 'internal scratch']
  %s0 = inlined_call_operand.vmem [shape: bf16[1,64,64], index: 0, kind: input, shape index: {}]
  %s1 = inlined_call_operand.vmem [shape: bf16[64,32], index: 1, kind: input, shape index: {}]
  %s2 = inlined_call_operand.vmem [shape: bf16[16,8], index: 2, kind: input, shape index: {}]
  %s3 = inlined_call_operand.vmem [shape: f32[1,64,64], index: 3, kind: input, shape index: {}]
  %s4 = inlined_call_operand.vmem [shape: f32[1,64,16], index: 4, kind: output, shape index: {}]
  %s5 = sld [smem:[#allocation0]]
  $region26: #{gmae_forward.9} parent=0
    _
  %s7 = ssub.s32 1, %s5
  %s8 = scalar_select 0, %s7, %s5
  // Predicated region
  $region2: #{gmae_forward.9} parent=0 // pred_check
    _
  $region3: #{gmae_forward.9} parent=0 // pred_check_branch
    %10 = sbr.rel (0) target = $region5
  $region4: #{gmae_forward.9} parent=0 // pred_region
    _
  $region5: #{gmae_forward.9} parent=0 // pred_fallthru
    _
  // Predicated region
  $region6: #{gmae_forward.9} parent=0 // pred_check
    _
  $region7: #{gmae_forward.9} parent=0 // pred_check_branch
    %12 = sbr.rel (0) target = $region9
  $region8: #{gmae_forward.9} parent=0 // pred_region
    _
  $region9: #{gmae_forward.9} parent=0 // pred_fallthru
    _
  // Predicated region
  $region10: #{gmae_forward.9} parent=0 // pred_check
    _
  $region11: #{gmae_forward.9} parent=0 // pred_check_branch
    %14 = sbr.rel (0) target = $region13
  $region12: #{gmae_forward.9} parent=0 // pred_region
    _
  $region13: #{gmae_forward.9} parent=0 // pred_fallthru
    _
  // Predicated region
  $region14: #{gmae_forward.9} parent=0 // pred_check
    _
  $region15: #{gmae_forward.9} parent=0 // pred_check_branch
    %16 = sbr.rel (0) target = $region17
  $region16: #{gmae_forward.9} parent=0 // pred_region
    _
  $region17: #{gmae_forward.9} parent=0 // pred_fallthru
    _
  %v18 = vld [vmem:[%s0] sm:$0xf]
  %v19 = vld [vmem:[%s0 + $0x4] sm:$0xf]
  %v20 = vld [vmem:[%s0 + $0x8] sm:$0xf]
  %v21 = vld [vmem:[%s0 + $0xc] sm:$0xf]
  %v22 = vld [vmem:[%s0 + $0x10] sm:$0xf]
  %v23 = vld [vmem:[%s0 + $0x14] sm:$0xf]
  %v24 = vld [vmem:[%s0 + $0x18] sm:$0xf]
  %v25 = vld [vmem:[%s0 + $0x1c] sm:$0xf]
  %v26 = vld [vmem:[%s1] sm:$0xf]
  %v27 = vld [vmem:[%s1 + $0x4] sm:$0xf]
  %v28 = vld [vmem:[%s1 + $0x8] sm:$0xf]
  %v29 = vld [vmem:[%s1 + $0xc] sm:$0xf]
  %v30 = vld [vmem:[%s1 + $0x10] sm:$0xf]
  %v31 = vld [vmem:[%s1 + $0x14] sm:$0xf]
  %v32 = vld [vmem:[%s1 + $0x18] sm:$0xf]
  %v33 = vld [vmem:[%s1 + $0x1c] sm:$0xf]
  %v42 = vunpack.c.l.b16 %v18
  %v43 = vunpack.c.l.b16 %v19
  %v44 = vunpack.c.l.b16 %v20
  %v45 = vunpack.c.l.b16 %v21
  %v46 = vunpack.c.l.b16 %v22
  %v47 = vunpack.c.l.b16 %v23
  %v48 = vunpack.c.l.b16 %v24
  %v49 = vunpack.c.l.b16 %v25
  %v50 = vpack.c.b16 %v43, %v42
  %v51 = vpack.c.b16 %v45, %v44
  %v52 = vpack.c.b16 %v47, %v46
  %v53 = vpack.c.b16 %v49, %v48
  %v62 = vunpack.c.l.b16 %v26
  %v63 = vunpack.c.l.b16 %v27
  %v64 = vunpack.c.l.b16 %v28
  %v65 = vunpack.c.l.b16 %v29
  %v66 = vunpack.c.l.b16 %v30
  %v67 = vunpack.c.l.b16 %v31
  %v68 = vunpack.c.l.b16 %v32
  %v69 = vunpack.c.l.b16 %v33
  %v70 = vpack.c.b16 %v63, %v62
  %v71 = vpack.c.b16 %v65, %v64
  %v72 = vpack.c.b16 %v67, %v66
  %v73 = vpack.c.b16 %v69, %v68
  %vm78 = vcmask 523264
  %v80 = vsel %vm78, %v50, 0
  %v83 = vsel %vm78, %v51, 0
  %v86 = vsel %vm78, %v52, 0
  %v89 = vsel %vm78, %v53, 0
  %91 = vmatprep.subr.bf16.mxu0 0
  %92 = vmatpush1.bf16.msra.mxu0 0
  %93 = vmatprep.subr.bf16.mxu0 0
  %94 = vmatpush1.bf16.msra.mxu0 0
  %95 = vmatprep.subr.bf16.mxu0 0
  %96 = vmatpush1.bf16.msra.mxu0 0
  %97 = vmatprep.subr.bf16.mxu0 0
  %98 = vmatpush1.bf16.msra.mxu0 0
  %99 = vmatprep.subr.bf16.mxu0 0
  %100 = vmatpush1.bf16.msra.mxu0 %v73
  %101 = vmatprep.subr.bf16.mxu0 0
  %102 = vmatpush1.bf16.msra.mxu0 %v72
  %103 = vmatprep.subr.bf16.mxu0 0
  %104 = vmatpush1.bf16.msra.mxu0 %v71
  %105 = vmatprep.subr.bf16.mxu0 0
  %106 = vmatpush1.bf16.msra.mxu0 %v70
  %107 = vmatprep.subr.bf16.mxu0 0
  %108 = vmatpush2.bf16.msra.mxu0 0
  %109 = vmatprep.subr.bf16.mxu0 0
  %110 = vmatpush2.bf16.msra.mxu0 0
  %111 = vmatprep.subr.bf16.mxu0 0
  %112 = vmatpush2.bf16.msra.mxu0 0
  %113 = vmatprep.subr.bf16.mxu0 0
  %114 = vmatpush2.bf16.msra.mxu0 0
  %115 = vmatprep.subr.bf16.mxu0 0
  %116 = vmatpush2.bf16.msra.mxu0 0
  %117 = vmatprep.subr.bf16.mxu0 0
  %118 = vmatpush2.bf16.msra.mxu0 0
  %119 = vmatprep.subr.bf16.mxu0 0
  %120 = vmatpush2.bf16.msra.mxu0 0
  %121 = vmatprep.subr.bf16.mxu0 0
  %122 = vmatpush2.bf16.msra.mxu0 0
  %123 = vmatprep.mubr.bf16.mxu0 0
  %124 = vmatmul.mubr.bf16.gmra.mxu0 %v80
  %v125 = vpop.f32.mrf.mxu0
  %v126 = vadd.f32 0.0, %v125
  %v127 = vpop.f32.mrf.mxu0
  %v128 = vpop.f32.mrf.mxu0
  %v129 = vadd.f32 0.0, %v128
  %v130 = vpop.f32.mrf.mxu0
  %131 = vmatprep.mubr.bf16.mxu0 0
  %132 = vmatmul.mubr.bf16.gmra.mxu0 %v83
  %v133 = vpop.f32.mrf.mxu0
  %v134 = vadd.f32 0.0, %v133
  %v135 = vpop.f32.mrf.mxu0
  %v136 = vpop.f32.mrf.mxu0
  %v137 = vadd.f32 0.0, %v136
  %v138 = vpop.f32.mrf.mxu0
  %139 = vmatprep.mubr.bf16.mxu0 0
  %140 = vmatmul.mubr.bf16.gmra.mxu0 %v86
  %v141 = vpop.f32.mrf.mxu0
  %v142 = vadd.f32 0.0, %v141
  %v143 = vpop.f32.mrf.mxu0
  %v144 = vpop.f32.mrf.mxu0
  %v145 = vadd.f32 0.0, %v144
  %v146 = vpop.f32.mrf.mxu0
  %147 = vmatprep.mubr.bf16.mxu0 0
  %148 = vmatmul.mubr.bf16.gmra.mxu0 %v89
  %v149 = vpop.f32.mrf.mxu0
  %v150 = vadd.f32 0.0, %v149
  %v151 = vpop.f32.mrf.mxu0
  %v152 = vpop.f32.mrf.mxu0
  %v153 = vadd.f32 0.0, %v152
  %v154 = vpop.f32.mrf.mxu0
  %155 = vdwg.mxu0
  %v156 = vpack.c.bf16 %v129, %v126
  %v157 = vpack.c.bf16 %v137, %v134
  %v158 = vpack.c.bf16 %v145, %v142
  %v159 = vpack.c.bf16 %v153, %v150
  %v160 = vld [vmem:[%s3] sm:$0xff]
  %v161 = vld [vmem:[%s3 + $0x8] sm:$0xff]
  %v162 = vld [vmem:[%s3 + $0x10] sm:$0xff]
  %v163 = vld [vmem:[%s3 + $0x18] sm:$0xff]
  %v164 = vld [vmem:[%s3 + $0x20] sm:$0xff]
  %v165 = vld [vmem:[%s3 + $0x28] sm:$0xff]
  %v166 = vld [vmem:[%s3 + $0x30] sm:$0xff]
  %v167 = vld [vmem:[%s3 + $0x38] sm:$0xff]
  %v168 = vld [vmem:[%s2] sm:$0xf]
  %v169 = vld [vmem:[%s2 + $0x4] sm:$0xf]
  %v172 = vunpack.c.l.b16 %v168
  %v173 = vunpack.c.l.b16 %v169
  %v174 = vpack.c.b16 %v173, %v172
  %vm176 = vcmask 130048
  %v178 = vsel %vm176, %v156, 0
  %v181 = vsel %vm176, %v157, 0
  %v184 = vsel %vm176, %v158, 0
  %v187 = vsel %vm176, %v159, 0
  %189 = vmatprep.subr.bf16.mxu0 0
  %190 = vmatpush1.bf16.msra.mxu0 0
  %191 = vmatprep.subr.bf16.mxu0 0
  %192 = vmatpush1.bf16.msra.mxu0 0
  %193 = vmatprep.subr.bf16.mxu0 0
  %194 = vmatpush1.bf16.msra.mxu0 0
  %195 = vmatprep.subr.bf16.mxu0 0
  %196 = vmatpush1.bf16.msra.mxu0 0
  %197 = vmatprep.subr.bf16.mxu0 0
  %198 = vmatpush1.bf16.msra.mxu0 0
  %199 = vmatprep.subr.bf16.mxu0 0
  %200 = vmatpush1.bf16.msra.mxu0 0
  %201 = vmatprep.subr.bf16.mxu0 0
  %202 = vmatpush1.bf16.msra.mxu0 0
  %203 = vmatprep.subr.bf16.mxu0 0
  %204 = vmatpush1.bf16.msra.mxu0 %v174
  %205 = vmatprep.subr.bf16.mxu0 0
  %206 = vmatpush2.bf16.msra.mxu0 0
  %207 = vmatprep.subr.bf16.mxu0 0
  %208 = vmatpush2.bf16.msra.mxu0 0
  %209 = vmatprep.subr.bf16.mxu0 0
  %210 = vmatpush2.bf16.msra.mxu0 0
  %211 = vmatprep.subr.bf16.mxu0 0
  %212 = vmatpush2.bf16.msra.mxu0 0
  %213 = vmatprep.subr.bf16.mxu0 0
  %214 = vmatpush2.bf16.msra.mxu0 0
  %215 = vmatprep.subr.bf16.mxu0 0
  %216 = vmatpush2.bf16.msra.mxu0 0
  %217 = vmatprep.subr.bf16.mxu0 0
  %218 = vmatpush2.bf16.msra.mxu0 0
  %219 = vmatprep.subr.bf16.mxu0 0
  %220 = vmatpush2.bf16.msra.mxu0 0
  %221 = vmatprep.mubr.bf16.mxu0 0
  %222 = vmatmul.mubr.bf16.gmra.mxu0 %v178
  %v223 = vpop.f32.mrf.mxu0
  %v224 = vadd.f32 0.0, %v223
  %v225 = vpop.f32.mrf.mxu0
  %v226 = vpop.f32.mrf.mxu0
  %v227 = vadd.f32 0.0, %v226
  %v228 = vpop.f32.mrf.mxu0
  %229 = vmatprep.mubr.bf16.mxu0 0
  %230 = vmatmul.mubr.bf16.gmra.mxu0 %v181
  %v231 = vpop.f32.mrf.mxu0
  %v232 = vadd.f32 0.0, %v231
  %v233 = vpop.f32.mrf.mxu0
  %v234 = vpop.f32.mrf.mxu0
  %v235 = vadd.f32 0.0, %v234
  %v236 = vpop.f32.mrf.mxu0
  %237 = vmatprep.mubr.bf16.mxu0 0
  %238 = vmatmul.mubr.bf16.gmra.mxu0 %v184
  %v239 = vpop.f32.mrf.mxu0
  %v240 = vadd.f32 0.0, %v239
  %v241 = vpop.f32.mrf.mxu0
  %v242 = vpop.f32.mrf.mxu0
  %v243 = vadd.f32 0.0, %v242
  %v244 = vpop.f32.mrf.mxu0
  %245 = vmatprep.mubr.bf16.mxu0 0
  %246 = vmatmul.mubr.bf16.gmra.mxu0 %v187
  %v247 = vpop.f32.mrf.mxu0
  %v248 = vadd.f32 0.0, %v247
  %v249 = vpop.f32.mrf.mxu0
  %v250 = vpop.f32.mrf.mxu0
  %v251 = vadd.f32 0.0, %v250
  %v252 = vpop.f32.mrf.mxu0
  %253 = vdwg.mxu0
  %254 = vxpose.xlu0.b32.start [1/16] %v224, 128
  %255 = vxpose.xlu0.b32.cont [2/16] %v227, 128
  %256 = vxpose.xlu0.b32.cont [3/16] %v232, 128
  %257 = vxpose.xlu0.b32.cont [4/16] %v235, 128
  %258 = vxpose.xlu0.b32.cont [5/16] %v240, 128
  %259 = vxpose.xlu0.b32.cont [6/16] %v243, 128
  %260 = vxpose.xlu0.b32.cont [7/16] %v248, 128
  %261 = vxpose.xlu0.b32.cont [8/16] %v251, 128
  %262 = vxpose.xlu0.b32.cont [9/16] 0.0, 128
  %263 = vxpose.xlu0.b32.cont [10/16] 0.0, 128
  %264 = vxpose.xlu0.b32.cont [11/16] 0.0, 128
  %265 = vxpose.xlu0.b32.cont [12/16] 0.0, 128
  %266 = vxpose.xlu0.b32.cont [13/16] 0.0, 128
  %267 = vxpose.xlu0.b32.cont [14/16] 0.0, 128
  %268 = vxpose.xlu0.b32.cont [15/16] 0.0, 128
  %269 = vxpose.xlu0.b32.end [16/16] 0.0, 128
  %v270 = vpop.trf.xlu0
  %v271 = vpop.trf.xlu0
  %v272 = vpop.trf.xlu0
  %v273 = vpop.trf.xlu0
  %v274 = vpop.trf.xlu0
  %v275 = vpop.trf.xlu0
  %v276 = vpop.trf.xlu0
  %v277 = vpop.trf.xlu0
  %v278 = vpop.trf.xlu0
  %v279 = vpop.trf.xlu0
  %v280 = vpop.trf.xlu0
  %v281 = vpop.trf.xlu0
  %v282 = vpop.trf.xlu0
  %v283 = vpop.trf.xlu0
  %v284 = vpop.trf.xlu0
  %v285 = vpop.trf.xlu0
  %287 = vset.pattern.permute.xlu0 0
  %288 = vperm.xlu0 %287, %v224
  %v289 = vpop.permute.xlu0 %288
  %292 = vset.pattern.permute.xlu0 0
  %293 = vperm.xlu0 %292, %v227
  %v294 = vpop.permute.xlu0 %293
  %297 = vset.pattern.permute.xlu0 0
  %298 = vperm.xlu0 %297, %v232
  %v299 = vpop.permute.xlu0 %298
  %302 = vset.pattern.permute.xlu0 0
  %303 = vperm.xlu0 %302, %v235
  %v304 = vpop.permute.xlu0 %303
  %307 = vset.pattern.permute.xlu0 0
  %308 = vperm.xlu0 %307, %v240
  %v309 = vpop.permute.xlu0 %308
  %312 = vset.pattern.permute.xlu0 0
  %313 = vperm.xlu0 %312, %v243
  %v314 = vpop.permute.xlu0 %313
  %317 = vset.pattern.permute.xlu0 0
  %318 = vperm.xlu0 %317, %v248
  %v319 = vpop.permute.xlu0 %318
  %322 = vset.pattern.permute.xlu0 0
  %323 = vperm.xlu0 %322, %v251
  %v324 = vpop.permute.xlu0 %323
  %v326 = vlaneseq
  %v327 = vshrl.u32 %v326, 7
  %v328 = vsub.s32 1, %v327
  %v329 = vrot.slane %v270, %v328
  %v330 = vadd.f32 %v289, %v329
  %v331 = vadd.f32 %v294, %v329
  %v332 = vadd.f32 %v299, %v329
  %v333 = vadd.f32 %v304, %v329
  %v334 = vadd.f32 %v309, %v329
  %v335 = vadd.f32 %v314, %v329
  %v336 = vadd.f32 %v319, %v329
  %v337 = vadd.f32 %v324, %v329
  %vm338 = vcmp.gt.f32.partialorder %v330, 0.0
  %vm339 = vcmp.gt.f32.partialorder %v331, 0.0
  %vm340 = vcmp.gt.f32.partialorder %v332, 0.0
  %vm341 = vcmp.gt.f32.partialorder %v333, 0.0
  %vm342 = vcmp.gt.f32.partialorder %v334, 0.0
  %vm343 = vcmp.gt.f32.partialorder %v335, 0.0
  %vm344 = vcmp.gt.f32.partialorder %v336, 0.0
  %vm345 = vcmp.gt.f32.partialorder %v337, 0.0
  %v346 = vmul.f32 %v330, 0.2
  %v347 = vmul.f32 %v331, 0.2
  %v348 = vmul.f32 %v332, 0.2
  %v349 = vmul.f32 %v333, 0.2
  %v350 = vmul.f32 %v334, 0.2
  %v351 = vmul.f32 %v335, 0.2
  %v352 = vmul.f32 %v336, 0.2
  %v353 = vmul.f32 %v337, 0.2
  %v354 = vsel %vm338, %v330, %v346
  %v355 = vsel %vm339, %v331, %v347
  %v356 = vsel %vm340, %v332, %v348
  %v357 = vsel %vm341, %v333, %v349
  %v358 = vsel %vm342, %v334, %v350
  %v359 = vsel %vm343, %v335, %v351
  %v360 = vsel %vm344, %v336, %v352
  %v361 = vsel %vm345, %v337, %v353
  %vm362 = vcmp.gt.f32.partialorder %v160, 0.0
  %vm363 = vcmp.gt.f32.partialorder %v161, 0.0
  %vm364 = vcmp.gt.f32.partialorder %v162, 0.0
  %vm365 = vcmp.gt.f32.partialorder %v163, 0.0
  %vm366 = vcmp.gt.f32.partialorder %v164, 0.0
  %vm367 = vcmp.gt.f32.partialorder %v165, 0.0
  %vm368 = vcmp.gt.f32.partialorder %v166, 0.0
  %vm369 = vcmp.gt.f32.partialorder %v167, 0.0
  %v370 = vsel %vm362, %v354, -1e+30
  %v371 = vsel %vm363, %v355, -1e+30
  %v372 = vsel %vm364, %v356, -1e+30
  %v373 = vsel %vm365, %v357, -1e+30
  %v374 = vsel %vm366, %v358, -1e+30
  %v375 = vsel %vm367, %v359, -1e+30
  %v376 = vsel %vm368, %v360, -1e+30
  %v377 = vsel %vm369, %v361, -1e+30
  %v378 = vsel %vm78, %v370, -inf
  %379 = vmax.xlane.f32.xlu0 %v378
  %v380 = vpop.xlane.xlu0 %379
  %v381 = vsel %vm78, %v371, -inf
  %382 = vmax.xlane.f32.xlu0 %v381
  %v383 = vpop.xlane.xlu0 %382
  %v384 = vsel %vm78, %v372, -inf
  %385 = vmax.xlane.f32.xlu0 %v384
  %v386 = vpop.xlane.xlu0 %385
  %v387 = vsel %vm78, %v373, -inf
  %388 = vmax.xlane.f32.xlu0 %v387
  %v389 = vpop.xlane.xlu0 %388
  %v390 = vsel %vm78, %v374, -inf
  %391 = vmax.xlane.f32.xlu0 %v390
  %v392 = vpop.xlane.xlu0 %391
  %v393 = vsel %vm78, %v375, -inf
  %394 = vmax.xlane.f32.xlu0 %v393
  %v395 = vpop.xlane.xlu0 %394
  %v396 = vsel %vm78, %v376, -inf
  %397 = vmax.xlane.f32.xlu0 %v396
  %v398 = vpop.xlane.xlu0 %397
  %v399 = vsel %vm78, %v377, -inf
  %400 = vmax.xlane.f32.xlu0 %v399
  %v401 = vpop.xlane.xlu0 %400
  %v402 = vsub.f32 %v370, %v380
  %v403 = vsub.f32 %v371, %v383
  %v404 = vsub.f32 %v372, %v386
  %v405 = vsub.f32 %v373, %v389
  %v406 = vsub.f32 %v374, %v392
  %v407 = vsub.f32 %v375, %v395
  %v408 = vsub.f32 %v376, %v398
  %v409 = vsub.f32 %v377, %v401
  %v410 = vmul.f32 %v402, 1.442695
  %v411 = vpow.pop %v410
  %v412 = vmul.f32 %v403, 1.442695
  %v413 = vpow.pop %v412
  %v414 = vmul.f32 %v404, 1.442695
  %v415 = vpow.pop %v414
  %v416 = vmul.f32 %v405, 1.442695
  %v417 = vpow.pop %v416
  %v418 = vmul.f32 %v406, 1.442695
  %v419 = vpow.pop %v418
  %v420 = vmul.f32 %v407, 1.442695
  %v421 = vpow.pop %v420
  %v422 = vmul.f32 %v408, 1.442695
  %v423 = vpow.pop %v422
  %v424 = vmul.f32 %v409, 1.442695
  %v425 = vpow.pop %v424
  %v426 = vsel %vm78, %v411, 0.0
  %427 = vadd.xlane.f32.xlu0 %v426
  %v428 = vpop.xlane.xlu0 %427
  %v429 = vsel %vm78, %v413, 0.0
  %430 = vadd.xlane.f32.xlu0 %v429
  %v431 = vpop.xlane.xlu0 %430
  %v432 = vsel %vm78, %v415, 0.0
  %433 = vadd.xlane.f32.xlu0 %v432
  %v434 = vpop.xlane.xlu0 %433
  %v435 = vsel %vm78, %v417, 0.0
  %436 = vadd.xlane.f32.xlu0 %v435
  %v437 = vpop.xlane.xlu0 %436
  %v438 = vsel %vm78, %v419, 0.0
  %439 = vadd.xlane.f32.xlu0 %v438
  %v440 = vpop.xlane.xlu0 %439
  %v441 = vsel %vm78, %v421, 0.0
  %442 = vadd.xlane.f32.xlu0 %v441
  %v443 = vpop.xlane.xlu0 %442
  %v444 = vsel %vm78, %v423, 0.0
  %445 = vadd.xlane.f32.xlu0 %v444
  %v446 = vpop.xlane.xlu0 %445
  %v447 = vsel %vm78, %v425, 0.0
  %448 = vadd.xlane.f32.xlu0 %v447
  %v449 = vpop.xlane.xlu0 %448
  %v450 = vrcp.pop %v428
  %v451 = vmul.f32 %v411, %v450
  %v452 = vrcp.pop %v431
  %v453 = vmul.f32 %v413, %v452
  %v454 = vrcp.pop %v434
  %v455 = vmul.f32 %v415, %v454
  %v456 = vrcp.pop %v437
  %v457 = vmul.f32 %v417, %v456
  %v458 = vrcp.pop %v440
  %v459 = vmul.f32 %v419, %v458
  %v460 = vrcp.pop %v443
  %v461 = vmul.f32 %v421, %v460
  %v462 = vrcp.pop %v446
  %v463 = vmul.f32 %v423, %v462
  %v464 = vrcp.pop %v449
  %v465 = vmul.f32 %v425, %v464
  %v466 = vpack.c.bf16 %v453, %v451
  %v467 = vpack.c.bf16 %v457, %v455
  %v468 = vpack.c.bf16 %v461, %v459
  %v469 = vpack.c.bf16 %v465, %v463
  %478 = vrot.lane.b32.xlu0 %v126, 112
  %v479 = vpop.permute.xlu0 %478
  %480 = vrot.lane.b32.xlu0 %v129, 112
  %v481 = vpop.permute.xlu0 %480
  %482 = vrot.lane.b32.xlu0 %v134, 112
  %v483 = vpop.permute.xlu0 %482
  %484 = vrot.lane.b32.xlu0 %v137, 112
  %v485 = vpop.permute.xlu0 %484
  %486 = vrot.lane.b32.xlu0 %v142, 112
  %v487 = vpop.permute.xlu0 %486
  %488 = vrot.lane.b32.xlu0 %v145, 112
  %v489 = vpop.permute.xlu0 %488
  %490 = vrot.lane.b32.xlu0 %v150, 112
  %v491 = vpop.permute.xlu0 %490
  %492 = vrot.lane.b32.xlu0 %v153, 112
  %v493 = vpop.permute.xlu0 %492
  %v503 = vsel %vm78, %v466, 0
  %v506 = vsel %vm78, %v467, 0
  %v509 = vsel %vm78, %v468, 0
  %v512 = vsel %vm78, %v469, 0
  %514 = vmatprep.subr.bf16.mxu0 0
  %515 = vmatpush1.bf16.msra.mxu0 0
  %516 = vmatprep.subr.bf16.mxu0 0
  %517 = vmatpush1.bf16.msra.mxu0 0
  %518 = vmatprep.subr.bf16.mxu0 0
  %519 = vmatpush1.bf16.msra.mxu0 0
  %520 = vmatprep.subr.bf16.mxu0 0
  %521 = vmatpush1.bf16.msra.mxu0 0
  %522 = vmatprep.subr.bf16.mxu0 0
  %523 = vmatpush1.bf16.msra.mxu0 %v159
  %524 = vmatprep.subr.bf16.mxu0 0
  %525 = vmatpush1.bf16.msra.mxu0 %v158
  %526 = vmatprep.subr.bf16.mxu0 0
  %527 = vmatpush1.bf16.msra.mxu0 %v157
  %528 = vmatprep.subr.bf16.mxu0 0
  %529 = vmatpush1.bf16.msra.mxu0 %v156
  %530 = vmatprep.subr.bf16.mxu0 0
  %531 = vmatpush2.bf16.msra.mxu0 0
  %532 = vmatprep.subr.bf16.mxu0 0
  %533 = vmatpush2.bf16.msra.mxu0 0
  %534 = vmatprep.subr.bf16.mxu0 0
  %535 = vmatpush2.bf16.msra.mxu0 0
  %536 = vmatprep.subr.bf16.mxu0 0
  %537 = vmatpush2.bf16.msra.mxu0 0
  %538 = vmatprep.subr.bf16.mxu0 0
  %539 = vmatpush2.bf16.msra.mxu0 0
  %540 = vmatprep.subr.bf16.mxu0 0
  %541 = vmatpush2.bf16.msra.mxu0 0
  %542 = vmatprep.subr.bf16.mxu0 0
  %543 = vmatpush2.bf16.msra.mxu0 0
  %544 = vmatprep.subr.bf16.mxu0 0
  %545 = vmatpush2.bf16.msra.mxu0 0
  %546 = vmatprep.mubr.bf16.mxu0 0
  %547 = vmatmul.mubr.bf16.gmra.mxu0 %v503
  %v548 = vpop.f32.mrf.mxu0
  %v549 = vadd.f32 %v479, %v548
  %v550 = vpop.f32.mrf.mxu0
  %v551 = vpop.f32.mrf.mxu0
  %v552 = vadd.f32 %v481, %v551
  %v553 = vpop.f32.mrf.mxu0
  %554 = vmatprep.mubr.bf16.mxu0 0
  %555 = vmatmul.mubr.bf16.gmra.mxu0 %v506
  %v556 = vpop.f32.mrf.mxu0
  %v557 = vadd.f32 %v483, %v556
  %v558 = vpop.f32.mrf.mxu0
  %v559 = vpop.f32.mrf.mxu0
  %v560 = vadd.f32 %v485, %v559
  %v561 = vpop.f32.mrf.mxu0
  %562 = vmatprep.mubr.bf16.mxu0 0
  %563 = vmatmul.mubr.bf16.gmra.mxu0 %v509
  %v564 = vpop.f32.mrf.mxu0
  %v565 = vadd.f32 %v487, %v564
  %v566 = vpop.f32.mrf.mxu0
  %v567 = vpop.f32.mrf.mxu0
  %v568 = vadd.f32 %v489, %v567
  %v569 = vpop.f32.mrf.mxu0
  %570 = vmatprep.mubr.bf16.mxu0 0
  %571 = vmatmul.mubr.bf16.gmra.mxu0 %v512
  %v572 = vpop.f32.mrf.mxu0
  %v573 = vadd.f32 %v491, %v572
  %v574 = vpop.f32.mrf.mxu0
  %v575 = vpop.f32.mrf.mxu0
  %v576 = vadd.f32 %v493, %v575
  %v577 = vpop.f32.mrf.mxu0
  %578 = vdwg.mxu0
  %579 = vst.msk [vmem:[%s4] sm:$0xff] %vm176, %v549
  %580 = vst.msk [vmem:[%s4 + $0x8] sm:$0xff] %vm176, %v552
  %581 = vst.msk [vmem:[%s4 + $0x10] sm:$0xff] %vm176, %v557
  %582 = vst.msk [vmem:[%s4 + $0x18] sm:$0xff] %vm176, %v560
  %583 = vst.msk [vmem:[%s4 + $0x20] sm:$0xff] %vm176, %v565
  %584 = vst.msk [vmem:[%s4 + $0x28] sm:$0xff] %vm176, %v568
  %585 = vst.msk [vmem:[%s4 + $0x30] sm:$0xff] %vm176, %v573
  %586 = vst.msk [vmem:[%s4 + $0x38] sm:$0xff] %vm176, %v576
  // Predicated region
  $region18: #{gmae_forward.9} parent=0 // pred_check
    _
  $region19: #{gmae_forward.9} parent=0 // pred_check_branch
    %588 = sbr.rel (0) target = $region21
  $region20: #{gmae_forward.9} parent=0 // pred_region
    _
  $region21: #{gmae_forward.9} parent=0 // pred_fallthru
    _
  // Predicated region
  $region22: #{gmae_forward.9} parent=0 // pred_check
    _
  $region23: #{gmae_forward.9} parent=0 // pred_check_branch
    %590 = sbr.rel (0) target = $region25
  $region24: #{gmae_forward.9} parent=0 // pred_region
    _
  $region25: #{gmae_forward.9} parent=0 // pred_fallthru
    _

// kernel: gmae_forward.8
$region0: #{gmae_forward.8}
  #allocation0 [shape = 'u32[]', space=smem, size = 0x4, offset = 0x4, fixed_abs, tag = 'smem constant byte address 0x4 - core index']
  #allocation1 [shape = 'u32[144,128]{1,0:T(1,128)}', space=vmem, size = 0x12000, scoped, tag = 'internal scratch']
  %s0 = inlined_call_operand.vmem [shape: bf16[2,64,32], index: 0, kind: input, shape index: {}]
  %s1 = inlined_call_operand.vmem [shape: bf16[32,64], index: 1, kind: input, shape index: {}]
  %s2 = inlined_call_operand.vmem [shape: bf16[32,8], index: 2, kind: input, shape index: {}]
  %s3 = inlined_call_operand.vmem [shape: f32[2,64,64], index: 3, kind: input, shape index: {}]
  %s4 = inlined_call_operand.vmem [shape: f32[2,64,32], index: 4, kind: output, shape index: {}]
  %s5 = sld [smem:[#allocation0]]
  $region49: #{gmae_forward.8} parent=0
    _
  %s7 = ssub.s32 1, %s5
  %s8 = scalar_select 0, %s7, %s5
  loop: start=0, step=1, limit=4
  $region2: #{gmae_forward.8} parent=0 // loop_pre_header
    _
  $region3: #{gmae_forward.8} parent=0 // loop_header
    %s10 = sphi 0, %s14
    %p11 = scmp.ge.s32.totalorder %s10, 4
    %s20 = sphi 0, %s22
    %s23 = sphi 0, %s20
    %s24 = sphi 0, %s23
    %s40 = sphi 0, %s24
    %s44 = sphi 0, %s44
    %s46 = sphi 0, %s44
    %s47 = sphi 0, %s46
    %s61 = sphi 0, %s47
    %s65 = sphi 0, %s65
    %s67 = sphi 0, %s65
    %s68 = sphi 0, %s67
    %s82 = sphi 0, %s68
    %s88 = sphi 0, %s90
    %s91 = sphi 0, %s88
    %s92 = sphi 0, %s91
    %s108 = sphi 0, %s92
    %s114 = sphi 0, %s116
    %s117 = sphi 0, %s114
    %s118 = sphi 0, %s117
    %s134 = sphi 0, %s118
  $region4: #{gmae_forward.8} parent=0 // loop_header_branch
    %13 = sbr.rel (%p11) target = $region8
  $region5: #{gmae_forward.8} parent=0 // loop_body
    %s15 = ssub.s32 %s10, 1
    %s16 = ssub.s32 %s10, 2
    %s17 = sadd.s32 %s10, 1
    %s18 = ssub.s32 %s10, %s17
    %p19 = scmp.eq.s32.totalorder %s18, 0
    %s21 = sadd.s32 %s20, 1
    %s22 = scalar_select %p19, %s20, %s21
    %p25 = pneg %p19
    %p26 = scmp.eq.s32.totalorder %s10, 1
    %p27 = por %p25, %p26
    %p28 = scmp.ne.s32.totalorder %s20, %s23
    %p29 = scmp.eq.s32.totalorder %s10, 0
    %p30 = por %p28, %p29
    %p31 = scmp.ne.s32.totalorder %s20, %s23
    %p32 = scmp.eq.s32.totalorder %s15, 1
    %p33 = por %p31, %p32
    %p34 = scmp.ne.s32.totalorder %s23, %s24
    %p35 = scmp.eq.s32.totalorder %s15, 0
    %p36 = por %p34, %p35
    %p37 = scmp.ne.s32.totalorder %s23, %s24
    %p38 = scmp.eq.s32.totalorder %s16, 1
    %p39 = por %p37, %p38
    %p41 = scmp.ne.s32.totalorder %s24, %s40
    %p42 = scmp.eq.s32.totalorder %s16, 0
    %p43 = por %p41, %p42
    %s45 = sadd.s32 %s44, 1
    %p48 = scmp.eq.s32.totalorder %s10, 1
    %p49 = scmp.ne.s32.totalorder %s44, %s46
    %p50 = scmp.eq.s32.totalorder %s10, 0
    %p51 = por %p49, %p50
    %p52 = scmp.ne.s32.totalorder %s44, %s46
    %p53 = scmp.eq.s32.totalorder %s15, 1
    %p54 = por %p52, %p53
    %p55 = scmp.ne.s32.totalorder %s46, %s47
    %p56 = scmp.eq.s32.totalorder %s15, 0
    %p57 = por %p55, %p56
    %p58 = scmp.ne.s32.totalorder %s46, %s47
    %p59 = scmp.eq.s32.totalorder %s16, 1
    %p60 = por %p58, %p59
    %p62 = scmp.ne.s32.totalorder %s47, %s61
    %p63 = scmp.eq.s32.totalorder %s16, 0
    %p64 = por %p62, %p63
    %s66 = sadd.s32 %s65, 1
    %p69 = scmp.eq.s32.totalorder %s10, 1
    %p70 = scmp.ne.s32.totalorder %s65, %s67
    %p71 = scmp.eq.s32.totalorder %s10, 0
    %p72 = por %p70, %p71
    %p73 = scmp.ne.s32.totalorder %s65, %s67
    %p74 = scmp.eq.s32.totalorder %s15, 1
    %p75 = por %p73, %p74
    %p76 = scmp.ne.s32.totalorder %s67, %s68
    %p77 = scmp.eq.s32.totalorder %s15, 0
    %p78 = por %p76, %p77
    %p79 = scmp.ne.s32.totalorder %s67, %s68
    %p80 = scmp.eq.s32.totalorder %s16, 1
    %p81 = por %p79, %p80
    %p83 = scmp.ne.s32.totalorder %s68, %s82
    %p84 = scmp.eq.s32.totalorder %s16, 0
    %p85 = por %p83, %p84
    %s86 = ssub.s32 %s10, %s17
    %p87 = scmp.eq.s32.totalorder %s86, 0
    %s89 = sadd.s32 %s88, 1
    %s90 = scalar_select %p87, %s88, %s89
    %p93 = pneg %p87
    %p94 = scmp.eq.s32.totalorder %s10, 1
    %p95 = por %p93, %p94
    %p96 = scmp.ne.s32.totalorder %s88, %s91
    %p97 = scmp.eq.s32.totalorder %s10, 0
    %p98 = por %p96, %p97
    %p99 = scmp.ne.s32.totalorder %s88, %s91
    %p100 = scmp.eq.s32.totalorder %s15, 1
    %p101 = por %p99, %p100
    %p102 = scmp.ne.s32.totalorder %s91, %s92
    %p103 = scmp.eq.s32.totalorder %s15, 0
    %p104 = por %p102, %p103
    %p105 = scmp.ne.s32.totalorder %s91, %s92
    %p106 = scmp.eq.s32.totalorder %s16, 1
    %p107 = por %p105, %p106
    %p109 = scmp.ne.s32.totalorder %s92, %s108
    %p110 = scmp.eq.s32.totalorder %s16, 0
    %p111 = por %p109, %p110
    %s112 = ssub.s32 %s10, %s17
    %p113 = scmp.eq.s32.totalorder %s112, 0
    %s115 = sadd.s32 %s114, 1
    %s116 = scalar_select %p113, %s114, %s115
    %p119 = pneg %p113
    %p120 = scmp.eq.s32.totalorder %s10, 1
    %p121 = por %p119, %p120
    %p122 = scmp.ne.s32.totalorder %s114, %s117
    %p123 = scmp.eq.s32.totalorder %s10, 0
    %p124 = por %p122, %p123
    %p125 = scmp.ne.s32.totalorder %s114, %s117
    %p126 = scmp.eq.s32.totalorder %s15, 1
    %p127 = por %p125, %p126
    %p128 = scmp.ne.s32.totalorder %s117, %s118
    %p129 = scmp.eq.s32.totalorder %s15, 0
    %p130 = por %p128, %p129
    %p131 = scmp.ne.s32.totalorder %s117, %s118
    %p132 = scmp.eq.s32.totalorder %s16, 1
    %p133 = por %p131, %p132
    %p135 = scmp.ne.s32.totalorder %s118, %s134
    %p136 = scmp.eq.s32.totalorder %s16, 0
    %p137 = por %p135, %p136
    %p138 = scmp.le.s32.totalorder 1, %s10
    %p139 = scmp.lt.s32.totalorder %s10, 3
    %p140 = pnand %p138, %p139
    %p141 = pneg %p140
    // Predicated region
    $region9: #{gmae_forward.8} parent=5 // pred_check
      _
    $region10: #{gmae_forward.8} parent=5 // pred_check_branch
      %143 = sbr.rel (%p140) target = $region12
    $region11: #{gmae_forward.8} parent=5 // pred_region
      %s144 = ssub.s32 %s10, 1
      // Predicated region
      $region13: #{gmae_forward.8} parent=11 // pred_check
        %p145 = pneg %p57
      $region14: #{gmae_forward.8} parent=11 // pred_check_branch
        %147 = sbr.rel (%p145) target = $region16
      $region15: #{gmae_forward.8} parent=11 // pred_region
        _
      $region16: #{gmae_forward.8} parent=11 // pred_fallthru
        _
      // Predicated region
      $region17: #{gmae_forward.8} parent=11 // pred_check
        %p148 = pneg %p78
      $region18: #{gmae_forward.8} parent=11 // pred_check_branch
        %150 = sbr.rel (%p148) target = $region20
      $region19: #{gmae_forward.8} parent=11 // pred_region
        _
      $region20: #{gmae_forward.8} parent=11 // pred_fallthru
        _
    $region12: #{gmae_forward.8} parent=5 // pred_fallthru
      _
    %p151 = scmp.lt.s32.totalorder %s10, 2
    // Predicated region
    $region21: #{gmae_forward.8} parent=5 // pred_check
      %p152 = pneg %p151
    $region22: #{gmae_forward.8} parent=5 // pred_check_branch
      %154 = sbr.rel (%p152) target = $region24
    $region23: #{gmae_forward.8} parent=5 // pred_region
      // Predicated region
      $region25: #{gmae_forward.8} parent=23 // pred_check
        %p155 = pneg %p30
      $region26: #{gmae_forward.8} parent=23 // pred_check_branch
        %157 = sbr.rel (%p155) target = $region28
      $region27: #{gmae_forward.8} parent=23 // pred_region
        %p158 = scmp.lt.s32.totalorder %s10, 1
        %s159 = scalar_select %p158, %s10, 1
        %s160 = smul.addr %s159, 8
        %s161 = smul.addr %s160, 4
        %s162 = scalar_lea.vmem %s0, %s161
      $region28: #{gmae_forward.8} parent=23 // pred_fallthru
        _
      // Predicated region
      $region29: #{gmae_forward.8} parent=23 // pred_check
        %p163 = pneg %p98
      $region30: #{gmae_forward.8} parent=23 // pred_check_branch
        %165 = sbr.rel (%p163) target = $region32
      $region31: #{gmae_forward.8} parent=23 // pred_region
        %p166 = scmp.lt.s32.totalorder %s10, 1
        %s167 = scalar_select %p166, %s10, 1
        %s168 = smul.addr %s167, 8
        %s169 = smul.addr %s168, 8
        %s170 = scalar_lea.vmem %s3, %s169
      $region32: #{gmae_forward.8} parent=23 // pred_fallthru
        _
    $region24: #{gmae_forward.8} parent=5 // pred_fallthru
      _
    %p171 = scmp.le.s32.totalorder 1, %s10
    %p172 = scmp.lt.s32.totalorder %s10, 3
    %p173 = pnand %p171, %p172
    %p174 = pneg %p173
    // Predicated region
    $region33: #{gmae_forward.8} parent=5 // pred_check
      _
    $region34: #{gmae_forward.8} parent=5 // pred_check_branch
      %176 = sbr.rel (%p173) target = $region36
    $region35: #{gmae_forward.8} parent=5 // pred_region
      %s177 = ssub.s32 %s10, 1
      %p178 = scmp.lt.s32.totalorder %s15, 1
      %s179 = scalar_select %p178, %s15, 1
      %s180 = smul.addr %s179, 8
      %s181 = smul.addr %s180, 4
      %s182 = scalar_lea.vmem %s0, %s181
      %p183 = pneg %p36
      %p184 = pneg %p33
      %p185 = pneg %p57
      %p186 = pneg %p54
      %p187 = pneg %p78
      %p188 = pneg %p75
      %p189 = scmp.lt.s32.totalorder %s15, 1
      %s190 = scalar_select %p189, %s15, 1
      %s191 = smul.addr %s190, 8
      %s192 = smul.addr %s191, 8
      %s193 = scalar_lea.vmem %s3, %s192
      %p194 = pneg %p104
      %p195 = pneg %p101
      %p196 = pneg %p130
      %p197 = pneg %p127
      %p198 = scmp.lt.s32.totalorder %s15, 1
      %s199 = scalar_select %p198, %s15, 1
      %s200 = smul.addr %s199, 8
      %s201 = smul.addr %s200, 8
      %s202 = scalar_lea.vmem %s4, %s201
      %p203 = scmp.lt.s32.totalorder %s15, 1
      %s204 = scalar_select %p203, %s15, 1
      %s205 = smul.addr %s204, 8
      %s206 = smul.addr %s205, 4
      %s207 = scalar_lea.vmem %s0, %s206
      %p208 = scmp.lt.s32.totalorder %s15, 1
      %s209 = scalar_select %p208, %s15, 1
      %s210 = smul.addr %s209, 8
      %s211 = smul.addr %s210, 8
      %s212 = scalar_lea.vmem %s3, %s211
      %p213 = scmp.lt.s32.totalorder %s15, 1
      %s214 = scalar_select %p213, %s15, 1
      %s215 = smul.addr %s214, 8
      %s216 = smul.addr %s215, 8
      %s217 = scalar_lea.vmem %s4, %s216
      %v219 = vld [vmem:[%s207] sm:$0xf]
      %v220 = vld [vmem:[%s207 + $0x4] sm:$0xf]
      %v221 = vld [vmem:[%s207 + $0x8] sm:$0xf]
      %v222 = vld [vmem:[%s207 + $0xc] sm:$0xf]
      %v223 = vld [vmem:[%s207 + $0x10] sm:$0xf]
      %v224 = vld [vmem:[%s207 + $0x14] sm:$0xf]
      %v225 = vld [vmem:[%s207 + $0x18] sm:$0xf]
      %v226 = vld [vmem:[%s207 + $0x1c] sm:$0xf]
      %v227 = vld [vmem:[%s1] sm:$0xf]
      %v228 = vld [vmem:[%s1 + $0x4] sm:$0xf]
      %v229 = vld [vmem:[%s1 + $0x8] sm:$0xf]
      %v230 = vld [vmem:[%s1 + $0xc] sm:$0xf]
      %v239 = vunpack.c.l.b16 %v219
      %v240 = vunpack.c.l.b16 %v220
      %v241 = vunpack.c.l.b16 %v221
      %v242 = vunpack.c.l.b16 %v222
      %v243 = vunpack.c.l.b16 %v223
      %v244 = vunpack.c.l.b16 %v224
      %v245 = vunpack.c.l.b16 %v225
      %v246 = vunpack.c.l.b16 %v226
      %v247 = vpack.c.b16 %v240, %v239
      %v248 = vpack.c.b16 %v242, %v241
      %v249 = vpack.c.b16 %v244, %v243
      %v250 = vpack.c.b16 %v246, %v245
      %v255 = vunpack.c.l.b16 %v227
      %v256 = vunpack.c.l.b16 %v228
      %v257 = vunpack.c.l.b16 %v229
      %v258 = vunpack.c.l.b16 %v230
      %v259 = vpack.c.b16 %v256, %v255
      %v260 = vpack.c.b16 %v258, %v257
      %vm263 = vcmask 261120
      %v265 = vsel %vm263, %v247, 0
      %v268 = vsel %vm263, %v248, 0
      %v271 = vsel %vm263, %v249, 0
      %v274 = vsel %vm263, %v250, 0
      %276 = vmatprep.subr.bf16.mxu0 0
      %277 = vmatpush1.bf16.msra.mxu0 0
      %278 = vmatprep.subr.bf16.mxu0 0
      %279 = vmatpush1.bf16.msra.mxu0 0
      %280 = vmatprep.subr.bf16.mxu0 0
      %281 = vmatpush1.bf16.msra.mxu0 0
      %282 = vmatprep.subr.bf16.mxu0 0
      %283 = vmatpush1.bf16.msra.mxu0 0
      %284 = vmatprep.subr.bf16.mxu0 0
      %285 = vmatpush1.bf16.msra.mxu0 0
      %286 = vmatprep.subr.bf16.mxu0 0
      %287 = vmatpush1.bf16.msra.mxu0 0
      %288 = vmatprep.subr.bf16.mxu0 0
      %289 = vmatpush1.bf16.msra.mxu0 %v260
      %290 = vmatprep.subr.bf16.mxu0 0
      %291 = vmatpush1.bf16.msra.mxu0 %v259
      %292 = vmatprep.subr.bf16.mxu0 0
      %293 = vmatpush2.bf16.msra.mxu0 0
      %294 = vmatprep.subr.bf16.mxu0 0
      %295 = vmatpush2.bf16.msra.mxu0 0
      %296 = vmatprep.subr.bf16.mxu0 0
      %297 = vmatpush2.bf16.msra.mxu0 0
      %298 = vmatprep.subr.bf16.mxu0 0
      %299 = vmatpush2.bf16.msra.mxu0 0
      %300 = vmatprep.subr.bf16.mxu0 0
      %301 = vmatpush2.bf16.msra.mxu0 0
      %302 = vmatprep.subr.bf16.mxu0 0
      %303 = vmatpush2.bf16.msra.mxu0 0
      %304 = vmatprep.subr.bf16.mxu0 0
      %305 = vmatpush2.bf16.msra.mxu0 0
      %306 = vmatprep.subr.bf16.mxu0 0
      %307 = vmatpush2.bf16.msra.mxu0 0
      %308 = vmatprep.mubr.bf16.mxu0 0
      %309 = vmatmul.mubr.bf16.gmra.mxu0 %v265
      %v310 = vpop.f32.mrf.mxu0
      %v311 = vadd.f32 0.0, %v310
      %v312 = vpop.f32.mrf.mxu0
      %v313 = vpop.f32.mrf.mxu0
      %v314 = vadd.f32 0.0, %v313
      %v315 = vpop.f32.mrf.mxu0
      %316 = vmatprep.mubr.bf16.mxu0 0
      %317 = vmatmul.mubr.bf16.gmra.mxu0 %v268
      %v318 = vpop.f32.mrf.mxu0
      %v319 = vadd.f32 0.0, %v318
      %v320 = vpop.f32.mrf.mxu0
      %v321 = vpop.f32.mrf.mxu0
      %v322 = vadd.f32 0.0, %v321
      %v323 = vpop.f32.mrf.mxu0
      %324 = vmatprep.mubr.bf16.mxu0 0
      %325 = vmatmul.mubr.bf16.gmra.mxu0 %v271
      %v326 = vpop.f32.mrf.mxu0
      %v327 = vadd.f32 0.0, %v326
      %v328 = vpop.f32.mrf.mxu0
      %v329 = vpop.f32.mrf.mxu0
      %v330 = vadd.f32 0.0, %v329
      %v331 = vpop.f32.mrf.mxu0
      %332 = vmatprep.mubr.bf16.mxu0 0
      %333 = vmatmul.mubr.bf16.gmra.mxu0 %v274
      %v334 = vpop.f32.mrf.mxu0
      %v335 = vadd.f32 0.0, %v334
      %v336 = vpop.f32.mrf.mxu0
      %v337 = vpop.f32.mrf.mxu0
      %v338 = vadd.f32 0.0, %v337
      %v339 = vpop.f32.mrf.mxu0
      %340 = vdwg.mxu0
      %v341 = vpack.c.bf16 %v314, %v311
      %v342 = vpack.c.bf16 %v322, %v319
      %v343 = vpack.c.bf16 %v330, %v327
      %v344 = vpack.c.bf16 %v338, %v335
      %v345 = vld [vmem:[%s212] sm:$0xff]
      %v346 = vld [vmem:[%s212 + $0x8] sm:$0xff]
      %v347 = vld [vmem:[%s212 + $0x10] sm:$0xff]
      %v348 = vld [vmem:[%s212 + $0x18] sm:$0xff]
      %v349 = vld [vmem:[%s212 + $0x20] sm:$0xff]
      %v350 = vld [vmem:[%s212 + $0x28] sm:$0xff]
      %v351 = vld [vmem:[%s212 + $0x30] sm:$0xff]
      %v352 = vld [vmem:[%s212 + $0x38] sm:$0xff]
      %v353 = vld [vmem:[%s2] sm:$0xf]
      %v354 = vld [vmem:[%s2 + $0x4] sm:$0xf]
      %v355 = vld [vmem:[%s2 + $0x8] sm:$0xf]
      %v356 = vld [vmem:[%s2 + $0xc] sm:$0xf]
      %v361 = vunpack.c.l.b16 %v353
      %v362 = vunpack.c.l.b16 %v354
      %v363 = vunpack.c.l.b16 %v355
      %v364 = vunpack.c.l.b16 %v356
      %v365 = vpack.c.b16 %v362, %v361
      %v366 = vpack.c.b16 %v364, %v363
      %v370 = vsel %vm263, %v341, 0
      %v373 = vsel %vm263, %v342, 0
      %v376 = vsel %vm263, %v343, 0
      %v379 = vsel %vm263, %v344, 0
      %381 = vmatprep.subr.bf16.mxu0 0
      %382 = vmatpush1.bf16.msra.mxu0 0
      %383 = vmatprep.subr.bf16.mxu0 0
      %384 = vmatpush1.bf16.msra.mxu0 0
      %385 = vmatprep.subr.bf16.mxu0 0
      %386 = vmatpush1.bf16.msra.mxu0 0
      %387 = vmatprep.subr.bf16.mxu0 0
      %388 = vmatpush1.bf16.msra.mxu0 0
      %389 = vmatprep.subr.bf16.mxu0 0
      %390 = vmatpush1.bf16.msra.mxu0 0
      %391 = vmatprep.subr.bf16.mxu0 0
      %392 = vmatpush1.bf16.msra.mxu0 0
      %393 = vmatprep.subr.bf16.mxu0 0
      %394 = vmatpush1.bf16.msra.mxu0 %v366
      %395 = vmatprep.subr.bf16.mxu0 0
      %396 = vmatpush1.bf16.msra.mxu0 %v365
      %397 = vmatprep.subr.bf16.mxu0 0
      %398 = vmatpush2.bf16.msra.mxu0 0
      %399 = vmatprep.subr.bf16.mxu0 0
      %400 = vmatpush2.bf16.msra.mxu0 0
      %401 = vmatprep.subr.bf16.mxu0 0
      %402 = vmatpush2.bf16.msra.mxu0 0
      %403 = vmatprep.subr.bf16.mxu0 0
      %404 = vmatpush2.bf16.msra.mxu0 0
      %405 = vmatprep.subr.bf16.mxu0 0
      %406 = vmatpush2.bf16.msra.mxu0 0
      %407 = vmatprep.subr.bf16.mxu0 0
      %408 = vmatpush2.bf16.msra.mxu0 0
      %409 = vmatprep.subr.bf16.mxu0 0
      %410 = vmatpush2.bf16.msra.mxu0 0
      %411 = vmatprep.subr.bf16.mxu0 0
      %412 = vmatpush2.bf16.msra.mxu0 0
      %413 = vmatprep.mubr.bf16.mxu0 0
      %414 = vmatmul.mubr.bf16.gmra.mxu0 %v370
      %v415 = vpop.f32.mrf.mxu0
      %v416 = vadd.f32 0.0, %v415
      %v417 = vpop.f32.mrf.mxu0
      %v418 = vpop.f32.mrf.mxu0
      %v419 = vadd.f32 0.0, %v418
      %v420 = vpop.f32.mrf.mxu0
      %421 = vmatprep.mubr.bf16.mxu0 0
      %422 = vmatmul.mubr.bf16.gmra.mxu0 %v373
      %v423 = vpop.f32.mrf.mxu0
      %v424 = vadd.f32 0.0, %v423
      %v425 = vpop.f32.mrf.mxu0
      %v426 = vpop.f32.mrf.mxu0
      %v427 = vadd.f32 0.0, %v426
      %v428 = vpop.f32.mrf.mxu0
      %429 = vmatprep.mubr.bf16.mxu0 0
      %430 = vmatmul.mubr.bf16.gmra.mxu0 %v376
      %v431 = vpop.f32.mrf.mxu0
      %v432 = vadd.f32 0.0, %v431
      %v433 = vpop.f32.mrf.mxu0
      %v434 = vpop.f32.mrf.mxu0
      %v435 = vadd.f32 0.0, %v434
      %v436 = vpop.f32.mrf.mxu0
      %437 = vmatprep.mubr.bf16.mxu0 0
      %438 = vmatmul.mubr.bf16.gmra.mxu0 %v379
      %v439 = vpop.f32.mrf.mxu0
      %v440 = vadd.f32 0.0, %v439
      %v441 = vpop.f32.mrf.mxu0
      %v442 = vpop.f32.mrf.mxu0
      %v443 = vadd.f32 0.0, %v442
      %v444 = vpop.f32.mrf.mxu0
      %445 = vdwg.mxu0
      %446 = vxpose.xlu0.b32.start [1/16] %v416, 128
      %447 = vxpose.xlu0.b32.cont [2/16] %v419, 128
      %448 = vxpose.xlu0.b32.cont [3/16] %v424, 128
      %449 = vxpose.xlu0.b32.cont [4/16] %v427, 128
      %450 = vxpose.xlu0.b32.cont [5/16] %v432, 128
      %451 = vxpose.xlu0.b32.cont [6/16] %v435, 128
      %452 = vxpose.xlu0.b32.cont [7/16] %v440, 128
      %453 = vxpose.xlu0.b32.cont [8/16] %v443, 128
      %454 = vxpose.xlu0.b32.cont [9/16] 0.0, 128
      %455 = vxpose.xlu0.b32.cont [10/16] 0.0, 128
      %456 = vxpose.xlu0.b32.cont [11/16] 0.0, 128
      %457 = vxpose.xlu0.b32.cont [12/16] 0.0, 128
      %458 = vxpose.xlu0.b32.cont [13/16] 0.0, 128
      %459 = vxpose.xlu0.b32.cont [14/16] 0.0, 128
      %460 = vxpose.xlu0.b32.cont [15/16] 0.0, 128
      %461 = vxpose.xlu0.b32.end [16/16] 0.0, 128
      %v462 = vpop.trf.xlu0
      %v463 = vpop.trf.xlu0
      %v464 = vpop.trf.xlu0
      %v465 = vpop.trf.xlu0
      %v466 = vpop.trf.xlu0
      %v467 = vpop.trf.xlu0
      %v468 = vpop.trf.xlu0
      %v469 = vpop.trf.xlu0
      %v470 = vpop.trf.xlu0
      %v471 = vpop.trf.xlu0
      %v472 = vpop.trf.xlu0
      %v473 = vpop.trf.xlu0
      %v474 = vpop.trf.xlu0
      %v475 = vpop.trf.xlu0
      %v476 = vpop.trf.xlu0
      %v477 = vpop.trf.xlu0
      %479 = vset.pattern.permute.xlu0 0
      %480 = vperm.xlu0 %479, %v416
      %v481 = vpop.permute.xlu0 %480
      %484 = vset.pattern.permute.xlu0 0
      %485 = vperm.xlu0 %484, %v419
      %v486 = vpop.permute.xlu0 %485
      %489 = vset.pattern.permute.xlu0 0
      %490 = vperm.xlu0 %489, %v424
      %v491 = vpop.permute.xlu0 %490
      %494 = vset.pattern.permute.xlu0 0
      %495 = vperm.xlu0 %494, %v427
      %v496 = vpop.permute.xlu0 %495
      %499 = vset.pattern.permute.xlu0 0
      %500 = vperm.xlu0 %499, %v432
      %v501 = vpop.permute.xlu0 %500
      %504 = vset.pattern.permute.xlu0 0
      %505 = vperm.xlu0 %504, %v435
      %v506 = vpop.permute.xlu0 %505
      %509 = vset.pattern.permute.xlu0 0
      %510 = vperm.xlu0 %509, %v440
      %v511 = vpop.permute.xlu0 %510
      %514 = vset.pattern.permute.xlu0 0
      %515 = vperm.xlu0 %514, %v443
      %v516 = vpop.permute.xlu0 %515
      %v518 = vlaneseq
      %v519 = vshrl.u32 %v518, 7
      %v520 = vsub.s32 4, %v519
      %v521 = vrot.slane %v462, %v520
      %v522 = vadd.f32 %v481, %v521
      %v523 = vadd.f32 %v486, %v521
      %v524 = vadd.f32 %v491, %v521
      %v525 = vadd.f32 %v496, %v521
      %v526 = vadd.f32 %v501, %v521
      %v527 = vadd.f32 %v506, %v521
      %v528 = vadd.f32 %v511, %v521
      %v529 = vadd.f32 %v516, %v521
      %vm530 = vcmp.gt.f32.partialorder %v522, 0.0
      %vm531 = vcmp.gt.f32.partialorder %v523, 0.0
      %vm532 = vcmp.gt.f32.partialorder %v524, 0.0
      %vm533 = vcmp.gt.f32.partialorder %v525, 0.0
      %vm534 = vcmp.gt.f32.partialorder %v526, 0.0
      %vm535 = vcmp.gt.f32.partialorder %v527, 0.0
      %vm536 = vcmp.gt.f32.partialorder %v528, 0.0
      %vm537 = vcmp.gt.f32.partialorder %v529, 0.0
      %v538 = vmul.f32 %v522, 0.2
      %v539 = vmul.f32 %v523, 0.2
      %v540 = vmul.f32 %v524, 0.2
      %v541 = vmul.f32 %v525, 0.2
      %v542 = vmul.f32 %v526, 0.2
      %v543 = vmul.f32 %v527, 0.2
      %v544 = vmul.f32 %v528, 0.2
      %v545 = vmul.f32 %v529, 0.2
      %v546 = vsel %vm530, %v522, %v538
      %v547 = vsel %vm531, %v523, %v539
      %v548 = vsel %vm532, %v524, %v540
      %v549 = vsel %vm533, %v525, %v541
      %v550 = vsel %vm534, %v526, %v542
      %v551 = vsel %vm535, %v527, %v543
      %v552 = vsel %vm536, %v528, %v544
      %v553 = vsel %vm537, %v529, %v545
      %vm554 = vcmp.gt.f32.partialorder %v345, 0.0
      %vm555 = vcmp.gt.f32.partialorder %v346, 0.0
      %vm556 = vcmp.gt.f32.partialorder %v347, 0.0
      %vm557 = vcmp.gt.f32.partialorder %v348, 0.0
      %vm558 = vcmp.gt.f32.partialorder %v349, 0.0
      %vm559 = vcmp.gt.f32.partialorder %v350, 0.0
      %vm560 = vcmp.gt.f32.partialorder %v351, 0.0
      %vm561 = vcmp.gt.f32.partialorder %v352, 0.0
      %v562 = vsel %vm554, %v546, -1e+30
      %v563 = vsel %vm555, %v547, -1e+30
      %v564 = vsel %vm556, %v548, -1e+30
      %v565 = vsel %vm557, %v549, -1e+30
      %v566 = vsel %vm558, %v550, -1e+30
      %v567 = vsel %vm559, %v551, -1e+30
      %v568 = vsel %vm560, %v552, -1e+30
      %v569 = vsel %vm561, %v553, -1e+30
      %vm570 = vcmask 523264
      %v571 = vsel %vm570, %v562, -inf
      %572 = vmax.xlane.f32.xlu0 %v571
      %v573 = vpop.xlane.xlu0 %572
      %v574 = vsel %vm570, %v563, -inf
      %575 = vmax.xlane.f32.xlu0 %v574
      %v576 = vpop.xlane.xlu0 %575
      %v577 = vsel %vm570, %v564, -inf
      %578 = vmax.xlane.f32.xlu0 %v577
      %v579 = vpop.xlane.xlu0 %578
      %v580 = vsel %vm570, %v565, -inf
      %581 = vmax.xlane.f32.xlu0 %v580
      %v582 = vpop.xlane.xlu0 %581
      %v583 = vsel %vm570, %v566, -inf
      %584 = vmax.xlane.f32.xlu0 %v583
      %v585 = vpop.xlane.xlu0 %584
      %v586 = vsel %vm570, %v567, -inf
      %587 = vmax.xlane.f32.xlu0 %v586
      %v588 = vpop.xlane.xlu0 %587
      %v589 = vsel %vm570, %v568, -inf
      %590 = vmax.xlane.f32.xlu0 %v589
      %v591 = vpop.xlane.xlu0 %590
      %v592 = vsel %vm570, %v569, -inf
      %593 = vmax.xlane.f32.xlu0 %v592
      %v594 = vpop.xlane.xlu0 %593
      %v595 = vsub.f32 %v562, %v573
      %v596 = vsub.f32 %v563, %v576
      %v597 = vsub.f32 %v564, %v579
      %v598 = vsub.f32 %v565, %v582
      %v599 = vsub.f32 %v566, %v585
      %v600 = vsub.f32 %v567, %v588
      %v601 = vsub.f32 %v568, %v591
      %v602 = vsub.f32 %v569, %v594
      %v603 = vmul.f32 %v595, 1.442695
      %v604 = vpow.pop %v603
      %v605 = vmul.f32 %v596, 1.442695
      %v606 = vpow.pop %v605
      %v607 = vmul.f32 %v597, 1.442695
      %v608 = vpow.pop %v607
      %v609 = vmul.f32 %v598, 1.442695
      %v610 = vpow.pop %v609
      %v611 = vmul.f32 %v599, 1.442695
      %v612 = vpow.pop %v611
      %v613 = vmul.f32 %v600, 1.442695
      %v614 = vpow.pop %v613
      %v615 = vmul.f32 %v601, 1.442695
      %v616 = vpow.pop %v615
      %v617 = vmul.f32 %v602, 1.442695
      %v618 = vpow.pop %v617
      %v619 = vsel %vm570, %v604, 0.0
      %620 = vadd.xlane.f32.xlu0 %v619
      %v621 = vpop.xlane.xlu0 %620
      %v622 = vsel %vm570, %v606, 0.0
      %623 = vadd.xlane.f32.xlu0 %v622
      %v624 = vpop.xlane.xlu0 %623
      %v625 = vsel %vm570, %v608, 0.0
      %626 = vadd.xlane.f32.xlu0 %v625
      %v627 = vpop.xlane.xlu0 %626
      %v628 = vsel %vm570, %v610, 0.0
      %629 = vadd.xlane.f32.xlu0 %v628
      %v630 = vpop.xlane.xlu0 %629
      %v631 = vsel %vm570, %v612, 0.0
      %632 = vadd.xlane.f32.xlu0 %v631
      %v633 = vpop.xlane.xlu0 %632
      %v634 = vsel %vm570, %v614, 0.0
      %635 = vadd.xlane.f32.xlu0 %v634
      %v636 = vpop.xlane.xlu0 %635
      %v637 = vsel %vm570, %v616, 0.0
      %638 = vadd.xlane.f32.xlu0 %v637
      %v639 = vpop.xlane.xlu0 %638
      %v640 = vsel %vm570, %v618, 0.0
      %641 = vadd.xlane.f32.xlu0 %v640
      %v642 = vpop.xlane.xlu0 %641
      %v643 = vrcp.pop %v621
      %v644 = vmul.f32 %v604, %v643
      %v645 = vrcp.pop %v624
      %v646 = vmul.f32 %v606, %v645
      %v647 = vrcp.pop %v627
      %v648 = vmul.f32 %v608, %v647
      %v649 = vrcp.pop %v630
      %v650 = vmul.f32 %v610, %v649
      %v651 = vrcp.pop %v633
      %v652 = vmul.f32 %v612, %v651
      %v653 = vrcp.pop %v636
      %v654 = vmul.f32 %v614, %v653
      %v655 = vrcp.pop %v639
      %v656 = vmul.f32 %v616, %v655
      %v657 = vrcp.pop %v642
      %v658 = vmul.f32 %v618, %v657
      %v659 = vpack.c.bf16 %v646, %v644
      %v660 = vpack.c.bf16 %v650, %v648
      %v661 = vpack.c.bf16 %v654, %v652
      %v662 = vpack.c.bf16 %v658, %v656
      %v664 = vsel %vm570, %v659, 0
      %v667 = vsel %vm570, %v660, 0
      %v670 = vsel %vm570, %v661, 0
      %v673 = vsel %vm570, %v662, 0
      %675 = vmatprep.subr.bf16.mxu0 0
      %676 = vmatpush1.bf16.msra.mxu0 0
      %677 = vmatprep.subr.bf16.mxu0 0
      %678 = vmatpush1.bf16.msra.mxu0 0
      %679 = vmatprep.subr.bf16.mxu0 0
      %680 = vmatpush1.bf16.msra.mxu0 0
      %681 = vmatprep.subr.bf16.mxu0 0
      %682 = vmatpush1.bf16.msra.mxu0 0
      %683 = vmatprep.subr.bf16.mxu0 0
      %684 = vmatpush1.bf16.msra.mxu0 %v344
      %685 = vmatprep.subr.bf16.mxu0 0
      %686 = vmatpush1.bf16.msra.mxu0 %v343
      %687 = vmatprep.subr.bf16.mxu0 0
      %688 = vmatpush1.bf16.msra.mxu0 %v342
      %689 = vmatprep.subr.bf16.mxu0 0
      %690 = vmatpush1.bf16.msra.mxu0 %v341
      %691 = vmatprep.subr.bf16.mxu0 0
      %692 = vmatpush2.bf16.msra.mxu0 0
      %693 = vmatprep.subr.bf16.mxu0 0
      %694 = vmatpush2.bf16.msra.mxu0 0
      %695 = vmatprep.subr.bf16.mxu0 0
      %696 = vmatpush2.bf16.msra.mxu0 0
      %697 = vmatprep.subr.bf16.mxu0 0
      %698 = vmatpush2.bf16.msra.mxu0 0
      %699 = vmatprep.subr.bf16.mxu0 0
      %700 = vmatpush2.bf16.msra.mxu0 0
      %701 = vmatprep.subr.bf16.mxu0 0
      %702 = vmatpush2.bf16.msra.mxu0 0
      %703 = vmatprep.subr.bf16.mxu0 0
      %704 = vmatpush2.bf16.msra.mxu0 0
      %705 = vmatprep.subr.bf16.mxu0 0
      %706 = vmatpush2.bf16.msra.mxu0 0
      %707 = vmatprep.mubr.bf16.mxu0 0
      %708 = vmatmul.mubr.bf16.gmra.mxu0 %v664
      %v709 = vpop.f32.mrf.mxu0
      %v710 = vadd.f32 0.0, %v709
      %v711 = vpop.f32.mrf.mxu0
      %v712 = vpop.f32.mrf.mxu0
      %v713 = vadd.f32 0.0, %v712
      %v714 = vpop.f32.mrf.mxu0
      %715 = vmatprep.mubr.bf16.mxu0 0
      %716 = vmatmul.mubr.bf16.gmra.mxu0 %v667
      %v717 = vpop.f32.mrf.mxu0
      %v718 = vadd.f32 0.0, %v717
      %v719 = vpop.f32.mrf.mxu0
      %v720 = vpop.f32.mrf.mxu0
      %v721 = vadd.f32 0.0, %v720
      %v722 = vpop.f32.mrf.mxu0
      %723 = vmatprep.mubr.bf16.mxu0 0
      %724 = vmatmul.mubr.bf16.gmra.mxu0 %v670
      %v725 = vpop.f32.mrf.mxu0
      %v726 = vadd.f32 0.0, %v725
      %v727 = vpop.f32.mrf.mxu0
      %v728 = vpop.f32.mrf.mxu0
      %v729 = vadd.f32 0.0, %v728
      %v730 = vpop.f32.mrf.mxu0
      %731 = vmatprep.mubr.bf16.mxu0 0
      %732 = vmatmul.mubr.bf16.gmra.mxu0 %v673
      %v733 = vpop.f32.mrf.mxu0
      %v734 = vadd.f32 0.0, %v733
      %v735 = vpop.f32.mrf.mxu0
      %v736 = vpop.f32.mrf.mxu0
      %v737 = vadd.f32 0.0, %v736
      %v738 = vpop.f32.mrf.mxu0
      %739 = vdwg.mxu0
      %740 = vset.pattern.permute.xlu0 1
      %741 = vperm.xlu0 %740, %v416
      %v742 = vpop.permute.xlu0 %741
      %744 = vset.pattern.permute.xlu0 1
      %745 = vperm.xlu0 %744, %v419
      %v746 = vpop.permute.xlu0 %745
      %748 = vset.pattern.permute.xlu0 1
      %749 = vperm.xlu0 %748, %v424
      %v750 = vpop.permute.xlu0 %749
      %752 = vset.pattern.permute.xlu0 1
      %753 = vperm.xlu0 %752, %v427
      %v754 = vpop.permute.xlu0 %753
      %756 = vset.pattern.permute.xlu0 1
      %757 = vperm.xlu0 %756, %v432
      %v758 = vpop.permute.xlu0 %757
      %760 = vset.pattern.permute.xlu0 1
      %761 = vperm.xlu0 %760, %v435
      %v762 = vpop.permute.xlu0 %761
      %764 = vset.pattern.permute.xlu0 1
      %765 = vperm.xlu0 %764, %v440
      %v766 = vpop.permute.xlu0 %765
      %768 = vset.pattern.permute.xlu0 1
      %769 = vperm.xlu0 %768, %v443
      %v770 = vpop.permute.xlu0 %769
      %v772 = vlaneseq
      %v773 = vshrl.u32 %v772, 7
      %v774 = vsub.s32 5, %v773
      %v775 = vrot.slane %v462, %v774
      %v776 = vadd.f32 %v742, %v775
      %v777 = vadd.f32 %v746, %v775
      %v778 = vadd.f32 %v750, %v775
      %v779 = vadd.f32 %v754, %v775
      %v780 = vadd.f32 %v758, %v775
      %v781 = vadd.f32 %v762, %v775
      %v782 = vadd.f32 %v766, %v775
      %v783 = vadd.f32 %v770, %v775
      %vm784 = vcmp.gt.f32.partialorder %v776, 0.0
      %vm785 = vcmp.gt.f32.partialorder %v777, 0.0
      %vm786 = vcmp.gt.f32.partialorder %v778, 0.0
      %vm787 = vcmp.gt.f32.partialorder %v779, 0.0
      %vm788 = vcmp.gt.f32.partialorder %v780, 0.0
      %vm789 = vcmp.gt.f32.partialorder %v781, 0.0
      %vm790 = vcmp.gt.f32.partialorder %v782, 0.0
      %vm791 = vcmp.gt.f32.partialorder %v783, 0.0
      %v792 = vmul.f32 %v776, 0.2
      %v793 = vmul.f32 %v777, 0.2
      %v794 = vmul.f32 %v778, 0.2
      %v795 = vmul.f32 %v779, 0.2
      %v796 = vmul.f32 %v780, 0.2
      %v797 = vmul.f32 %v781, 0.2
      %v798 = vmul.f32 %v782, 0.2
      %v799 = vmul.f32 %v783, 0.2
      %v800 = vsel %vm784, %v776, %v792
      %v801 = vsel %vm785, %v777, %v793
      %v802 = vsel %vm786, %v778, %v794
      %v803 = vsel %vm787, %v779, %v795
      %v804 = vsel %vm788, %v780, %v796
      %v805 = vsel %vm789, %v781, %v797
      %v806 = vsel %vm790, %v782, %v798
      %v807 = vsel %vm791, %v783, %v799
      %v808 = vsel %vm554, %v800, -1e+30
      %v809 = vsel %vm555, %v801, -1e+30
      %v810 = vsel %vm556, %v802, -1e+30
      %v811 = vsel %vm557, %v803, -1e+30
      %v812 = vsel %vm558, %v804, -1e+30
      %v813 = vsel %vm559, %v805, -1e+30
      %v814 = vsel %vm560, %v806, -1e+30
      %v815 = vsel %vm561, %v807, -1e+30
      %v816 = vsel %vm570, %v808, -inf
      %817 = vmax.xlane.f32.xlu0 %v816
      %v818 = vpop.xlane.xlu0 %817
      %v819 = vsel %vm570, %v809, -inf
      %820 = vmax.xlane.f32.xlu0 %v819
      %v821 = vpop.xlane.xlu0 %820
      %v822 = vsel %vm570, %v810, -inf
      %823 = vmax.xlane.f32.xlu0 %v822
      %v824 = vpop.xlane.xlu0 %823
      %v825 = vsel %vm570, %v811, -inf
      %826 = vmax.xlane.f32.xlu0 %v825
      %v827 = vpop.xlane.xlu0 %826
      %v828 = vsel %vm570, %v812, -inf
      %829 = vmax.xlane.f32.xlu0 %v828
      %v830 = vpop.xlane.xlu0 %829
      %v831 = vsel %vm570, %v813, -inf
      %832 = vmax.xlane.f32.xlu0 %v831
      %v833 = vpop.xlane.xlu0 %832
      %v834 = vsel %vm570, %v814, -inf
      %835 = vmax.xlane.f32.xlu0 %v834
      %v836 = vpop.xlane.xlu0 %835
      %v837 = vsel %vm570, %v815, -inf
      %838 = vmax.xlane.f32.xlu0 %v837
      %v839 = vpop.xlane.xlu0 %838
      %v840 = vsub.f32 %v808, %v818
      %v841 = vsub.f32 %v809, %v821
      %v842 = vsub.f32 %v810, %v824
      %v843 = vsub.f32 %v811, %v827
      %v844 = vsub.f32 %v812, %v830
      %v845 = vsub.f32 %v813, %v833
      %v846 = vsub.f32 %v814, %v836
      %v847 = vsub.f32 %v815, %v839
      %v848 = vmul.f32 %v840, 1.442695
      %v849 = vpow.pop %v848
      %v850 = vmul.f32 %v841, 1.442695
      %v851 = vpow.pop %v850
      %v852 = vmul.f32 %v842, 1.442695
      %v853 = vpow.pop %v852
      %v854 = vmul.f32 %v843, 1.442695
      %v855 = vpow.pop %v854
      %v856 = vmul.f32 %v844, 1.442695
      %v857 = vpow.pop %v856
      %v858 = vmul.f32 %v845, 1.442695
      %v859 = vpow.pop %v858
      %v860 = vmul.f32 %v846, 1.442695
      %v861 = vpow.pop %v860
      %v862 = vmul.f32 %v847, 1.442695
      %v863 = vpow.pop %v862
      %v864 = vsel %vm570, %v849, 0.0
      %865 = vadd.xlane.f32.xlu0 %v864
      %v866 = vpop.xlane.xlu0 %865
      %v867 = vsel %vm570, %v851, 0.0
      %868 = vadd.xlane.f32.xlu0 %v867
      %v869 = vpop.xlane.xlu0 %868
      %v870 = vsel %vm570, %v853, 0.0
      %871 = vadd.xlane.f32.xlu0 %v870
      %v872 = vpop.xlane.xlu0 %871
      %v873 = vsel %vm570, %v855, 0.0
      %874 = vadd.xlane.f32.xlu0 %v873
      %v875 = vpop.xlane.xlu0 %874
      %v876 = vsel %vm570, %v857, 0.0
      %877 = vadd.xlane.f32.xlu0 %v876
      %v878 = vpop.xlane.xlu0 %877
      %v879 = vsel %vm570, %v859, 0.0
      %880 = vadd.xlane.f32.xlu0 %v879
      %v881 = vpop.xlane.xlu0 %880
      %v882 = vsel %vm570, %v861, 0.0
      %883 = vadd.xlane.f32.xlu0 %v882
      %v884 = vpop.xlane.xlu0 %883
      %v885 = vsel %vm570, %v863, 0.0
      %886 = vadd.xlane.f32.xlu0 %v885
      %v887 = vpop.xlane.xlu0 %886
      %v888 = vrcp.pop %v866
      %v889 = vmul.f32 %v849, %v888
      %v890 = vrcp.pop %v869
      %v891 = vmul.f32 %v851, %v890
      %v892 = vrcp.pop %v872
      %v893 = vmul.f32 %v853, %v892
      %v894 = vrcp.pop %v875
      %v895 = vmul.f32 %v855, %v894
      %v896 = vrcp.pop %v878
      %v897 = vmul.f32 %v857, %v896
      %v898 = vrcp.pop %v881
      %v899 = vmul.f32 %v859, %v898
      %v900 = vrcp.pop %v884
      %v901 = vmul.f32 %v861, %v900
      %v902 = vrcp.pop %v887
      %v903 = vmul.f32 %v863, %v902
      %v904 = vpack.c.bf16 %v891, %v889
      %v905 = vpack.c.bf16 %v895, %v893
      %v906 = vpack.c.bf16 %v899, %v897
      %v907 = vpack.c.bf16 %v903, %v901
      %912 = vrot.lane.b32.xlu0 %v341, 120
      %v913 = vpop.permute.xlu0 %912
      %914 = vrot.lane.b32.xlu0 %v342, 120
      %v915 = vpop.permute.xlu0 %914
      %916 = vrot.lane.b32.xlu0 %v343, 120
      %v917 = vpop.permute.xlu0 %916
      %918 = vrot.lane.b32.xlu0 %v344, 120
      %v919 = vpop.permute.xlu0 %918
      %v925 = vsel %vm570, %v904, 0
      %v928 = vsel %vm570, %v905, 0
      %v931 = vsel %vm570, %v906, 0
      %v934 = vsel %vm570, %v907, 0
      %936 = vmatprep.subr.bf16.mxu0 0
      %937 = vmatpush1.bf16.msra.mxu0 0
      %938 = vmatprep.subr.bf16.mxu0 0
      %939 = vmatpush1.bf16.msra.mxu0 0
      %940 = vmatprep.subr.bf16.mxu0 0
      %941 = vmatpush1.bf16.msra.mxu0 0
      %942 = vmatprep.subr.bf16.mxu0 0
      %943 = vmatpush1.bf16.msra.mxu0 0
      %944 = vmatprep.subr.bf16.mxu0 0
      %945 = vmatpush1.bf16.msra.mxu0 %v919
      %946 = vmatprep.subr.bf16.mxu0 0
      %947 = vmatpush1.bf16.msra.mxu0 %v917
      %948 = vmatprep.subr.bf16.mxu0 0
      %949 = vmatpush1.bf16.msra.mxu0 %v915
      %950 = vmatprep.subr.bf16.mxu0 0
      %951 = vmatpush1.bf16.msra.mxu0 %v913
      %952 = vmatprep.subr.bf16.mxu0 0
      %953 = vmatpush2.bf16.msra.mxu0 0
      %954 = vmatprep.subr.bf16.mxu0 0
      %955 = vmatpush2.bf16.msra.mxu0 0
      %956 = vmatprep.subr.bf16.mxu0 0
      %957 = vmatpush2.bf16.msra.mxu0 0
      %958 = vmatprep.subr.bf16.mxu0 0
      %959 = vmatpush2.bf16.msra.mxu0 0
      %960 = vmatprep.subr.bf16.mxu0 0
      %961 = vmatpush2.bf16.msra.mxu0 0
      %962 = vmatprep.subr.bf16.mxu0 0
      %963 = vmatpush2.bf16.msra.mxu0 0
      %964 = vmatprep.subr.bf16.mxu0 0
      %965 = vmatpush2.bf16.msra.mxu0 0
      %966 = vmatprep.subr.bf16.mxu0 0
      %967 = vmatpush2.bf16.msra.mxu0 0
      %968 = vmatprep.mubr.bf16.mxu0 0
      %969 = vmatmul.mubr.bf16.gmra.mxu0 %v925
      %v970 = vpop.f32.mrf.mxu0
      %v971 = vadd.f32 0.0, %v970
      %v972 = vpop.f32.mrf.mxu0
      %v973 = vpop.f32.mrf.mxu0
      %v974 = vadd.f32 0.0, %v973
      %v975 = vpop.f32.mrf.mxu0
      %976 = vmatprep.mubr.bf16.mxu0 0
      %977 = vmatmul.mubr.bf16.gmra.mxu0 %v928
      %v978 = vpop.f32.mrf.mxu0
      %v979 = vadd.f32 0.0, %v978
      %v980 = vpop.f32.mrf.mxu0
      %v981 = vpop.f32.mrf.mxu0
      %v982 = vadd.f32 0.0, %v981
      %v983 = vpop.f32.mrf.mxu0
      %984 = vmatprep.mubr.bf16.mxu0 0
      %985 = vmatmul.mubr.bf16.gmra.mxu0 %v931
      %v986 = vpop.f32.mrf.mxu0
      %v987 = vadd.f32 0.0, %v986
      %v988 = vpop.f32.mrf.mxu0
      %v989 = vpop.f32.mrf.mxu0
      %v990 = vadd.f32 0.0, %v989
      %v991 = vpop.f32.mrf.mxu0
      %992 = vmatprep.mubr.bf16.mxu0 0
      %993 = vmatmul.mubr.bf16.gmra.mxu0 %v934
      %v994 = vpop.f32.mrf.mxu0
      %v995 = vadd.f32 0.0, %v994
      %v996 = vpop.f32.mrf.mxu0
      %v997 = vpop.f32.mrf.mxu0
      %v998 = vadd.f32 0.0, %v997
      %v999 = vpop.f32.mrf.mxu0
      %1000 = vdwg.mxu0
      %1001 = vset.pattern.permute.xlu0 2
      %1002 = vperm.xlu0 %1001, %v416
      %v1003 = vpop.permute.xlu0 %1002
      %1005 = vset.pattern.permute.xlu0 2
      %1006 = vperm.xlu0 %1005, %v419
      %v1007 = vpop.permute.xlu0 %1006
      %1009 = vset.pattern.permute.xlu0 2
      %1010 = vperm.xlu0 %1009, %v424
      %v1011 = vpop.permute.xlu0 %1010
      %1013 = vset.pattern.permute.xlu0 2
      %1014 = vperm.xlu0 %1013, %v427
      %v1015 = vpop.permute.xlu0 %1014
      %1017 = vset.pattern.permute.xlu0 2
      %1018 = vperm.xlu0 %1017, %v432
      %v1019 = vpop.permute.xlu0 %1018
      %1021 = vset.pattern.permute.xlu0 2
      %1022 = vperm.xlu0 %1021, %v435
      %v1023 = vpop.permute.xlu0 %1022
      %1025 = vset.pattern.permute.xlu0 2
      %1026 = vperm.xlu0 %1025, %v440
      %v1027 = vpop.permute.xlu0 %1026
      %1029 = vset.pattern.permute.xlu0 2
      %1030 = vperm.xlu0 %1029, %v443
      %v1031 = vpop.permute.xlu0 %1030
      %v1033 = vlaneseq
      %v1034 = vshrl.u32 %v1033, 7
      %v1035 = vsub.s32 6, %v1034
      %v1036 = vrot.slane %v462, %v1035
      %v1037 = vadd.f32 %v1003, %v1036
      %v1038 = vadd.f32 %v1007, %v1036
      %v1039 = vadd.f32 %v1011, %v1036
      %v1040 = vadd.f32 %v1015, %v1036
      %v1041 = vadd.f32 %v1019, %v1036
      %v1042 = vadd.f32 %v1023, %v1036
      %v1043 = vadd.f32 %v1027, %v1036
      %v1044 = vadd.f32 %v1031, %v1036
      %vm1045 = vcmp.gt.f32.partialorder %v1037, 0.0
      %vm1046 = vcmp.gt.f32.partialorder %v1038, 0.0
      %vm1047 = vcmp.gt.f32.partialorder %v1039, 0.0
      %vm1048 = vcmp.gt.f32.partialorder %v1040, 0.0
      %vm1049 = vcmp.gt.f32.partialorder %v1041, 0.0
      %vm1050 = vcmp.gt.f32.partialorder %v1042, 0.0
      %vm1051 = vcmp.gt.f32.partialorder %v1043, 0.0
      %vm1052 = vcmp.gt.f32.partialorder %v1044, 0.0
      %v1053 = vmul.f32 %v1037, 0.2
      %v1054 = vmul.f32 %v1038, 0.2
      %v1055 = vmul.f32 %v1039, 0.2
      %v1056 = vmul.f32 %v1040, 0.2
      %v1057 = vmul.f32 %v1041, 0.2
      %v1058 = vmul.f32 %v1042, 0.2
      %v1059 = vmul.f32 %v1043, 0.2
      %v1060 = vmul.f32 %v1044, 0.2
      %v1061 = vsel %vm1045, %v1037, %v1053
      %v1062 = vsel %vm1046, %v1038, %v1054
      %v1063 = vsel %vm1047, %v1039, %v1055
      %v1064 = vsel %vm1048, %v1040, %v1056
      %v1065 = vsel %vm1049, %v1041, %v1057
      %v1066 = vsel %vm1050, %v1042, %v1058
      %v1067 = vsel %vm1051, %v1043, %v1059
      %v1068 = vsel %vm1052, %v1044, %v1060
      %v1069 = vsel %vm554, %v1061, -1e+30
      %v1070 = vsel %vm555, %v1062, -1e+30
      %v1071 = vsel %vm556, %v1063, -1e+30
      %v1072 = vsel %vm557, %v1064, -1e+30
      %v1073 = vsel %vm558, %v1065, -1e+30
      %v1074 = vsel %vm559, %v1066, -1e+30
      %v1075 = vsel %vm560, %v1067, -1e+30
      %v1076 = vsel %vm561, %v1068, -1e+30
      %v1077 = vsel %vm570, %v1069, -inf
      %1078 = vmax.xlane.f32.xlu0 %v1077
      %v1079 = vpop.xlane.xlu0 %1078
      %v1080 = vsel %vm570, %v1070, -inf
      %1081 = vmax.xlane.f32.xlu0 %v1080
      %v1082 = vpop.xlane.xlu0 %1081
      %v1083 = vsel %vm570, %v1071, -inf
      %1084 = vmax.xlane.f32.xlu0 %v1083
      %v1085 = vpop.xlane.xlu0 %1084
      %v1086 = vsel %vm570, %v1072, -inf
      %1087 = vmax.xlane.f32.xlu0 %v1086
      %v1088 = vpop.xlane.xlu0 %1087
      %v1089 = vsel %vm570, %v1073, -inf
      %1090 = vmax.xlane.f32.xlu0 %v1089
      %v1091 = vpop.xlane.xlu0 %1090
      %v1092 = vsel %vm570, %v1074, -inf
      %1093 = vmax.xlane.f32.xlu0 %v1092
      %v1094 = vpop.xlane.xlu0 %1093
      %v1095 = vsel %vm570, %v1075, -inf
      %1096 = vmax.xlane.f32.xlu0 %v1095
      %v1097 = vpop.xlane.xlu0 %1096
      %v1098 = vsel %vm570, %v1076, -inf
      %1099 = vmax.xlane.f32.xlu0 %v1098
      %v1100 = vpop.xlane.xlu0 %1099
      %v1101 = vsub.f32 %v1069, %v1079
      %v1102 = vsub.f32 %v1070, %v1082
      %v1103 = vsub.f32 %v1071, %v1085
      %v1104 = vsub.f32 %v1072, %v1088
      %v1105 = vsub.f32 %v1073, %v1091
      %v1106 = vsub.f32 %v1074, %v1094
      %v1107 = vsub.f32 %v1075, %v1097
      %v1108 = vsub.f32 %v1076, %v1100
      %v1109 = vmul.f32 %v1101, 1.442695
      %v1110 = vpow.pop %v1109
      %v1111 = vmul.f32 %v1102, 1.442695
      %v1112 = vpow.pop %v1111
      %v1113 = vmul.f32 %v1103, 1.442695
      %v1114 = vpow.pop %v1113
      %v1115 = vmul.f32 %v1104, 1.442695
      %v1116 = vpow.pop %v1115
      %v1117 = vmul.f32 %v1105, 1.442695
      %v1118 = vpow.pop %v1117
      %v1119 = vmul.f32 %v1106, 1.442695
      %v1120 = vpow.pop %v1119
      %v1121 = vmul.f32 %v1107, 1.442695
      %v1122 = vpow.pop %v1121
      %v1123 = vmul.f32 %v1108, 1.442695
      %v1124 = vpow.pop %v1123
      %v1125 = vsel %vm570, %v1110, 0.0
      %1126 = vadd.xlane.f32.xlu0 %v1125
      %v1127 = vpop.xlane.xlu0 %1126
      %v1128 = vsel %vm570, %v1112, 0.0
      %1129 = vadd.xlane.f32.xlu0 %v1128
      %v1130 = vpop.xlane.xlu0 %1129
      %v1131 = vsel %vm570, %v1114, 0.0
      %1132 = vadd.xlane.f32.xlu0 %v1131
      %v1133 = vpop.xlane.xlu0 %1132
      %v1134 = vsel %vm570, %v1116, 0.0
      %1135 = vadd.xlane.f32.xlu0 %v1134
      %v1136 = vpop.xlane.xlu0 %1135
      %v1137 = vsel %vm570, %v1118, 0.0
      %1138 = vadd.xlane.f32.xlu0 %v1137
      %v1139 = vpop.xlane.xlu0 %1138
      %v1140 = vsel %vm570, %v1120, 0.0
      %1141 = vadd.xlane.f32.xlu0 %v1140
      %v1142 = vpop.xlane.xlu0 %1141
      %v1143 = vsel %vm570, %v1122, 0.0
      %1144 = vadd.xlane.f32.xlu0 %v1143
      %v1145 = vpop.xlane.xlu0 %1144
      %v1146 = vsel %vm570, %v1124, 0.0
      %1147 = vadd.xlane.f32.xlu0 %v1146
      %v1148 = vpop.xlane.xlu0 %1147
      %v1149 = vrcp.pop %v1127
      %v1150 = vmul.f32 %v1110, %v1149
      %v1151 = vrcp.pop %v1130
      %v1152 = vmul.f32 %v1112, %v1151
      %v1153 = vrcp.pop %v1133
      %v1154 = vmul.f32 %v1114, %v1153
      %v1155 = vrcp.pop %v1136
      %v1156 = vmul.f32 %v1116, %v1155
      %v1157 = vrcp.pop %v1139
      %v1158 = vmul.f32 %v1118, %v1157
      %v1159 = vrcp.pop %v1142
      %v1160 = vmul.f32 %v1120, %v1159
      %v1161 = vrcp.pop %v1145
      %v1162 = vmul.f32 %v1122, %v1161
      %v1163 = vrcp.pop %v1148
      %v1164 = vmul.f32 %v1124, %v1163
      %v1165 = vpack.c.bf16 %v1152, %v1150
      %v1166 = vpack.c.bf16 %v1156, %v1154
      %v1167 = vpack.c.bf16 %v1160, %v1158
      %v1168 = vpack.c.bf16 %v1164, %v1162
      %1169 = vrot.lane.b32.xlu0 %v341, 112
      %v1170 = vpop.permute.xlu0 %1169
      %1171 = vrot.lane.b32.xlu0 %v342, 112
      %v1172 = vpop.permute.xlu0 %1171
      %1173 = vrot.lane.b32.xlu0 %v343, 112
      %v1174 = vpop.permute.xlu0 %1173
      %1175 = vrot.lane.b32.xlu0 %v344, 112
      %v1176 = vpop.permute.xlu0 %1175
      %v1182 = vsel %vm570, %v1165, 0
      %v1185 = vsel %vm570, %v1166, 0
      %v1188 = vsel %vm570, %v1167, 0
      %v1191 = vsel %vm570, %v1168, 0
      %1193 = vmatprep.subr.bf16.mxu0 0
      %1194 = vmatpush1.bf16.msra.mxu0 0
      %1195 = vmatprep.subr.bf16.mxu0 0
      %1196 = vmatpush1.bf16.msra.mxu0 0
      %1197 = vmatprep.subr.bf16.mxu0 0
      %1198 = vmatpush1.bf16.msra.mxu0 0
      %1199 = vmatprep.subr.bf16.mxu0 0
      %1200 = vmatpush1.bf16.msra.mxu0 0
      %1201 = vmatprep.subr.bf16.mxu0 0
      %1202 = vmatpush1.bf16.msra.mxu0 %v1176
      %1203 = vmatprep.subr.bf16.mxu0 0
      %1204 = vmatpush1.bf16.msra.mxu0 %v1174
      %1205 = vmatprep.subr.bf16.mxu0 0
      %1206 = vmatpush1.bf16.msra.mxu0 %v1172
      %1207 = vmatprep.subr.bf16.mxu0 0
      %1208 = vmatpush1.bf16.msra.mxu0 %v1170
      %1209 = vmatprep.subr.bf16.mxu0 0
      %1210 = vmatpush2.bf16.msra.mxu0 0
      %1211 = vmatprep.subr.bf16.mxu0 0
      %1212 = vmatpush2.bf16.msra.mxu0 0
      %1213 = vmatprep.subr.bf16.mxu0 0
      %1214 = vmatpush2.bf16.msra.mxu0 0
      %1215 = vmatprep.subr.bf16.mxu0 0
      %1216 = vmatpush2.bf16.msra.mxu0 0
      %1217 = vmatprep.subr.bf16.mxu0 0
      %1218 = vmatpush2.bf16.msra.mxu0 0
      %1219 = vmatprep.subr.bf16.mxu0 0
      %1220 = vmatpush2.bf16.msra.mxu0 0
      %1221 = vmatprep.subr.bf16.mxu0 0
      %1222 = vmatpush2.bf16.msra.mxu0 0
      %1223 = vmatprep.subr.bf16.mxu0 0
      %1224 = vmatpush2.bf16.msra.mxu0 0
      %1225 = vmatprep.mubr.bf16.mxu0 0
      %1226 = vmatmul.mubr.bf16.gmra.mxu0 %v1182
      %v1227 = vpop.f32.mrf.mxu0
      %v1228 = vadd.f32 0.0, %v1227
      %v1229 = vpop.f32.mrf.mxu0
      %v1230 = vpop.f32.mrf.mxu0
      %v1231 = vadd.f32 0.0, %v1230
      %v1232 = vpop.f32.mrf.mxu0
      %1233 = vmatprep.mubr.bf16.mxu0 0
      %1234 = vmatmul.mubr.bf16.gmra.mxu0 %v1185
      %v1235 = vpop.f32.mrf.mxu0
      %v1236 = vadd.f32 0.0, %v1235
      %v1237 = vpop.f32.mrf.mxu0
      %v1238 = vpop.f32.mrf.mxu0
      %v1239 = vadd.f32 0.0, %v1238
      %v1240 = vpop.f32.mrf.mxu0
      %1241 = vmatprep.mubr.bf16.mxu0 0
      %1242 = vmatmul.mubr.bf16.gmra.mxu0 %v1188
      %v1243 = vpop.f32.mrf.mxu0
      %v1244 = vadd.f32 0.0, %v1243
      %v1245 = vpop.f32.mrf.mxu0
      %v1246 = vpop.f32.mrf.mxu0
      %v1247 = vadd.f32 0.0, %v1246
      %v1248 = vpop.f32.mrf.mxu0
      %1249 = vmatprep.mubr.bf16.mxu0 0
      %1250 = vmatmul.mubr.bf16.gmra.mxu0 %v1191
      %v1251 = vpop.f32.mrf.mxu0
      %v1252 = vadd.f32 0.0, %v1251
      %v1253 = vpop.f32.mrf.mxu0
      %v1254 = vpop.f32.mrf.mxu0
      %v1255 = vadd.f32 0.0, %v1254
      %v1256 = vpop.f32.mrf.mxu0
      %1257 = vdwg.mxu0
      %1258 = vset.pattern.permute.xlu0 3
      %1259 = vperm.xlu0 %1258, %v416
      %v1260 = vpop.permute.xlu0 %1259
      %1262 = vset.pattern.permute.xlu0 3
      %1263 = vperm.xlu0 %1262, %v419
      %v1264 = vpop.permute.xlu0 %1263
      %1266 = vset.pattern.permute.xlu0 3
      %1267 = vperm.xlu0 %1266, %v424
      %v1268 = vpop.permute.xlu0 %1267
      %1270 = vset.pattern.permute.xlu0 3
      %1271 = vperm.xlu0 %1270, %v427
      %v1272 = vpop.permute.xlu0 %1271
      %1274 = vset.pattern.permute.xlu0 3
      %1275 = vperm.xlu0 %1274, %v432
      %v1276 = vpop.permute.xlu0 %1275
      %1278 = vset.pattern.permute.xlu0 3
      %1279 = vperm.xlu0 %1278, %v435
      %v1280 = vpop.permute.xlu0 %1279
      %1282 = vset.pattern.permute.xlu0 3
      %1283 = vperm.xlu0 %1282, %v440
      %v1284 = vpop.permute.xlu0 %1283
      %1286 = vset.pattern.permute.xlu0 3
      %1287 = vperm.xlu0 %1286, %v443
      %v1288 = vpop.permute.xlu0 %1287
      %v1290 = vlaneseq
      %v1291 = vshrl.u32 %v1290, 7
      %v1292 = vsub.s32 7, %v1291
      %v1293 = vrot.slane %v462, %v1292
      %v1294 = vadd.f32 %v1260, %v1293
      %v1295 = vadd.f32 %v1264, %v1293
      %v1296 = vadd.f32 %v1268, %v1293
      %v1297 = vadd.f32 %v1272, %v1293
      %v1298 = vadd.f32 %v1276, %v1293
      %v1299 = vadd.f32 %v1280, %v1293
      %v1300 = vadd.f32 %v1284, %v1293
      %v1301 = vadd.f32 %v1288, %v1293
      %vm1302 = vcmp.gt.f32.partialorder %v1294, 0.0
      %vm1303 = vcmp.gt.f32.partialorder %v1295, 0.0
      %vm1304 = vcmp.gt.f32.partialorder %v1296, 0.0
      %vm1305 = vcmp.gt.f32.partialorder %v1297, 0.0
      %vm1306 = vcmp.gt.f32.partialorder %v1298, 0.0
      %vm1307 = vcmp.gt.f32.partialorder %v1299, 0.0
      %vm1308 = vcmp.gt.f32.partialorder %v1300, 0.0
      %vm1309 = vcmp.gt.f32.partialorder %v1301, 0.0
      %v1310 = vmul.f32 %v1294, 0.2
      %v1311 = vmul.f32 %v1295, 0.2
      %v1312 = vmul.f32 %v1296, 0.2
      %v1313 = vmul.f32 %v1297, 0.2
      %v1314 = vmul.f32 %v1298, 0.2
      %v1315 = vmul.f32 %v1299, 0.2
      %v1316 = vmul.f32 %v1300, 0.2
      %v1317 = vmul.f32 %v1301, 0.2
      %v1318 = vsel %vm1302, %v1294, %v1310
      %v1319 = vsel %vm1303, %v1295, %v1311
      %v1320 = vsel %vm1304, %v1296, %v1312
      %v1321 = vsel %vm1305, %v1297, %v1313
      %v1322 = vsel %vm1306, %v1298, %v1314
      %v1323 = vsel %vm1307, %v1299, %v1315
      %v1324 = vsel %vm1308, %v1300, %v1316
      %v1325 = vsel %vm1309, %v1301, %v1317
      %v1326 = vsel %vm554, %v1318, -1e+30
      %v1327 = vsel %vm555, %v1319, -1e+30
      %v1328 = vsel %vm556, %v1320, -1e+30
      %v1329 = vsel %vm557, %v1321, -1e+30
      %v1330 = vsel %vm558, %v1322, -1e+30
      %v1331 = vsel %vm559, %v1323, -1e+30
      %v1332 = vsel %vm560, %v1324, -1e+30
      %v1333 = vsel %vm561, %v1325, -1e+30
      %v1334 = vsel %vm570, %v1326, -inf
      %1335 = vmax.xlane.f32.xlu0 %v1334
      %v1336 = vpop.xlane.xlu0 %1335
      %v1337 = vsel %vm570, %v1327, -inf
      %1338 = vmax.xlane.f32.xlu0 %v1337
      %v1339 = vpop.xlane.xlu0 %1338
      %v1340 = vsel %vm570, %v1328, -inf
      %1341 = vmax.xlane.f32.xlu0 %v1340
      %v1342 = vpop.xlane.xlu0 %1341
      %v1343 = vsel %vm570, %v1329, -inf
      %1344 = vmax.xlane.f32.xlu0 %v1343
      %v1345 = vpop.xlane.xlu0 %1344
      %v1346 = vsel %vm570, %v1330, -inf
      %1347 = vmax.xlane.f32.xlu0 %v1346
      %v1348 = vpop.xlane.xlu0 %1347
      %v1349 = vsel %vm570, %v1331, -inf
      %1350 = vmax.xlane.f32.xlu0 %v1349
      %v1351 = vpop.xlane.xlu0 %1350
      %v1352 = vsel %vm570, %v1332, -inf
      %1353 = vmax.xlane.f32.xlu0 %v1352
      %v1354 = vpop.xlane.xlu0 %1353
      %v1355 = vsel %vm570, %v1333, -inf
      %1356 = vmax.xlane.f32.xlu0 %v1355
      %v1357 = vpop.xlane.xlu0 %1356
      %v1358 = vsub.f32 %v1326, %v1336
      %v1359 = vsub.f32 %v1327, %v1339
      %v1360 = vsub.f32 %v1328, %v1342
      %v1361 = vsub.f32 %v1329, %v1345
      %v1362 = vsub.f32 %v1330, %v1348
      %v1363 = vsub.f32 %v1331, %v1351
      %v1364 = vsub.f32 %v1332, %v1354
      %v1365 = vsub.f32 %v1333, %v1357
      %v1366 = vmul.f32 %v1358, 1.442695
      %v1367 = vpow.pop %v1366
      %v1368 = vmul.f32 %v1359, 1.442695
      %v1369 = vpow.pop %v1368
      %v1370 = vmul.f32 %v1360, 1.442695
      %v1371 = vpow.pop %v1370
      %v1372 = vmul.f32 %v1361, 1.442695
      %v1373 = vpow.pop %v1372
      %v1374 = vmul.f32 %v1362, 1.442695
      %v1375 = vpow.pop %v1374
      %v1376 = vmul.f32 %v1363, 1.442695
      %v1377 = vpow.pop %v1376
      %v1378 = vmul.f32 %v1364, 1.442695
      %v1379 = vpow.pop %v1378
      %v1380 = vmul.f32 %v1365, 1.442695
      %v1381 = vpow.pop %v1380
      %v1382 = vsel %vm570, %v1367, 0.0
      %1383 = vadd.xlane.f32.xlu0 %v1382
      %v1384 = vpop.xlane.xlu0 %1383
      %v1385 = vsel %vm570, %v1369, 0.0
      %1386 = vadd.xlane.f32.xlu0 %v1385
      %v1387 = vpop.xlane.xlu0 %1386
      %v1388 = vsel %vm570, %v1371, 0.0
      %1389 = vadd.xlane.f32.xlu0 %v1388
      %v1390 = vpop.xlane.xlu0 %1389
      %v1391 = vsel %vm570, %v1373, 0.0
      %1392 = vadd.xlane.f32.xlu0 %v1391
      %v1393 = vpop.xlane.xlu0 %1392
      %v1394 = vsel %vm570, %v1375, 0.0
      %1395 = vadd.xlane.f32.xlu0 %v1394
      %v1396 = vpop.xlane.xlu0 %1395
      %v1397 = vsel %vm570, %v1377, 0.0
      %1398 = vadd.xlane.f32.xlu0 %v1397
      %v1399 = vpop.xlane.xlu0 %1398
      %v1400 = vsel %vm570, %v1379, 0.0
      %1401 = vadd.xlane.f32.xlu0 %v1400
      %v1402 = vpop.xlane.xlu0 %1401
      %v1403 = vsel %vm570, %v1381, 0.0
      %1404 = vadd.xlane.f32.xlu0 %v1403
      %v1405 = vpop.xlane.xlu0 %1404
      %v1406 = vrcp.pop %v1384
      %v1407 = vmul.f32 %v1367, %v1406
      %v1408 = vrcp.pop %v1387
      %v1409 = vmul.f32 %v1369, %v1408
      %v1410 = vrcp.pop %v1390
      %v1411 = vmul.f32 %v1371, %v1410
      %v1412 = vrcp.pop %v1393
      %v1413 = vmul.f32 %v1373, %v1412
      %v1414 = vrcp.pop %v1396
      %v1415 = vmul.f32 %v1375, %v1414
      %v1416 = vrcp.pop %v1399
      %v1417 = vmul.f32 %v1377, %v1416
      %v1418 = vrcp.pop %v1402
      %v1419 = vmul.f32 %v1379, %v1418
      %v1420 = vrcp.pop %v1405
      %v1421 = vmul.f32 %v1381, %v1420
      %v1422 = vpack.c.bf16 %v1409, %v1407
      %v1423 = vpack.c.bf16 %v1413, %v1411
      %v1424 = vpack.c.bf16 %v1417, %v1415
      %v1425 = vpack.c.bf16 %v1421, %v1419
      %1426 = vrot.lane.b32.xlu0 %v341, 104
      %v1427 = vpop.permute.xlu0 %1426
      %1428 = vrot.lane.b32.xlu0 %v342, 104
      %v1429 = vpop.permute.xlu0 %1428
      %1430 = vrot.lane.b32.xlu0 %v343, 104
      %v1431 = vpop.permute.xlu0 %1430
      %1432 = vrot.lane.b32.xlu0 %v344, 104
      %v1433 = vpop.permute.xlu0 %1432
      %v1439 = vsel %vm570, %v1422, 0
      %v1442 = vsel %vm570, %v1423, 0
      %v1445 = vsel %vm570, %v1424, 0
      %v1448 = vsel %vm570, %v1425, 0
      %1450 = vmatprep.subr.bf16.mxu0 0
      %1451 = vmatpush1.bf16.msra.mxu0 0
      %1452 = vmatprep.subr.bf16.mxu0 0
      %1453 = vmatpush1.bf16.msra.mxu0 0
      %1454 = vmatprep.subr.bf16.mxu0 0
      %1455 = vmatpush1.bf16.msra.mxu0 0
      %1456 = vmatprep.subr.bf16.mxu0 0
      %1457 = vmatpush1.bf16.msra.mxu0 0
      %1458 = vmatprep.subr.bf16.mxu0 0
      %1459 = vmatpush1.bf16.msra.mxu0 %v1433
      %1460 = vmatprep.subr.bf16.mxu0 0
      %1461 = vmatpush1.bf16.msra.mxu0 %v1431
      %1462 = vmatprep.subr.bf16.mxu0 0
      %1463 = vmatpush1.bf16.msra.mxu0 %v1429
      %1464 = vmatprep.subr.bf16.mxu0 0
      %1465 = vmatpush1.bf16.msra.mxu0 %v1427
      %1466 = vmatprep.subr.bf16.mxu0 0
      %1467 = vmatpush2.bf16.msra.mxu0 0
      %1468 = vmatprep.subr.bf16.mxu0 0
      %1469 = vmatpush2.bf16.msra.mxu0 0
      %1470 = vmatprep.subr.bf16.mxu0 0
      %1471 = vmatpush2.bf16.msra.mxu0 0
      %1472 = vmatprep.subr.bf16.mxu0 0
      %1473 = vmatpush2.bf16.msra.mxu0 0
      %1474 = vmatprep.subr.bf16.mxu0 0
      %1475 = vmatpush2.bf16.msra.mxu0 0
      %1476 = vmatprep.subr.bf16.mxu0 0
      %1477 = vmatpush2.bf16.msra.mxu0 0
      %1478 = vmatprep.subr.bf16.mxu0 0
      %1479 = vmatpush2.bf16.msra.mxu0 0
      %1480 = vmatprep.subr.bf16.mxu0 0
      %1481 = vmatpush2.bf16.msra.mxu0 0
      %1482 = vmatprep.mubr.bf16.mxu0 0
      %1483 = vmatmul.mubr.bf16.gmra.mxu0 %v1439
      %v1484 = vpop.f32.mrf.mxu0
      %v1485 = vadd.f32 0.0, %v1484
      %v1486 = vpop.f32.mrf.mxu0
      %v1487 = vpop.f32.mrf.mxu0
      %v1488 = vadd.f32 0.0, %v1487
      %v1489 = vpop.f32.mrf.mxu0
      %1490 = vmatprep.mubr.bf16.mxu0 0
      %1491 = vmatmul.mubr.bf16.gmra.mxu0 %v1442
      %v1492 = vpop.f32.mrf.mxu0
      %v1493 = vadd.f32 0.0, %v1492
      %v1494 = vpop.f32.mrf.mxu0
      %v1495 = vpop.f32.mrf.mxu0
      %v1496 = vadd.f32 0.0, %v1495
      %v1497 = vpop.f32.mrf.mxu0
      %1498 = vmatprep.mubr.bf16.mxu0 0
      %1499 = vmatmul.mubr.bf16.gmra.mxu0 %v1445
      %v1500 = vpop.f32.mrf.mxu0
      %v1501 = vadd.f32 0.0, %v1500
      %v1502 = vpop.f32.mrf.mxu0
      %v1503 = vpop.f32.mrf.mxu0
      %v1504 = vadd.f32 0.0, %v1503
      %v1505 = vpop.f32.mrf.mxu0
      %1506 = vmatprep.mubr.bf16.mxu0 0
      %1507 = vmatmul.mubr.bf16.gmra.mxu0 %v1448
      %v1508 = vpop.f32.mrf.mxu0
      %v1509 = vadd.f32 0.0, %v1508
      %v1510 = vpop.f32.mrf.mxu0
      %v1511 = vpop.f32.mrf.mxu0
      %v1512 = vadd.f32 0.0, %v1511
      %v1513 = vpop.f32.mrf.mxu0
      %1514 = vdwg.mxu0
      %1523 = vrot.lane.b32.xlu0 %v971, 8
      %v1524 = vpop.permute.xlu0 %1523
      %1525 = vrot.lane.b32.xlu0 %v974, 8
      %v1526 = vpop.permute.xlu0 %1525
      %1527 = vrot.lane.b32.xlu0 %v979, 8
      %v1528 = vpop.permute.xlu0 %1527
      %1529 = vrot.lane.b32.xlu0 %v982, 8
      %v1530 = vpop.permute.xlu0 %1529
      %1531 = vrot.lane.b32.xlu0 %v987, 8
      %v1532 = vpop.permute.xlu0 %1531
      %1533 = vrot.lane.b32.xlu0 %v990, 8
      %v1534 = vpop.permute.xlu0 %1533
      %1535 = vrot.lane.b32.xlu0 %v995, 8
      %v1536 = vpop.permute.xlu0 %1535
      %1537 = vrot.lane.b32.xlu0 %v998, 8
      %v1538 = vpop.permute.xlu0 %1537
      %1555 = vrot.lane.b32.xlu0 %v1228, 16
      %v1556 = vpop.permute.xlu0 %1555
      %1557 = vrot.lane.b32.xlu0 %v1231, 16
      %v1558 = vpop.permute.xlu0 %1557
      %1559 = vrot.lane.b32.xlu0 %v1236, 16
      %v1560 = vpop.permute.xlu0 %1559
      %1561 = vrot.lane.b32.xlu0 %v1239, 16
      %v1562 = vpop.permute.xlu0 %1561
      %1563 = vrot.lane.b32.xlu0 %v1244, 16
      %v1564 = vpop.permute.xlu0 %1563
      %1565 = vrot.lane.b32.xlu0 %v1247, 16
      %v1566 = vpop.permute.xlu0 %1565
      %1567 = vrot.lane.b32.xlu0 %v1252, 16
      %v1568 = vpop.permute.xlu0 %1567
      %1569 = vrot.lane.b32.xlu0 %v1255, 16
      %v1570 = vpop.permute.xlu0 %1569
      %1587 = vrot.lane.b32.xlu0 %v1485, 24
      %v1588 = vpop.permute.xlu0 %1587
      %1589 = vrot.lane.b32.xlu0 %v1488, 24
      %v1590 = vpop.permute.xlu0 %1589
      %1591 = vrot.lane.b32.xlu0 %v1493, 24
      %v1592 = vpop.permute.xlu0 %1591
      %1593 = vrot.lane.b32.xlu0 %v1496, 24
      %v1594 = vpop.permute.xlu0 %1593
      %1595 = vrot.lane.b32.xlu0 %v1501, 24
      %v1596 = vpop.permute.xlu0 %1595
      %1597 = vrot.lane.b32.xlu0 %v1504, 24
      %v1598 = vpop.permute.xlu0 %1597
      %1599 = vrot.lane.b32.xlu0 %v1509, 24
      %v1600 = vpop.permute.xlu0 %1599
      %1601 = vrot.lane.b32.xlu0 %v1512, 24
      %v1602 = vpop.permute.xlu0 %1601
      %vm1611 = vcmask 64512
      %v1612 = vsel %vm1611, %v710, %v1524
      %v1613 = vsel %vm1611, %v713, %v1526
      %v1614 = vsel %vm1611, %v718, %v1528
      %v1615 = vsel %vm1611, %v721, %v1530
      %v1616 = vsel %vm1611, %v726, %v1532
      %v1617 = vsel %vm1611, %v729, %v1534
      %v1618 = vsel %vm1611, %v734, %v1536
      %v1619 = vsel %vm1611, %v737, %v1538
      %vm1620 = vcmask 130048
      %v1621 = vsel %vm1620, %v1612, %v1556
      %v1622 = vsel %vm1620, %v1613, %v1558
      %v1623 = vsel %vm1620, %v1614, %v1560
      %v1624 = vsel %vm1620, %v1615, %v1562
      %v1625 = vsel %vm1620, %v1616, %v1564
      %v1626 = vsel %vm1620, %v1617, %v1566
      %v1627 = vsel %vm1620, %v1618, %v1568
      %v1628 = vsel %vm1620, %v1619, %v1570
      %vm1629 = vcmask 195584
      %v1630 = vsel %vm1629, %v1621, %v1588
      %v1631 = vsel %vm1629, %v1622, %v1590
      %v1632 = vsel %vm1629, %v1623, %v1592
      %v1633 = vsel %vm1629, %v1624, %v1594
      %v1634 = vsel %vm1629, %v1625, %v1596
      %v1635 = vsel %vm1629, %v1626, %v1598
      %v1636 = vsel %vm1629, %v1627, %v1600
      %v1637 = vsel %vm1629, %v1628, %v1602
      %1646 = vrot.lane.b32.xlu0 %v311, 96
      %v1647 = vpop.permute.xlu0 %1646
      %1648 = vrot.lane.b32.xlu0 %v314, 96
      %v1649 = vpop.permute.xlu0 %1648
      %1650 = vrot.lane.b32.xlu0 %v319, 96
      %v1651 = vpop.permute.xlu0 %1650
      %1652 = vrot.lane.b32.xlu0 %v322, 96
      %v1653 = vpop.permute.xlu0 %1652
      %1654 = vrot.lane.b32.xlu0 %v327, 96
      %v1655 = vpop.permute.xlu0 %1654
      %1656 = vrot.lane.b32.xlu0 %v330, 96
      %v1657 = vpop.permute.xlu0 %1656
      %1658 = vrot.lane.b32.xlu0 %v335, 96
      %v1659 = vpop.permute.xlu0 %1658
      %1660 = vrot.lane.b32.xlu0 %v338, 96
      %v1661 = vpop.permute.xlu0 %1660
      %v1670 = vadd.f32 %v1630, %v1647
      %v1671 = vadd.f32 %v1631, %v1649
      %v1672 = vadd.f32 %v1632, %v1651
      %v1673 = vadd.f32 %v1633, %v1653
      %v1674 = vadd.f32 %v1634, %v1655
      %v1675 = vadd.f32 %v1635, %v1657
      %v1676 = vadd.f32 %v1636, %v1659
      %v1677 = vadd.f32 %v1637, %v1661
      %v1678 = vmax.f32 %v1670, 0.0
      %v1679 = vmax.f32 %v1671, 0.0
      %v1680 = vmax.f32 %v1672, 0.0
      %v1681 = vmax.f32 %v1673, 0.0
      %v1682 = vmax.f32 %v1674, 0.0
      %v1683 = vmax.f32 %v1675, 0.0
      %v1684 = vmax.f32 %v1676, 0.0
      %v1685 = vmax.f32 %v1677, 0.0
      %1686 = vst.msk [vmem:[%s217] sm:$0xff] %vm263, %v1678
      %1687 = vst.msk [vmem:[%s217 + $0x8] sm:$0xff] %vm263, %v1679
      %1688 = vst.msk [vmem:[%s217 + $0x10] sm:$0xff] %vm263, %v1680
      %1689 = vst.msk [vmem:[%s217 + $0x18] sm:$0xff] %vm263, %v1681
      %1690 = vst.msk [vmem:[%s217 + $0x20] sm:$0xff] %vm263, %v1682
      %1691 = vst.msk [vmem:[%s217 + $0x28] sm:$0xff] %vm263, %v1683
      %1692 = vst.msk [vmem:[%s217 + $0x30] sm:$0xff] %vm263, %v1684
      %1693 = vst.msk [vmem:[%s217 + $0x38] sm:$0xff] %vm263, %v1685
      %p1694 = scmp.lt.s32.totalorder %s15, 1
      %s1695 = scalar_select %p1694, %s15, 1
      %s1696 = smul.addr %s1695, 8
      %s1697 = smul.addr %s1696, 8
      %s1698 = scalar_lea.vmem %s4, %s1697
      // Predicated region
      $region37: #{gmae_forward.8} parent=35 // pred_check
        %p1699 = pneg %p127
      $region38: #{gmae_forward.8} parent=35 // pred_check_branch
        %1701 = sbr.rel (%p1699) target = $region40
      $region39: #{gmae_forward.8} parent=35 // pred_region
        _
      $region40: #{gmae_forward.8} parent=35 // pred_fallthru
        _
    $region36: #{gmae_forward.8} parent=5 // pred_fallthru
      _
    %p1702 = scmp.le.s32.totalorder 2, %s10
    // Predicated region
    $region41: #{gmae_forward.8} parent=5 // pred_check
      %p1703 = pneg %p1702
    $region42: #{gmae_forward.8} parent=5 // pred_check_branch
      %1705 = sbr.rel (%p1703) target = $region44
    $region43: #{gmae_forward.8} parent=5 // pred_region
      %s1706 = ssub.s32 %s10, 2
      // Predicated region
      $region45: #{gmae_forward.8} parent=43 // pred_check
        %p1707 = pneg %p133
      $region46: #{gmae_forward.8} parent=43 // pred_check_branch
        %1709 = sbr.rel (%p1707) target = $region48
      $region47: #{gmae_forward.8} parent=43 // pred_region
        %p1710 = scmp.lt.s32.totalorder %s16, 1
        %s1711 = scalar_select %p1710, %s16, 1
        %s1712 = smul.addr %s1711, 8
        %s1713 = smul.addr %s1712, 8
        %s1714 = scalar_lea.vmem %s4, %s1713
      $region48: #{gmae_forward.8} parent=43 // pred_fallthru
        _
    $region44: #{gmae_forward.8} parent=5 // pred_fallthru
      _
  $region6: #{gmae_forward.8} parent=0 // loop_footer
    %s14 = sadd.s32 1, %s10
  $region7: #{gmae_forward.8} parent=0 // loop_footer_branch
    %9 = sbr.rel target = $region3
  $region8: #{gmae_forward.8} parent=0 // loop_exit
    _

// kernel: gmae_forward.7
$region0: #{gmae_forward.7}
  #allocation0 [shape = 'u32[]', space=smem, size = 0x4, offset = 0x4, fixed_abs, tag = 'smem constant byte address 0x4 - core index']
  #allocation1 [shape = 'u32[144,128]{1,0:T(1,128)}', space=vmem, size = 0x12000, scoped, tag = 'internal scratch']
  %s0 = inlined_call_operand.vmem [shape: bf16[2,64,16], index: 0, kind: input, shape index: {}]
  %s1 = inlined_call_operand.vmem [shape: bf16[16,64], index: 1, kind: input, shape index: {}]
  %s2 = inlined_call_operand.vmem [shape: bf16[32,8], index: 2, kind: input, shape index: {}]
  %s3 = inlined_call_operand.vmem [shape: f32[2,64,64], index: 3, kind: input, shape index: {}]
  %s4 = inlined_call_operand.vmem [shape: f32[2,64,32], index: 4, kind: output, shape index: {}]
  %s5 = sld [smem:[#allocation0]]
  $region49: #{gmae_forward.7} parent=0
    _
  %s7 = ssub.s32 1, %s5
  %s8 = scalar_select 0, %s7, %s5
  loop: start=0, step=1, limit=4
  $region2: #{gmae_forward.7} parent=0 // loop_pre_header
    _
  $region3: #{gmae_forward.7} parent=0 // loop_header
    %s10 = sphi 0, %s14
    %p11 = scmp.ge.s32.totalorder %s10, 4
    %s20 = sphi 0, %s22
    %s23 = sphi 0, %s20
    %s24 = sphi 0, %s23
    %s40 = sphi 0, %s24
    %s44 = sphi 0, %s44
    %s46 = sphi 0, %s44
    %s47 = sphi 0, %s46
    %s61 = sphi 0, %s47
    %s65 = sphi 0, %s65
    %s67 = sphi 0, %s65
    %s68 = sphi 0, %s67
    %s82 = sphi 0, %s68
    %s88 = sphi 0, %s90
    %s91 = sphi 0, %s88
    %s92 = sphi 0, %s91
    %s108 = sphi 0, %s92
    %s114 = sphi 0, %s116
    %s117 = sphi 0, %s114
    %s118 = sphi 0, %s117
    %s134 = sphi 0, %s118
  $region4: #{gmae_forward.7} parent=0 // loop_header_branch
    %13 = sbr.rel (%p11) target = $region8
  $region5: #{gmae_forward.7} parent=0 // loop_body
    %s15 = ssub.s32 %s10, 1
    %s16 = ssub.s32 %s10, 2
    %s17 = sadd.s32 %s10, 1
    %s18 = ssub.s32 %s10, %s17
    %p19 = scmp.eq.s32.totalorder %s18, 0
    %s21 = sadd.s32 %s20, 1
    %s22 = scalar_select %p19, %s20, %s21
    %p25 = pneg %p19
    %p26 = scmp.eq.s32.totalorder %s10, 1
    %p27 = por %p25, %p26
    %p28 = scmp.ne.s32.totalorder %s20, %s23
    %p29 = scmp.eq.s32.totalorder %s10, 0
    %p30 = por %p28, %p29
    %p31 = scmp.ne.s32.totalorder %s20, %s23
    %p32 = scmp.eq.s32.totalorder %s15, 1
    %p33 = por %p31, %p32
    %p34 = scmp.ne.s32.totalorder %s23, %s24
    %p35 = scmp.eq.s32.totalorder %s15, 0
    %p36 = por %p34, %p35
    %p37 = scmp.ne.s32.totalorder %s23, %s24
    %p38 = scmp.eq.s32.totalorder %s16, 1
    %p39 = por %p37, %p38
    %p41 = scmp.ne.s32.totalorder %s24, %s40
    %p42 = scmp.eq.s32.totalorder %s16, 0
    %p43 = por %p41, %p42
    %s45 = sadd.s32 %s44, 1
    %p48 = scmp.eq.s32.totalorder %s10, 1
    %p49 = scmp.ne.s32.totalorder %s44, %s46
    %p50 = scmp.eq.s32.totalorder %s10, 0
    %p51 = por %p49, %p50
    %p52 = scmp.ne.s32.totalorder %s44, %s46
    %p53 = scmp.eq.s32.totalorder %s15, 1
    %p54 = por %p52, %p53
    %p55 = scmp.ne.s32.totalorder %s46, %s47
    %p56 = scmp.eq.s32.totalorder %s15, 0
    %p57 = por %p55, %p56
    %p58 = scmp.ne.s32.totalorder %s46, %s47
    %p59 = scmp.eq.s32.totalorder %s16, 1
    %p60 = por %p58, %p59
    %p62 = scmp.ne.s32.totalorder %s47, %s61
    %p63 = scmp.eq.s32.totalorder %s16, 0
    %p64 = por %p62, %p63
    %s66 = sadd.s32 %s65, 1
    %p69 = scmp.eq.s32.totalorder %s10, 1
    %p70 = scmp.ne.s32.totalorder %s65, %s67
    %p71 = scmp.eq.s32.totalorder %s10, 0
    %p72 = por %p70, %p71
    %p73 = scmp.ne.s32.totalorder %s65, %s67
    %p74 = scmp.eq.s32.totalorder %s15, 1
    %p75 = por %p73, %p74
    %p76 = scmp.ne.s32.totalorder %s67, %s68
    %p77 = scmp.eq.s32.totalorder %s15, 0
    %p78 = por %p76, %p77
    %p79 = scmp.ne.s32.totalorder %s67, %s68
    %p80 = scmp.eq.s32.totalorder %s16, 1
    %p81 = por %p79, %p80
    %p83 = scmp.ne.s32.totalorder %s68, %s82
    %p84 = scmp.eq.s32.totalorder %s16, 0
    %p85 = por %p83, %p84
    %s86 = ssub.s32 %s10, %s17
    %p87 = scmp.eq.s32.totalorder %s86, 0
    %s89 = sadd.s32 %s88, 1
    %s90 = scalar_select %p87, %s88, %s89
    %p93 = pneg %p87
    %p94 = scmp.eq.s32.totalorder %s10, 1
    %p95 = por %p93, %p94
    %p96 = scmp.ne.s32.totalorder %s88, %s91
    %p97 = scmp.eq.s32.totalorder %s10, 0
    %p98 = por %p96, %p97
    %p99 = scmp.ne.s32.totalorder %s88, %s91
    %p100 = scmp.eq.s32.totalorder %s15, 1
    %p101 = por %p99, %p100
    %p102 = scmp.ne.s32.totalorder %s91, %s92
    %p103 = scmp.eq.s32.totalorder %s15, 0
    %p104 = por %p102, %p103
    %p105 = scmp.ne.s32.totalorder %s91, %s92
    %p106 = scmp.eq.s32.totalorder %s16, 1
    %p107 = por %p105, %p106
    %p109 = scmp.ne.s32.totalorder %s92, %s108
    %p110 = scmp.eq.s32.totalorder %s16, 0
    %p111 = por %p109, %p110
    %s112 = ssub.s32 %s10, %s17
    %p113 = scmp.eq.s32.totalorder %s112, 0
    %s115 = sadd.s32 %s114, 1
    %s116 = scalar_select %p113, %s114, %s115
    %p119 = pneg %p113
    %p120 = scmp.eq.s32.totalorder %s10, 1
    %p121 = por %p119, %p120
    %p122 = scmp.ne.s32.totalorder %s114, %s117
    %p123 = scmp.eq.s32.totalorder %s10, 0
    %p124 = por %p122, %p123
    %p125 = scmp.ne.s32.totalorder %s114, %s117
    %p126 = scmp.eq.s32.totalorder %s15, 1
    %p127 = por %p125, %p126
    %p128 = scmp.ne.s32.totalorder %s117, %s118
    %p129 = scmp.eq.s32.totalorder %s15, 0
    %p130 = por %p128, %p129
    %p131 = scmp.ne.s32.totalorder %s117, %s118
    %p132 = scmp.eq.s32.totalorder %s16, 1
    %p133 = por %p131, %p132
    %p135 = scmp.ne.s32.totalorder %s118, %s134
    %p136 = scmp.eq.s32.totalorder %s16, 0
    %p137 = por %p135, %p136
    %p138 = scmp.le.s32.totalorder 1, %s10
    %p139 = scmp.lt.s32.totalorder %s10, 3
    %p140 = pnand %p138, %p139
    %p141 = pneg %p140
    // Predicated region
    $region9: #{gmae_forward.7} parent=5 // pred_check
      _
    $region10: #{gmae_forward.7} parent=5 // pred_check_branch
      %143 = sbr.rel (%p140) target = $region12
    $region11: #{gmae_forward.7} parent=5 // pred_region
      %s144 = ssub.s32 %s10, 1
      // Predicated region
      $region13: #{gmae_forward.7} parent=11 // pred_check
        %p145 = pneg %p57
      $region14: #{gmae_forward.7} parent=11 // pred_check_branch
        %147 = sbr.rel (%p145) target = $region16
      $region15: #{gmae_forward.7} parent=11 // pred_region
        _
      $region16: #{gmae_forward.7} parent=11 // pred_fallthru
        _
      // Predicated region
      $region17: #{gmae_forward.7} parent=11 // pred_check
        %p148 = pneg %p78
      $region18: #{gmae_forward.7} parent=11 // pred_check_branch
        %150 = sbr.rel (%p148) target = $region20
      $region19: #{gmae_forward.7} parent=11 // pred_region
        _
      $region20: #{gmae_forward.7} parent=11 // pred_fallthru
        _
    $region12: #{gmae_forward.7} parent=5 // pred_fallthru
      _
    %p151 = scmp.lt.s32.totalorder %s10, 2
    // Predicated region
    $region21: #{gmae_forward.7} parent=5 // pred_check
      %p152 = pneg %p151
    $region22: #{gmae_forward.7} parent=5 // pred_check_branch
      %154 = sbr.rel (%p152) target = $region24
    $region23: #{gmae_forward.7} parent=5 // pred_region
      // Predicated region
      $region25: #{gmae_forward.7} parent=23 // pred_check
        %p155 = pneg %p30
      $region26: #{gmae_forward.7} parent=23 // pred_check_branch
        %157 = sbr.rel (%p155) target = $region28
      $region27: #{gmae_forward.7} parent=23 // pred_region
        %p158 = scmp.lt.s32.totalorder %s10, 1
        %s159 = scalar_select %p158, %s10, 1
        %s160 = smul.addr %s159, 8
        %s161 = smul.addr %s160, 4
        %s162 = scalar_lea.vmem %s0, %s161
      $region28: #{gmae_forward.7} parent=23 // pred_fallthru
        _
      // Predicated region
      $region29: #{gmae_forward.7} parent=23 // pred_check
        %p163 = pneg %p98
      $region30: #{gmae_forward.7} parent=23 // pred_check_branch
        %165 = sbr.rel (%p163) target = $region32
      $region31: #{gmae_forward.7} parent=23 // pred_region
        %p166 = scmp.lt.s32.totalorder %s10, 1
        %s167 = scalar_select %p166, %s10, 1
        %s168 = smul.addr %s167, 8
        %s169 = smul.addr %s168, 8
        %s170 = scalar_lea.vmem %s3, %s169
      $region32: #{gmae_forward.7} parent=23 // pred_fallthru
        _
    $region24: #{gmae_forward.7} parent=5 // pred_fallthru
      _
    %p171 = scmp.le.s32.totalorder 1, %s10
    %p172 = scmp.lt.s32.totalorder %s10, 3
    %p173 = pnand %p171, %p172
    %p174 = pneg %p173
    // Predicated region
    $region33: #{gmae_forward.7} parent=5 // pred_check
      _
    $region34: #{gmae_forward.7} parent=5 // pred_check_branch
      %176 = sbr.rel (%p173) target = $region36
    $region35: #{gmae_forward.7} parent=5 // pred_region
      %s177 = ssub.s32 %s10, 1
      %p178 = scmp.lt.s32.totalorder %s15, 1
      %s179 = scalar_select %p178, %s15, 1
      %s180 = smul.addr %s179, 8
      %s181 = smul.addr %s180, 4
      %s182 = scalar_lea.vmem %s0, %s181
      %p183 = pneg %p36
      %p184 = pneg %p33
      %p185 = pneg %p57
      %p186 = pneg %p54
      %p187 = pneg %p78
      %p188 = pneg %p75
      %p189 = scmp.lt.s32.totalorder %s15, 1
      %s190 = scalar_select %p189, %s15, 1
      %s191 = smul.addr %s190, 8
      %s192 = smul.addr %s191, 8
      %s193 = scalar_lea.vmem %s3, %s192
      %p194 = pneg %p104
      %p195 = pneg %p101
      %p196 = pneg %p130
      %p197 = pneg %p127
      %p198 = scmp.lt.s32.totalorder %s15, 1
      %s199 = scalar_select %p198, %s15, 1
      %s200 = smul.addr %s199, 8
      %s201 = smul.addr %s200, 8
      %s202 = scalar_lea.vmem %s4, %s201
      %p203 = scmp.lt.s32.totalorder %s15, 1
      %s204 = scalar_select %p203, %s15, 1
      %s205 = smul.addr %s204, 8
      %s206 = smul.addr %s205, 4
      %s207 = scalar_lea.vmem %s0, %s206
      %p208 = scmp.lt.s32.totalorder %s15, 1
      %s209 = scalar_select %p208, %s15, 1
      %s210 = smul.addr %s209, 8
      %s211 = smul.addr %s210, 8
      %s212 = scalar_lea.vmem %s3, %s211
      %p213 = scmp.lt.s32.totalorder %s15, 1
      %s214 = scalar_select %p213, %s15, 1
      %s215 = smul.addr %s214, 8
      %s216 = smul.addr %s215, 8
      %s217 = scalar_lea.vmem %s4, %s216
      %v219 = vld [vmem:[%s207] sm:$0xf]
      %v220 = vld [vmem:[%s207 + $0x4] sm:$0xf]
      %v221 = vld [vmem:[%s207 + $0x8] sm:$0xf]
      %v222 = vld [vmem:[%s207 + $0xc] sm:$0xf]
      %v223 = vld [vmem:[%s207 + $0x10] sm:$0xf]
      %v224 = vld [vmem:[%s207 + $0x14] sm:$0xf]
      %v225 = vld [vmem:[%s207 + $0x18] sm:$0xf]
      %v226 = vld [vmem:[%s207 + $0x1c] sm:$0xf]
      %v227 = vld [vmem:[%s1] sm:$0xf]
      %v228 = vld [vmem:[%s1 + $0x4] sm:$0xf]
      %v237 = vunpack.c.l.b16 %v219
      %v238 = vunpack.c.l.b16 %v220
      %v239 = vunpack.c.l.b16 %v221
      %v240 = vunpack.c.l.b16 %v222
      %v241 = vunpack.c.l.b16 %v223
      %v242 = vunpack.c.l.b16 %v224
      %v243 = vunpack.c.l.b16 %v225
      %v244 = vunpack.c.l.b16 %v226
      %v245 = vpack.c.b16 %v238, %v237
      %v246 = vpack.c.b16 %v240, %v239
      %v247 = vpack.c.b16 %v242, %v241
      %v248 = vpack.c.b16 %v244, %v243
      %v251 = vunpack.c.l.b16 %v227
      %v252 = vunpack.c.l.b16 %v228
      %v253 = vpack.c.b16 %v252, %v251
      %vm255 = vcmask 130048
      %v257 = vsel %vm255, %v245, 0
      %v260 = vsel %vm255, %v246, 0
      %v263 = vsel %vm255, %v247, 0
      %v266 = vsel %vm255, %v248, 0
      %268 = vmatprep.subr.bf16.mxu0 0
      %269 = vmatpush1.bf16.msra.mxu0 0
      %270 = vmatprep.subr.bf16.mxu0 0
      %271 = vmatpush1.bf16.msra.mxu0 0
      %272 = vmatprep.subr.bf16.mxu0 0
      %273 = vmatpush1.bf16.msra.mxu0 0
      %274 = vmatprep.subr.bf16.mxu0 0
      %275 = vmatpush1.bf16.msra.mxu0 0
      %276 = vmatprep.subr.bf16.mxu0 0
      %277 = vmatpush1.bf16.msra.mxu0 0
      %278 = vmatprep.subr.bf16.mxu0 0
      %279 = vmatpush1.bf16.msra.mxu0 0
      %280 = vmatprep.subr.bf16.mxu0 0
      %281 = vmatpush1.bf16.msra.mxu0 0
      %282 = vmatprep.subr.bf16.mxu0 0
      %283 = vmatpush1.bf16.msra.mxu0 %v253
      %284 = vmatprep.subr.bf16.mxu0 0
      %285 = vmatpush2.bf16.msra.mxu0 0
      %286 = vmatprep.subr.bf16.mxu0 0
      %287 = vmatpush2.bf16.msra.mxu0 0
      %288 = vmatprep.subr.bf16.mxu0 0
      %289 = vmatpush2.bf16.msra.mxu0 0
      %290 = vmatprep.subr.bf16.mxu0 0
      %291 = vmatpush2.bf16.msra.mxu0 0
      %292 = vmatprep.subr.bf16.mxu0 0
      %293 = vmatpush2.bf16.msra.mxu0 0
      %294 = vmatprep.subr.bf16.mxu0 0
      %295 = vmatpush2.bf16.msra.mxu0 0
      %296 = vmatprep.subr.bf16.mxu0 0
      %297 = vmatpush2.bf16.msra.mxu0 0
      %298 = vmatprep.subr.bf16.mxu0 0
      %299 = vmatpush2.bf16.msra.mxu0 0
      %300 = vmatprep.mubr.bf16.mxu0 0
      %301 = vmatmul.mubr.bf16.gmra.mxu0 %v257
      %v302 = vpop.f32.mrf.mxu0
      %v303 = vadd.f32 0.0, %v302
      %v304 = vpop.f32.mrf.mxu0
      %v305 = vpop.f32.mrf.mxu0
      %v306 = vadd.f32 0.0, %v305
      %v307 = vpop.f32.mrf.mxu0
      %308 = vmatprep.mubr.bf16.mxu0 0
      %309 = vmatmul.mubr.bf16.gmra.mxu0 %v260
      %v310 = vpop.f32.mrf.mxu0
      %v311 = vadd.f32 0.0, %v310
      %v312 = vpop.f32.mrf.mxu0
      %v313 = vpop.f32.mrf.mxu0
      %v314 = vadd.f32 0.0, %v313
      %v315 = vpop.f32.mrf.mxu0
      %316 = vmatprep.mubr.bf16.mxu0 0
      %317 = vmatmul.mubr.bf16.gmra.mxu0 %v263
      %v318 = vpop.f32.mrf.mxu0
      %v319 = vadd.f32 0.0, %v318
      %v320 = vpop.f32.mrf.mxu0
      %v321 = vpop.f32.mrf.mxu0
      %v322 = vadd.f32 0.0, %v321
      %v323 = vpop.f32.mrf.mxu0
      %324 = vmatprep.mubr.bf16.mxu0 0
      %325 = vmatmul.mubr.bf16.gmra.mxu0 %v266
      %v326 = vpop.f32.mrf.mxu0
      %v327 = vadd.f32 0.0, %v326
      %v328 = vpop.f32.mrf.mxu0
      %v329 = vpop.f32.mrf.mxu0
      %v330 = vadd.f32 0.0, %v329
      %v331 = vpop.f32.mrf.mxu0
      %332 = vdwg.mxu0
      %v333 = vpack.c.bf16 %v306, %v303
      %v334 = vpack.c.bf16 %v314, %v311
      %v335 = vpack.c.bf16 %v322, %v319
      %v336 = vpack.c.bf16 %v330, %v327
      %v337 = vld [vmem:[%s212] sm:$0xff]
      %v338 = vld [vmem:[%s212 + $0x8] sm:$0xff]
      %v339 = vld [vmem:[%s212 + $0x10] sm:$0xff]
      %v340 = vld [vmem:[%s212 + $0x18] sm:$0xff]
      %v341 = vld [vmem:[%s212 + $0x20] sm:$0xff]
      %v342 = vld [vmem:[%s212 + $0x28] sm:$0xff]
      %v343 = vld [vmem:[%s212 + $0x30] sm:$0xff]
      %v344 = vld [vmem:[%s212 + $0x38] sm:$0xff]
      %v345 = vld [vmem:[%s2] sm:$0xf]
      %v346 = vld [vmem:[%s2 + $0x4] sm:$0xf]
      %v347 = vld [vmem:[%s2 + $0x8] sm:$0xf]
      %v348 = vld [vmem:[%s2 + $0xc] sm:$0xf]
      %v353 = vunpack.c.l.b16 %v345
      %v354 = vunpack.c.l.b16 %v346
      %v355 = vunpack.c.l.b16 %v347
      %v356 = vunpack.c.l.b16 %v348
      %v357 = vpack.c.b16 %v354, %v353
      %v358 = vpack.c.b16 %v356, %v355
      %vm361 = vcmask 261120
      %v363 = vsel %vm361, %v333, 0
      %v366 = vsel %vm361, %v334, 0
      %v369 = vsel %vm361, %v335, 0
      %v372 = vsel %vm361, %v336, 0
      %374 = vmatprep.subr.bf16.mxu0 0
      %375 = vmatpush1.bf16.msra.mxu0 0
      %376 = vmatprep.subr.bf16.mxu0 0
      %377 = vmatpush1.bf16.msra.mxu0 0
      %378 = vmatprep.subr.bf16.mxu0 0
      %379 = vmatpush1.bf16.msra.mxu0 0
      %380 = vmatprep.subr.bf16.mxu0 0
      %381 = vmatpush1.bf16.msra.mxu0 0
      %382 = vmatprep.subr.bf16.mxu0 0
      %383 = vmatpush1.bf16.msra.mxu0 0
      %384 = vmatprep.subr.bf16.mxu0 0
      %385 = vmatpush1.bf16.msra.mxu0 0
      %386 = vmatprep.subr.bf16.mxu0 0
      %387 = vmatpush1.bf16.msra.mxu0 %v358
      %388 = vmatprep.subr.bf16.mxu0 0
      %389 = vmatpush1.bf16.msra.mxu0 %v357
      %390 = vmatprep.subr.bf16.mxu0 0
      %391 = vmatpush2.bf16.msra.mxu0 0
      %392 = vmatprep.subr.bf16.mxu0 0
      %393 = vmatpush2.bf16.msra.mxu0 0
      %394 = vmatprep.subr.bf16.mxu0 0
      %395 = vmatpush2.bf16.msra.mxu0 0
      %396 = vmatprep.subr.bf16.mxu0 0
      %397 = vmatpush2.bf16.msra.mxu0 0
      %398 = vmatprep.subr.bf16.mxu0 0
      %399 = vmatpush2.bf16.msra.mxu0 0
      %400 = vmatprep.subr.bf16.mxu0 0
      %401 = vmatpush2.bf16.msra.mxu0 0
      %402 = vmatprep.subr.bf16.mxu0 0
      %403 = vmatpush2.bf16.msra.mxu0 0
      %404 = vmatprep.subr.bf16.mxu0 0
      %405 = vmatpush2.bf16.msra.mxu0 0
      %406 = vmatprep.mubr.bf16.mxu0 0
      %407 = vmatmul.mubr.bf16.gmra.mxu0 %v363
      %v408 = vpop.f32.mrf.mxu0
      %v409 = vadd.f32 0.0, %v408
      %v410 = vpop.f32.mrf.mxu0
      %v411 = vpop.f32.mrf.mxu0
      %v412 = vadd.f32 0.0, %v411
      %v413 = vpop.f32.mrf.mxu0
      %414 = vmatprep.mubr.bf16.mxu0 0
      %415 = vmatmul.mubr.bf16.gmra.mxu0 %v366
      %v416 = vpop.f32.mrf.mxu0
      %v417 = vadd.f32 0.0, %v416
      %v418 = vpop.f32.mrf.mxu0
      %v419 = vpop.f32.mrf.mxu0
      %v420 = vadd.f32 0.0, %v419
      %v421 = vpop.f32.mrf.mxu0
      %422 = vmatprep.mubr.bf16.mxu0 0
      %423 = vmatmul.mubr.bf16.gmra.mxu0 %v369
      %v424 = vpop.f32.mrf.mxu0
      %v425 = vadd.f32 0.0, %v424
      %v426 = vpop.f32.mrf.mxu0
      %v427 = vpop.f32.mrf.mxu0
      %v428 = vadd.f32 0.0, %v427
      %v429 = vpop.f32.mrf.mxu0
      %430 = vmatprep.mubr.bf16.mxu0 0
      %431 = vmatmul.mubr.bf16.gmra.mxu0 %v372
      %v432 = vpop.f32.mrf.mxu0
      %v433 = vadd.f32 0.0, %v432
      %v434 = vpop.f32.mrf.mxu0
      %v435 = vpop.f32.mrf.mxu0
      %v436 = vadd.f32 0.0, %v435
      %v437 = vpop.f32.mrf.mxu0
      %438 = vdwg.mxu0
      %439 = vxpose.xlu0.b32.start [1/16] %v409, 128
      %440 = vxpose.xlu0.b32.cont [2/16] %v412, 128
      %441 = vxpose.xlu0.b32.cont [3/16] %v417, 128
      %442 = vxpose.xlu0.b32.cont [4/16] %v420, 128
      %443 = vxpose.xlu0.b32.cont [5/16] %v425, 128
      %444 = vxpose.xlu0.b32.cont [6/16] %v428, 128
      %445 = vxpose.xlu0.b32.cont [7/16] %v433, 128
      %446 = vxpose.xlu0.b32.cont [8/16] %v436, 128
      %447 = vxpose.xlu0.b32.cont [9/16] 0.0, 128
      %448 = vxpose.xlu0.b32.cont [10/16] 0.0, 128
      %449 = vxpose.xlu0.b32.cont [11/16] 0.0, 128
      %450 = vxpose.xlu0.b32.cont [12/16] 0.0, 128
      %451 = vxpose.xlu0.b32.cont [13/16] 0.0, 128
      %452 = vxpose.xlu0.b32.cont [14/16] 0.0, 128
      %453 = vxpose.xlu0.b32.cont [15/16] 0.0, 128
      %454 = vxpose.xlu0.b32.end [16/16] 0.0, 128
      %v455 = vpop.trf.xlu0
      %v456 = vpop.trf.xlu0
      %v457 = vpop.trf.xlu0
      %v458 = vpop.trf.xlu0
      %v459 = vpop.trf.xlu0
      %v460 = vpop.trf.xlu0
      %v461 = vpop.trf.xlu0
      %v462 = vpop.trf.xlu0
      %v463 = vpop.trf.xlu0
      %v464 = vpop.trf.xlu0
      %v465 = vpop.trf.xlu0
      %v466 = vpop.trf.xlu0
      %v467 = vpop.trf.xlu0
      %v468 = vpop.trf.xlu0
      %v469 = vpop.trf.xlu0
      %v470 = vpop.trf.xlu0
      %472 = vset.pattern.permute.xlu0 0
      %473 = vperm.xlu0 %472, %v409
      %v474 = vpop.permute.xlu0 %473
      %477 = vset.pattern.permute.xlu0 0
      %478 = vperm.xlu0 %477, %v412
      %v479 = vpop.permute.xlu0 %478
      %482 = vset.pattern.permute.xlu0 0
      %483 = vperm.xlu0 %482, %v417
      %v484 = vpop.permute.xlu0 %483
      %487 = vset.pattern.permute.xlu0 0
      %488 = vperm.xlu0 %487, %v420
      %v489 = vpop.permute.xlu0 %488
      %492 = vset.pattern.permute.xlu0 0
      %493 = vperm.xlu0 %492, %v425
      %v494 = vpop.permute.xlu0 %493
      %497 = vset.pattern.permute.xlu0 0
      %498 = vperm.xlu0 %497, %v428
      %v499 = vpop.permute.xlu0 %498
      %502 = vset.pattern.permute.xlu0 0
      %503 = vperm.xlu0 %502, %v433
      %v504 = vpop.permute.xlu0 %503
      %507 = vset.pattern.permute.xlu0 0
      %508 = vperm.xlu0 %507, %v436
      %v509 = vpop.permute.xlu0 %508
      %v511 = vlaneseq
      %v512 = vshrl.u32 %v511, 7
      %v513 = vsub.s32 4, %v512
      %v514 = vrot.slane %v455, %v513
      %v515 = vadd.f32 %v474, %v514
      %v516 = vadd.f32 %v479, %v514
      %v517 = vadd.f32 %v484, %v514
      %v518 = vadd.f32 %v489, %v514
      %v519 = vadd.f32 %v494, %v514
      %v520 = vadd.f32 %v499, %v514
      %v521 = vadd.f32 %v504, %v514
      %v522 = vadd.f32 %v509, %v514
      %vm523 = vcmp.gt.f32.partialorder %v515, 0.0
      %vm524 = vcmp.gt.f32.partialorder %v516, 0.0
      %vm525 = vcmp.gt.f32.partialorder %v517, 0.0
      %vm526 = vcmp.gt.f32.partialorder %v518, 0.0
      %vm527 = vcmp.gt.f32.partialorder %v519, 0.0
      %vm528 = vcmp.gt.f32.partialorder %v520, 0.0
      %vm529 = vcmp.gt.f32.partialorder %v521, 0.0
      %vm530 = vcmp.gt.f32.partialorder %v522, 0.0
      %v531 = vmul.f32 %v515, 0.2
      %v532 = vmul.f32 %v516, 0.2
      %v533 = vmul.f32 %v517, 0.2
      %v534 = vmul.f32 %v518, 0.2
      %v535 = vmul.f32 %v519, 0.2
      %v536 = vmul.f32 %v520, 0.2
      %v537 = vmul.f32 %v521, 0.2
      %v538 = vmul.f32 %v522, 0.2
      %v539 = vsel %vm523, %v515, %v531
      %v540 = vsel %vm524, %v516, %v532
      %v541 = vsel %vm525, %v517, %v533
      %v542 = vsel %vm526, %v518, %v534
      %v543 = vsel %vm527, %v519, %v535
      %v544 = vsel %vm528, %v520, %v536
      %v545 = vsel %vm529, %v521, %v537
      %v546 = vsel %vm530, %v522, %v538
      %vm547 = vcmp.gt.f32.partialorder %v337, 0.0
      %vm548 = vcmp.gt.f32.partialorder %v338, 0.0
      %vm549 = vcmp.gt.f32.partialorder %v339, 0.0
      %vm550 = vcmp.gt.f32.partialorder %v340, 0.0
      %vm551 = vcmp.gt.f32.partialorder %v341, 0.0
      %vm552 = vcmp.gt.f32.partialorder %v342, 0.0
      %vm553 = vcmp.gt.f32.partialorder %v343, 0.0
      %vm554 = vcmp.gt.f32.partialorder %v344, 0.0
      %v555 = vsel %vm547, %v539, -1e+30
      %v556 = vsel %vm548, %v540, -1e+30
      %v557 = vsel %vm549, %v541, -1e+30
      %v558 = vsel %vm550, %v542, -1e+30
      %v559 = vsel %vm551, %v543, -1e+30
      %v560 = vsel %vm552, %v544, -1e+30
      %v561 = vsel %vm553, %v545, -1e+30
      %v562 = vsel %vm554, %v546, -1e+30
      %vm563 = vcmask 523264
      %v564 = vsel %vm563, %v555, -inf
      %565 = vmax.xlane.f32.xlu0 %v564
      %v566 = vpop.xlane.xlu0 %565
      %v567 = vsel %vm563, %v556, -inf
      %568 = vmax.xlane.f32.xlu0 %v567
      %v569 = vpop.xlane.xlu0 %568
      %v570 = vsel %vm563, %v557, -inf
      %571 = vmax.xlane.f32.xlu0 %v570
      %v572 = vpop.xlane.xlu0 %571
      %v573 = vsel %vm563, %v558, -inf
      %574 = vmax.xlane.f32.xlu0 %v573
      %v575 = vpop.xlane.xlu0 %574
      %v576 = vsel %vm563, %v559, -inf
      %577 = vmax.xlane.f32.xlu0 %v576
      %v578 = vpop.xlane.xlu0 %577
      %v579 = vsel %vm563, %v560, -inf
      %580 = vmax.xlane.f32.xlu0 %v579
      %v581 = vpop.xlane.xlu0 %580
      %v582 = vsel %vm563, %v561, -inf
      %583 = vmax.xlane.f32.xlu0 %v582
      %v584 = vpop.xlane.xlu0 %583
      %v585 = vsel %vm563, %v562, -inf
      %586 = vmax.xlane.f32.xlu0 %v585
      %v587 = vpop.xlane.xlu0 %586
      %v588 = vsub.f32 %v555, %v566
      %v589 = vsub.f32 %v556, %v569
      %v590 = vsub.f32 %v557, %v572
      %v591 = vsub.f32 %v558, %v575
      %v592 = vsub.f32 %v559, %v578
      %v593 = vsub.f32 %v560, %v581
      %v594 = vsub.f32 %v561, %v584
      %v595 = vsub.f32 %v562, %v587
      %v596 = vmul.f32 %v588, 1.442695
      %v597 = vpow.pop %v596
      %v598 = vmul.f32 %v589, 1.442695
      %v599 = vpow.pop %v598
      %v600 = vmul.f32 %v590, 1.442695
      %v601 = vpow.pop %v600
      %v602 = vmul.f32 %v591, 1.442695
      %v603 = vpow.pop %v602
      %v604 = vmul.f32 %v592, 1.442695
      %v605 = vpow.pop %v604
      %v606 = vmul.f32 %v593, 1.442695
      %v607 = vpow.pop %v606
      %v608 = vmul.f32 %v594, 1.442695
      %v609 = vpow.pop %v608
      %v610 = vmul.f32 %v595, 1.442695
      %v611 = vpow.pop %v610
      %v612 = vsel %vm563, %v597, 0.0
      %613 = vadd.xlane.f32.xlu0 %v612
      %v614 = vpop.xlane.xlu0 %613
      %v615 = vsel %vm563, %v599, 0.0
      %616 = vadd.xlane.f32.xlu0 %v615
      %v617 = vpop.xlane.xlu0 %616
      %v618 = vsel %vm563, %v601, 0.0
      %619 = vadd.xlane.f32.xlu0 %v618
      %v620 = vpop.xlane.xlu0 %619
      %v621 = vsel %vm563, %v603, 0.0
      %622 = vadd.xlane.f32.xlu0 %v621
      %v623 = vpop.xlane.xlu0 %622
      %v624 = vsel %vm563, %v605, 0.0
      %625 = vadd.xlane.f32.xlu0 %v624
      %v626 = vpop.xlane.xlu0 %625
      %v627 = vsel %vm563, %v607, 0.0
      %628 = vadd.xlane.f32.xlu0 %v627
      %v629 = vpop.xlane.xlu0 %628
      %v630 = vsel %vm563, %v609, 0.0
      %631 = vadd.xlane.f32.xlu0 %v630
      %v632 = vpop.xlane.xlu0 %631
      %v633 = vsel %vm563, %v611, 0.0
      %634 = vadd.xlane.f32.xlu0 %v633
      %v635 = vpop.xlane.xlu0 %634
      %v636 = vrcp.pop %v614
      %v637 = vmul.f32 %v597, %v636
      %v638 = vrcp.pop %v617
      %v639 = vmul.f32 %v599, %v638
      %v640 = vrcp.pop %v620
      %v641 = vmul.f32 %v601, %v640
      %v642 = vrcp.pop %v623
      %v643 = vmul.f32 %v603, %v642
      %v644 = vrcp.pop %v626
      %v645 = vmul.f32 %v605, %v644
      %v646 = vrcp.pop %v629
      %v647 = vmul.f32 %v607, %v646
      %v648 = vrcp.pop %v632
      %v649 = vmul.f32 %v609, %v648
      %v650 = vrcp.pop %v635
      %v651 = vmul.f32 %v611, %v650
      %v652 = vpack.c.bf16 %v639, %v637
      %v653 = vpack.c.bf16 %v643, %v641
      %v654 = vpack.c.bf16 %v647, %v645
      %v655 = vpack.c.bf16 %v651, %v649
      %v657 = vsel %vm563, %v652, 0
      %v660 = vsel %vm563, %v653, 0
      %v663 = vsel %vm563, %v654, 0
      %v666 = vsel %vm563, %v655, 0
      %668 = vmatprep.subr.bf16.mxu0 0
      %669 = vmatpush1.bf16.msra.mxu0 0
      %670 = vmatprep.subr.bf16.mxu0 0
      %671 = vmatpush1.bf16.msra.mxu0 0
      %672 = vmatprep.subr.bf16.mxu0 0
      %673 = vmatpush1.bf16.msra.mxu0 0
      %674 = vmatprep.subr.bf16.mxu0 0
      %675 = vmatpush1.bf16.msra.mxu0 0
      %676 = vmatprep.subr.bf16.mxu0 0
      %677 = vmatpush1.bf16.msra.mxu0 %v336
      %678 = vmatprep.subr.bf16.mxu0 0
      %679 = vmatpush1.bf16.msra.mxu0 %v335
      %680 = vmatprep.subr.bf16.mxu0 0
      %681 = vmatpush1.bf16.msra.mxu0 %v334
      %682 = vmatprep.subr.bf16.mxu0 0
      %683 = vmatpush1.bf16.msra.mxu0 %v333
      %684 = vmatprep.subr.bf16.mxu0 0
      %685 = vmatpush2.bf16.msra.mxu0 0
      %686 = vmatprep.subr.bf16.mxu0 0
      %687 = vmatpush2.bf16.msra.mxu0 0
      %688 = vmatprep.subr.bf16.mxu0 0
      %689 = vmatpush2.bf16.msra.mxu0 0
      %690 = vmatprep.subr.bf16.mxu0 0
      %691 = vmatpush2.bf16.msra.mxu0 0
      %692 = vmatprep.subr.bf16.mxu0 0
      %693 = vmatpush2.bf16.msra.mxu0 0
      %694 = vmatprep.subr.bf16.mxu0 0
      %695 = vmatpush2.bf16.msra.mxu0 0
      %696 = vmatprep.subr.bf16.mxu0 0
      %697 = vmatpush2.bf16.msra.mxu0 0
      %698 = vmatprep.subr.bf16.mxu0 0
      %699 = vmatpush2.bf16.msra.mxu0 0
      %700 = vmatprep.mubr.bf16.mxu0 0
      %701 = vmatmul.mubr.bf16.gmra.mxu0 %v657
      %v702 = vpop.f32.mrf.mxu0
      %v703 = vadd.f32 0.0, %v702
      %v704 = vpop.f32.mrf.mxu0
      %v705 = vpop.f32.mrf.mxu0
      %v706 = vadd.f32 0.0, %v705
      %v707 = vpop.f32.mrf.mxu0
      %708 = vmatprep.mubr.bf16.mxu0 0
      %709 = vmatmul.mubr.bf16.gmra.mxu0 %v660
      %v710 = vpop.f32.mrf.mxu0
      %v711 = vadd.f32 0.0, %v710
      %v712 = vpop.f32.mrf.mxu0
      %v713 = vpop.f32.mrf.mxu0
      %v714 = vadd.f32 0.0, %v713
      %v715 = vpop.f32.mrf.mxu0
      %716 = vmatprep.mubr.bf16.mxu0 0
      %717 = vmatmul.mubr.bf16.gmra.mxu0 %v663
      %v718 = vpop.f32.mrf.mxu0
      %v719 = vadd.f32 0.0, %v718
      %v720 = vpop.f32.mrf.mxu0
      %v721 = vpop.f32.mrf.mxu0
      %v722 = vadd.f32 0.0, %v721
      %v723 = vpop.f32.mrf.mxu0
      %724 = vmatprep.mubr.bf16.mxu0 0
      %725 = vmatmul.mubr.bf16.gmra.mxu0 %v666
      %v726 = vpop.f32.mrf.mxu0
      %v727 = vadd.f32 0.0, %v726
      %v728 = vpop.f32.mrf.mxu0
      %v729 = vpop.f32.mrf.mxu0
      %v730 = vadd.f32 0.0, %v729
      %v731 = vpop.f32.mrf.mxu0
      %732 = vdwg.mxu0
      %733 = vset.pattern.permute.xlu0 1
      %734 = vperm.xlu0 %733, %v409
      %v735 = vpop.permute.xlu0 %734
      %737 = vset.pattern.permute.xlu0 1
      %738 = vperm.xlu0 %737, %v412
      %v739 = vpop.permute.xlu0 %738
      %741 = vset.pattern.permute.xlu0 1
      %742 = vperm.xlu0 %741, %v417
      %v743 = vpop.permute.xlu0 %742
      %745 = vset.pattern.permute.xlu0 1
      %746 = vperm.xlu0 %745, %v420
      %v747 = vpop.permute.xlu0 %746
      %749 = vset.pattern.permute.xlu0 1
      %750 = vperm.xlu0 %749, %v425
      %v751 = vpop.permute.xlu0 %750
      %753 = vset.pattern.permute.xlu0 1
      %754 = vperm.xlu0 %753, %v428
      %v755 = vpop.permute.xlu0 %754
      %757 = vset.pattern.permute.xlu0 1
      %758 = vperm.xlu0 %757, %v433
      %v759 = vpop.permute.xlu0 %758
      %761 = vset.pattern.permute.xlu0 1
      %762 = vperm.xlu0 %761, %v436
      %v763 = vpop.permute.xlu0 %762
      %v765 = vlaneseq
      %v766 = vshrl.u32 %v765, 7
      %v767 = vsub.s32 5, %v766
      %v768 = vrot.slane %v455, %v767
      %v769 = vadd.f32 %v735, %v768
      %v770 = vadd.f32 %v739, %v768
      %v771 = vadd.f32 %v743, %v768
      %v772 = vadd.f32 %v747, %v768
      %v773 = vadd.f32 %v751, %v768
      %v774 = vadd.f32 %v755, %v768
      %v775 = vadd.f32 %v759, %v768
      %v776 = vadd.f32 %v763, %v768
      %vm777 = vcmp.gt.f32.partialorder %v769, 0.0
      %vm778 = vcmp.gt.f32.partialorder %v770, 0.0
      %vm779 = vcmp.gt.f32.partialorder %v771, 0.0
      %vm780 = vcmp.gt.f32.partialorder %v772, 0.0
      %vm781 = vcmp.gt.f32.partialorder %v773, 0.0
      %vm782 = vcmp.gt.f32.partialorder %v774, 0.0
      %vm783 = vcmp.gt.f32.partialorder %v775, 0.0
      %vm784 = vcmp.gt.f32.partialorder %v776, 0.0
      %v785 = vmul.f32 %v769, 0.2
      %v786 = vmul.f32 %v770, 0.2
      %v787 = vmul.f32 %v771, 0.2
      %v788 = vmul.f32 %v772, 0.2
      %v789 = vmul.f32 %v773, 0.2
      %v790 = vmul.f32 %v774, 0.2
      %v791 = vmul.f32 %v775, 0.2
      %v792 = vmul.f32 %v776, 0.2
      %v793 = vsel %vm777, %v769, %v785
      %v794 = vsel %vm778, %v770, %v786
      %v795 = vsel %vm779, %v771, %v787
      %v796 = vsel %vm780, %v772, %v788
      %v797 = vsel %vm781, %v773, %v789
      %v798 = vsel %vm782, %v774, %v790
      %v799 = vsel %vm783, %v775, %v791
      %v800 = vsel %vm784, %v776, %v792
      %v801 = vsel %vm547, %v793, -1e+30
      %v802 = vsel %vm548, %v794, -1e+30
      %v803 = vsel %vm549, %v795, -1e+30
      %v804 = vsel %vm550, %v796, -1e+30
      %v805 = vsel %vm551, %v797, -1e+30
      %v806 = vsel %vm552, %v798, -1e+30
      %v807 = vsel %vm553, %v799, -1e+30
      %v808 = vsel %vm554, %v800, -1e+30
      %v809 = vsel %vm563, %v801, -inf
      %810 = vmax.xlane.f32.xlu0 %v809
      %v811 = vpop.xlane.xlu0 %810
      %v812 = vsel %vm563, %v802, -inf
      %813 = vmax.xlane.f32.xlu0 %v812
      %v814 = vpop.xlane.xlu0 %813
      %v815 = vsel %vm563, %v803, -inf
      %816 = vmax.xlane.f32.xlu0 %v815
      %v817 = vpop.xlane.xlu0 %816
      %v818 = vsel %vm563, %v804, -inf
      %819 = vmax.xlane.f32.xlu0 %v818
      %v820 = vpop.xlane.xlu0 %819
      %v821 = vsel %vm563, %v805, -inf
      %822 = vmax.xlane.f32.xlu0 %v821
      %v823 = vpop.xlane.xlu0 %822
      %v824 = vsel %vm563, %v806, -inf
      %825 = vmax.xlane.f32.xlu0 %v824
      %v826 = vpop.xlane.xlu0 %825
      %v827 = vsel %vm563, %v807, -inf
      %828 = vmax.xlane.f32.xlu0 %v827
      %v829 = vpop.xlane.xlu0 %828
      %v830 = vsel %vm563, %v808, -inf
      %831 = vmax.xlane.f32.xlu0 %v830
      %v832 = vpop.xlane.xlu0 %831
      %v833 = vsub.f32 %v801, %v811
      %v834 = vsub.f32 %v802, %v814
      %v835 = vsub.f32 %v803, %v817
      %v836 = vsub.f32 %v804, %v820
      %v837 = vsub.f32 %v805, %v823
      %v838 = vsub.f32 %v806, %v826
      %v839 = vsub.f32 %v807, %v829
      %v840 = vsub.f32 %v808, %v832
      %v841 = vmul.f32 %v833, 1.442695
      %v842 = vpow.pop %v841
      %v843 = vmul.f32 %v834, 1.442695
      %v844 = vpow.pop %v843
      %v845 = vmul.f32 %v835, 1.442695
      %v846 = vpow.pop %v845
      %v847 = vmul.f32 %v836, 1.442695
      %v848 = vpow.pop %v847
      %v849 = vmul.f32 %v837, 1.442695
      %v850 = vpow.pop %v849
      %v851 = vmul.f32 %v838, 1.442695
      %v852 = vpow.pop %v851
      %v853 = vmul.f32 %v839, 1.442695
      %v854 = vpow.pop %v853
      %v855 = vmul.f32 %v840, 1.442695
      %v856 = vpow.pop %v855
      %v857 = vsel %vm563, %v842, 0.0
      %858 = vadd.xlane.f32.xlu0 %v857
      %v859 = vpop.xlane.xlu0 %858
      %v860 = vsel %vm563, %v844, 0.0
      %861 = vadd.xlane.f32.xlu0 %v860
      %v862 = vpop.xlane.xlu0 %861
      %v863 = vsel %vm563, %v846, 0.0
      %864 = vadd.xlane.f32.xlu0 %v863
      %v865 = vpop.xlane.xlu0 %864
      %v866 = vsel %vm563, %v848, 0.0
      %867 = vadd.xlane.f32.xlu0 %v866
      %v868 = vpop.xlane.xlu0 %867
      %v869 = vsel %vm563, %v850, 0.0
      %870 = vadd.xlane.f32.xlu0 %v869
      %v871 = vpop.xlane.xlu0 %870
      %v872 = vsel %vm563, %v852, 0.0
      %873 = vadd.xlane.f32.xlu0 %v872
      %v874 = vpop.xlane.xlu0 %873
      %v875 = vsel %vm563, %v854, 0.0
      %876 = vadd.xlane.f32.xlu0 %v875
      %v877 = vpop.xlane.xlu0 %876
      %v878 = vsel %vm563, %v856, 0.0
      %879 = vadd.xlane.f32.xlu0 %v878
      %v880 = vpop.xlane.xlu0 %879
      %v881 = vrcp.pop %v859
      %v882 = vmul.f32 %v842, %v881
      %v883 = vrcp.pop %v862
      %v884 = vmul.f32 %v844, %v883
      %v885 = vrcp.pop %v865
      %v886 = vmul.f32 %v846, %v885
      %v887 = vrcp.pop %v868
      %v888 = vmul.f32 %v848, %v887
      %v889 = vrcp.pop %v871
      %v890 = vmul.f32 %v850, %v889
      %v891 = vrcp.pop %v874
      %v892 = vmul.f32 %v852, %v891
      %v893 = vrcp.pop %v877
      %v894 = vmul.f32 %v854, %v893
      %v895 = vrcp.pop %v880
      %v896 = vmul.f32 %v856, %v895
      %v897 = vpack.c.bf16 %v884, %v882
      %v898 = vpack.c.bf16 %v888, %v886
      %v899 = vpack.c.bf16 %v892, %v890
      %v900 = vpack.c.bf16 %v896, %v894
      %905 = vrot.lane.b32.xlu0 %v333, 120
      %v906 = vpop.permute.xlu0 %905
      %907 = vrot.lane.b32.xlu0 %v334, 120
      %v908 = vpop.permute.xlu0 %907
      %909 = vrot.lane.b32.xlu0 %v335, 120
      %v910 = vpop.permute.xlu0 %909
      %911 = vrot.lane.b32.xlu0 %v336, 120
      %v912 = vpop.permute.xlu0 %911
      %v918 = vsel %vm563, %v897, 0
      %v921 = vsel %vm563, %v898, 0
      %v924 = vsel %vm563, %v899, 0
      %v927 = vsel %vm563, %v900, 0
      %929 = vmatprep.subr.bf16.mxu0 0
      %930 = vmatpush1.bf16.msra.mxu0 0
      %931 = vmatprep.subr.bf16.mxu0 0
      %932 = vmatpush1.bf16.msra.mxu0 0
      %933 = vmatprep.subr.bf16.mxu0 0
      %934 = vmatpush1.bf16.msra.mxu0 0
      %935 = vmatprep.subr.bf16.mxu0 0
      %936 = vmatpush1.bf16.msra.mxu0 0
      %937 = vmatprep.subr.bf16.mxu0 0
      %938 = vmatpush1.bf16.msra.mxu0 %v912
      %939 = vmatprep.subr.bf16.mxu0 0
      %940 = vmatpush1.bf16.msra.mxu0 %v910
      %941 = vmatprep.subr.bf16.mxu0 0
      %942 = vmatpush1.bf16.msra.mxu0 %v908
      %943 = vmatprep.subr.bf16.mxu0 0
      %944 = vmatpush1.bf16.msra.mxu0 %v906
      %945 = vmatprep.subr.bf16.mxu0 0
      %946 = vmatpush2.bf16.msra.mxu0 0
      %947 = vmatprep.subr.bf16.mxu0 0
      %948 = vmatpush2.bf16.msra.mxu0 0
      %949 = vmatprep.subr.bf16.mxu0 0
      %950 = vmatpush2.bf16.msra.mxu0 0
      %951 = vmatprep.subr.bf16.mxu0 0
      %952 = vmatpush2.bf16.msra.mxu0 0
      %953 = vmatprep.subr.bf16.mxu0 0
      %954 = vmatpush2.bf16.msra.mxu0 0
      %955 = vmatprep.subr.bf16.mxu0 0
      %956 = vmatpush2.bf16.msra.mxu0 0
      %957 = vmatprep.subr.bf16.mxu0 0
      %958 = vmatpush2.bf16.msra.mxu0 0
      %959 = vmatprep.subr.bf16.mxu0 0
      %960 = vmatpush2.bf16.msra.mxu0 0
      %961 = vmatprep.mubr.bf16.mxu0 0
      %962 = vmatmul.mubr.bf16.gmra.mxu0 %v918
      %v963 = vpop.f32.mrf.mxu0
      %v964 = vadd.f32 0.0, %v963
      %v965 = vpop.f32.mrf.mxu0
      %v966 = vpop.f32.mrf.mxu0
      %v967 = vadd.f32 0.0, %v966
      %v968 = vpop.f32.mrf.mxu0
      %969 = vmatprep.mubr.bf16.mxu0 0
      %970 = vmatmul.mubr.bf16.gmra.mxu0 %v921
      %v971 = vpop.f32.mrf.mxu0
      %v972 = vadd.f32 0.0, %v971
      %v973 = vpop.f32.mrf.mxu0
      %v974 = vpop.f32.mrf.mxu0
      %v975 = vadd.f32 0.0, %v974
      %v976 = vpop.f32.mrf.mxu0
      %977 = vmatprep.mubr.bf16.mxu0 0
      %978 = vmatmul.mubr.bf16.gmra.mxu0 %v924
      %v979 = vpop.f32.mrf.mxu0
      %v980 = vadd.f32 0.0, %v979
      %v981 = vpop.f32.mrf.mxu0
      %v982 = vpop.f32.mrf.mxu0
      %v983 = vadd.f32 0.0, %v982
      %v984 = vpop.f32.mrf.mxu0
      %985 = vmatprep.mubr.bf16.mxu0 0
      %986 = vmatmul.mubr.bf16.gmra.mxu0 %v927
      %v987 = vpop.f32.mrf.mxu0
      %v988 = vadd.f32 0.0, %v987
      %v989 = vpop.f32.mrf.mxu0
      %v990 = vpop.f32.mrf.mxu0
      %v991 = vadd.f32 0.0, %v990
      %v992 = vpop.f32.mrf.mxu0
      %993 = vdwg.mxu0
      %994 = vset.pattern.permute.xlu0 2
      %995 = vperm.xlu0 %994, %v409
      %v996 = vpop.permute.xlu0 %995
      %998 = vset.pattern.permute.xlu0 2
      %999 = vperm.xlu0 %998, %v412
      %v1000 = vpop.permute.xlu0 %999
      %1002 = vset.pattern.permute.xlu0 2
      %1003 = vperm.xlu0 %1002, %v417
      %v1004 = vpop.permute.xlu0 %1003
      %1006 = vset.pattern.permute.xlu0 2
      %1007 = vperm.xlu0 %1006, %v420
      %v1008 = vpop.permute.xlu0 %1007
      %1010 = vset.pattern.permute.xlu0 2
      %1011 = vperm.xlu0 %1010, %v425
      %v1012 = vpop.permute.xlu0 %1011
      %1014 = vset.pattern.permute.xlu0 2
      %1015 = vperm.xlu0 %1014, %v428
      %v1016 = vpop.permute.xlu0 %1015
      %1018 = vset.pattern.permute.xlu0 2
      %1019 = vperm.xlu0 %1018, %v433
      %v1020 = vpop.permute.xlu0 %1019
      %1022 = vset.pattern.permute.xlu0 2
      %1023 = vperm.xlu0 %1022, %v436
      %v1024 = vpop.permute.xlu0 %1023
      %v1026 = vlaneseq
      %v1027 = vshrl.u32 %v1026, 7
      %v1028 = vsub.s32 6, %v1027
      %v1029 = vrot.slane %v455, %v1028
      %v1030 = vadd.f32 %v996, %v1029
      %v1031 = vadd.f32 %v1000, %v1029
      %v1032 = vadd.f32 %v1004, %v1029
      %v1033 = vadd.f32 %v1008, %v1029
      %v1034 = vadd.f32 %v1012, %v1029
      %v1035 = vadd.f32 %v1016, %v1029
      %v1036 = vadd.f32 %v1020, %v1029
      %v1037 = vadd.f32 %v1024, %v1029
      %vm1038 = vcmp.gt.f32.partialorder %v1030, 0.0
      %vm1039 = vcmp.gt.f32.partialorder %v1031, 0.0
      %vm1040 = vcmp.gt.f32.partialorder %v1032, 0.0
      %vm1041 = vcmp.gt.f32.partialorder %v1033, 0.0
      %vm1042 = vcmp.gt.f32.partialorder %v1034, 0.0
      %vm1043 = vcmp.gt.f32.partialorder %v1035, 0.0
      %vm1044 = vcmp.gt.f32.partialorder %v1036, 0.0
      %vm1045 = vcmp.gt.f32.partialorder %v1037, 0.0
      %v1046 = vmul.f32 %v1030, 0.2
      %v1047 = vmul.f32 %v1031, 0.2
      %v1048 = vmul.f32 %v1032, 0.2
      %v1049 = vmul.f32 %v1033, 0.2
      %v1050 = vmul.f32 %v1034, 0.2
      %v1051 = vmul.f32 %v1035, 0.2
      %v1052 = vmul.f32 %v1036, 0.2
      %v1053 = vmul.f32 %v1037, 0.2
      %v1054 = vsel %vm1038, %v1030, %v1046
      %v1055 = vsel %vm1039, %v1031, %v1047
      %v1056 = vsel %vm1040, %v1032, %v1048
      %v1057 = vsel %vm1041, %v1033, %v1049
      %v1058 = vsel %vm1042, %v1034, %v1050
      %v1059 = vsel %vm1043, %v1035, %v1051
      %v1060 = vsel %vm1044, %v1036, %v1052
      %v1061 = vsel %vm1045, %v1037, %v1053
      %v1062 = vsel %vm547, %v1054, -1e+30
      %v1063 = vsel %vm548, %v1055, -1e+30
      %v1064 = vsel %vm549, %v1056, -1e+30
      %v1065 = vsel %vm550, %v1057, -1e+30
      %v1066 = vsel %vm551, %v1058, -1e+30
      %v1067 = vsel %vm552, %v1059, -1e+30
      %v1068 = vsel %vm553, %v1060, -1e+30
      %v1069 = vsel %vm554, %v1061, -1e+30
      %v1070 = vsel %vm563, %v1062, -inf
      %1071 = vmax.xlane.f32.xlu0 %v1070
      %v1072 = vpop.xlane.xlu0 %1071
      %v1073 = vsel %vm563, %v1063, -inf
      %1074 = vmax.xlane.f32.xlu0 %v1073
      %v1075 = vpop.xlane.xlu0 %1074
      %v1076 = vsel %vm563, %v1064, -inf
      %1077 = vmax.xlane.f32.xlu0 %v1076
      %v1078 = vpop.xlane.xlu0 %1077
      %v1079 = vsel %vm563, %v1065, -inf
      %1080 = vmax.xlane.f32.xlu0 %v1079
      %v1081 = vpop.xlane.xlu0 %1080
      %v1082 = vsel %vm563, %v1066, -inf
      %1083 = vmax.xlane.f32.xlu0 %v1082
      %v1084 = vpop.xlane.xlu0 %1083
      %v1085 = vsel %vm563, %v1067, -inf
      %1086 = vmax.xlane.f32.xlu0 %v1085
      %v1087 = vpop.xlane.xlu0 %1086
      %v1088 = vsel %vm563, %v1068, -inf
      %1089 = vmax.xlane.f32.xlu0 %v1088
      %v1090 = vpop.xlane.xlu0 %1089
      %v1091 = vsel %vm563, %v1069, -inf
      %1092 = vmax.xlane.f32.xlu0 %v1091
      %v1093 = vpop.xlane.xlu0 %1092
      %v1094 = vsub.f32 %v1062, %v1072
      %v1095 = vsub.f32 %v1063, %v1075
      %v1096 = vsub.f32 %v1064, %v1078
      %v1097 = vsub.f32 %v1065, %v1081
      %v1098 = vsub.f32 %v1066, %v1084
      %v1099 = vsub.f32 %v1067, %v1087
      %v1100 = vsub.f32 %v1068, %v1090
      %v1101 = vsub.f32 %v1069, %v1093
      %v1102 = vmul.f32 %v1094, 1.442695
      %v1103 = vpow.pop %v1102
      %v1104 = vmul.f32 %v1095, 1.442695
      %v1105 = vpow.pop %v1104
      %v1106 = vmul.f32 %v1096, 1.442695
      %v1107 = vpow.pop %v1106
      %v1108 = vmul.f32 %v1097, 1.442695
      %v1109 = vpow.pop %v1108
      %v1110 = vmul.f32 %v1098, 1.442695
      %v1111 = vpow.pop %v1110
      %v1112 = vmul.f32 %v1099, 1.442695
      %v1113 = vpow.pop %v1112
      %v1114 = vmul.f32 %v1100, 1.442695
      %v1115 = vpow.pop %v1114
      %v1116 = vmul.f32 %v1101, 1.442695
      %v1117 = vpow.pop %v1116
      %v1118 = vsel %vm563, %v1103, 0.0
      %1119 = vadd.xlane.f32.xlu0 %v1118
      %v1120 = vpop.xlane.xlu0 %1119
      %v1121 = vsel %vm563, %v1105, 0.0
      %1122 = vadd.xlane.f32.xlu0 %v1121
      %v1123 = vpop.xlane.xlu0 %1122
      %v1124 = vsel %vm563, %v1107, 0.0
      %1125 = vadd.xlane.f32.xlu0 %v1124
      %v1126 = vpop.xlane.xlu0 %1125
      %v1127 = vsel %vm563, %v1109, 0.0
      %1128 = vadd.xlane.f32.xlu0 %v1127
      %v1129 = vpop.xlane.xlu0 %1128
      %v1130 = vsel %vm563, %v1111, 0.0
      %1131 = vadd.xlane.f32.xlu0 %v1130
      %v1132 = vpop.xlane.xlu0 %1131
      %v1133 = vsel %vm563, %v1113, 0.0
      %1134 = vadd.xlane.f32.xlu0 %v1133
      %v1135 = vpop.xlane.xlu0 %1134
      %v1136 = vsel %vm563, %v1115, 0.0
      %1137 = vadd.xlane.f32.xlu0 %v1136
      %v1138 = vpop.xlane.xlu0 %1137
      %v1139 = vsel %vm563, %v1117, 0.0
      %1140 = vadd.xlane.f32.xlu0 %v1139
      %v1141 = vpop.xlane.xlu0 %1140
      %v1142 = vrcp.pop %v1120
      %v1143 = vmul.f32 %v1103, %v1142
      %v1144 = vrcp.pop %v1123
      %v1145 = vmul.f32 %v1105, %v1144
      %v1146 = vrcp.pop %v1126
      %v1147 = vmul.f32 %v1107, %v1146
      %v1148 = vrcp.pop %v1129
      %v1149 = vmul.f32 %v1109, %v1148
      %v1150 = vrcp.pop %v1132
      %v1151 = vmul.f32 %v1111, %v1150
      %v1152 = vrcp.pop %v1135
      %v1153 = vmul.f32 %v1113, %v1152
      %v1154 = vrcp.pop %v1138
      %v1155 = vmul.f32 %v1115, %v1154
      %v1156 = vrcp.pop %v1141
      %v1157 = vmul.f32 %v1117, %v1156
      %v1158 = vpack.c.bf16 %v1145, %v1143
      %v1159 = vpack.c.bf16 %v1149, %v1147
      %v1160 = vpack.c.bf16 %v1153, %v1151
      %v1161 = vpack.c.bf16 %v1157, %v1155
      %1162 = vrot.lane.b32.xlu0 %v333, 112
      %v1163 = vpop.permute.xlu0 %1162
      %1164 = vrot.lane.b32.xlu0 %v334, 112
      %v1165 = vpop.permute.xlu0 %1164
      %1166 = vrot.lane.b32.xlu0 %v335, 112
      %v1167 = vpop.permute.xlu0 %1166
      %1168 = vrot.lane.b32.xlu0 %v336, 112
      %v1169 = vpop.permute.xlu0 %1168
      %v1175 = vsel %vm563, %v1158, 0
      %v1178 = vsel %vm563, %v1159, 0
      %v1181 = vsel %vm563, %v1160, 0
      %v1184 = vsel %vm563, %v1161, 0
      %1186 = vmatprep.subr.bf16.mxu0 0
      %1187 = vmatpush1.bf16.msra.mxu0 0
      %1188 = vmatprep.subr.bf16.mxu0 0
      %1189 = vmatpush1.bf16.msra.mxu0 0
      %1190 = vmatprep.subr.bf16.mxu0 0
      %1191 = vmatpush1.bf16.msra.mxu0 0
      %1192 = vmatprep.subr.bf16.mxu0 0
      %1193 = vmatpush1.bf16.msra.mxu0 0
      %1194 = vmatprep.subr.bf16.mxu0 0
      %1195 = vmatpush1.bf16.msra.mxu0 %v1169
      %1196 = vmatprep.subr.bf16.mxu0 0
      %1197 = vmatpush1.bf16.msra.mxu0 %v1167
      %1198 = vmatprep.subr.bf16.mxu0 0
      %1199 = vmatpush1.bf16.msra.mxu0 %v1165
      %1200 = vmatprep.subr.bf16.mxu0 0
      %1201 = vmatpush1.bf16.msra.mxu0 %v1163
      %1202 = vmatprep.subr.bf16.mxu0 0
      %1203 = vmatpush2.bf16.msra.mxu0 0
      %1204 = vmatprep.subr.bf16.mxu0 0
      %1205 = vmatpush2.bf16.msra.mxu0 0
      %1206 = vmatprep.subr.bf16.mxu0 0
      %1207 = vmatpush2.bf16.msra.mxu0 0
      %1208 = vmatprep.subr.bf16.mxu0 0
      %1209 = vmatpush2.bf16.msra.mxu0 0
      %1210 = vmatprep.subr.bf16.mxu0 0
      %1211 = vmatpush2.bf16.msra.mxu0 0
      %1212 = vmatprep.subr.bf16.mxu0 0
      %1213 = vmatpush2.bf16.msra.mxu0 0
      %1214 = vmatprep.subr.bf16.mxu0 0
      %1215 = vmatpush2.bf16.msra.mxu0 0
      %1216 = vmatprep.subr.bf16.mxu0 0
      %1217 = vmatpush2.bf16.msra.mxu0 0
      %1218 = vmatprep.mubr.bf16.mxu0 0
      %1219 = vmatmul.mubr.bf16.gmra.mxu0 %v1175
      %v1220 = vpop.f32.mrf.mxu0
      %v1221 = vadd.f32 0.0, %v1220
      %v1222 = vpop.f32.mrf.mxu0
      %v1223 = vpop.f32.mrf.mxu0
      %v1224 = vadd.f32 0.0, %v1223
      %v1225 = vpop.f32.mrf.mxu0
      %1226 = vmatprep.mubr.bf16.mxu0 0
      %1227 = vmatmul.mubr.bf16.gmra.mxu0 %v1178
      %v1228 = vpop.f32.mrf.mxu0
      %v1229 = vadd.f32 0.0, %v1228
      %v1230 = vpop.f32.mrf.mxu0
      %v1231 = vpop.f32.mrf.mxu0
      %v1232 = vadd.f32 0.0, %v1231
      %v1233 = vpop.f32.mrf.mxu0
      %1234 = vmatprep.mubr.bf16.mxu0 0
      %1235 = vmatmul.mubr.bf16.gmra.mxu0 %v1181
      %v1236 = vpop.f32.mrf.mxu0
      %v1237 = vadd.f32 0.0, %v1236
      %v1238 = vpop.f32.mrf.mxu0
      %v1239 = vpop.f32.mrf.mxu0
      %v1240 = vadd.f32 0.0, %v1239
      %v1241 = vpop.f32.mrf.mxu0
      %1242 = vmatprep.mubr.bf16.mxu0 0
      %1243 = vmatmul.mubr.bf16.gmra.mxu0 %v1184
      %v1244 = vpop.f32.mrf.mxu0
      %v1245 = vadd.f32 0.0, %v1244
      %v1246 = vpop.f32.mrf.mxu0
      %v1247 = vpop.f32.mrf.mxu0
      %v1248 = vadd.f32 0.0, %v1247
      %v1249 = vpop.f32.mrf.mxu0
      %1250 = vdwg.mxu0
      %1251 = vset.pattern.permute.xlu0 3
      %1252 = vperm.xlu0 %1251, %v409
      %v1253 = vpop.permute.xlu0 %1252
      %1255 = vset.pattern.permute.xlu0 3
      %1256 = vperm.xlu0 %1255, %v412
      %v1257 = vpop.permute.xlu0 %1256
      %1259 = vset.pattern.permute.xlu0 3
      %1260 = vperm.xlu0 %1259, %v417
      %v1261 = vpop.permute.xlu0 %1260
      %1263 = vset.pattern.permute.xlu0 3
      %1264 = vperm.xlu0 %1263, %v420
      %v1265 = vpop.permute.xlu0 %1264
      %1267 = vset.pattern.permute.xlu0 3
      %1268 = vperm.xlu0 %1267, %v425
      %v1269 = vpop.permute.xlu0 %1268
      %1271 = vset.pattern.permute.xlu0 3
      %1272 = vperm.xlu0 %1271, %v428
      %v1273 = vpop.permute.xlu0 %1272
      %1275 = vset.pattern.permute.xlu0 3
      %1276 = vperm.xlu0 %1275, %v433
      %v1277 = vpop.permute.xlu0 %1276
      %1279 = vset.pattern.permute.xlu0 3
      %1280 = vperm.xlu0 %1279, %v436
      %v1281 = vpop.permute.xlu0 %1280
      %v1283 = vlaneseq
      %v1284 = vshrl.u32 %v1283, 7
      %v1285 = vsub.s32 7, %v1284
      %v1286 = vrot.slane %v455, %v1285
      %v1287 = vadd.f32 %v1253, %v1286
      %v1288 = vadd.f32 %v1257, %v1286
      %v1289 = vadd.f32 %v1261, %v1286
      %v1290 = vadd.f32 %v1265, %v1286
      %v1291 = vadd.f32 %v1269, %v1286
      %v1292 = vadd.f32 %v1273, %v1286
      %v1293 = vadd.f32 %v1277, %v1286
      %v1294 = vadd.f32 %v1281, %v1286
      %vm1295 = vcmp.gt.f32.partialorder %v1287, 0.0
      %vm1296 = vcmp.gt.f32.partialorder %v1288, 0.0
      %vm1297 = vcmp.gt.f32.partialorder %v1289, 0.0
      %vm1298 = vcmp.gt.f32.partialorder %v1290, 0.0
      %vm1299 = vcmp.gt.f32.partialorder %v1291, 0.0
      %vm1300 = vcmp.gt.f32.partialorder %v1292, 0.0
      %vm1301 = vcmp.gt.f32.partialorder %v1293, 0.0
      %vm1302 = vcmp.gt.f32.partialorder %v1294, 0.0
      %v1303 = vmul.f32 %v1287, 0.2
      %v1304 = vmul.f32 %v1288, 0.2
      %v1305 = vmul.f32 %v1289, 0.2
      %v1306 = vmul.f32 %v1290, 0.2
      %v1307 = vmul.f32 %v1291, 0.2
      %v1308 = vmul.f32 %v1292, 0.2
      %v1309 = vmul.f32 %v1293, 0.2
      %v1310 = vmul.f32 %v1294, 0.2
      %v1311 = vsel %vm1295, %v1287, %v1303
      %v1312 = vsel %vm1296, %v1288, %v1304
      %v1313 = vsel %vm1297, %v1289, %v1305
      %v1314 = vsel %vm1298, %v1290, %v1306
      %v1315 = vsel %vm1299, %v1291, %v1307
      %v1316 = vsel %vm1300, %v1292, %v1308
      %v1317 = vsel %vm1301, %v1293, %v1309
      %v1318 = vsel %vm1302, %v1294, %v1310
      %v1319 = vsel %vm547, %v1311, -1e+30
      %v1320 = vsel %vm548, %v1312, -1e+30
      %v1321 = vsel %vm549, %v1313, -1e+30
      %v1322 = vsel %vm550, %v1314, -1e+30
      %v1323 = vsel %vm551, %v1315, -1e+30
      %v1324 = vsel %vm552, %v1316, -1e+30
      %v1325 = vsel %vm553, %v1317, -1e+30
      %v1326 = vsel %vm554, %v1318, -1e+30
      %v1327 = vsel %vm563, %v1319, -inf
      %1328 = vmax.xlane.f32.xlu0 %v1327
      %v1329 = vpop.xlane.xlu0 %1328
      %v1330 = vsel %vm563, %v1320, -inf
      %1331 = vmax.xlane.f32.xlu0 %v1330
      %v1332 = vpop.xlane.xlu0 %1331
      %v1333 = vsel %vm563, %v1321, -inf
      %1334 = vmax.xlane.f32.xlu0 %v1333
      %v1335 = vpop.xlane.xlu0 %1334
      %v1336 = vsel %vm563, %v1322, -inf
      %1337 = vmax.xlane.f32.xlu0 %v1336
      %v1338 = vpop.xlane.xlu0 %1337
      %v1339 = vsel %vm563, %v1323, -inf
      %1340 = vmax.xlane.f32.xlu0 %v1339
      %v1341 = vpop.xlane.xlu0 %1340
      %v1342 = vsel %vm563, %v1324, -inf
      %1343 = vmax.xlane.f32.xlu0 %v1342
      %v1344 = vpop.xlane.xlu0 %1343
      %v1345 = vsel %vm563, %v1325, -inf
      %1346 = vmax.xlane.f32.xlu0 %v1345
      %v1347 = vpop.xlane.xlu0 %1346
      %v1348 = vsel %vm563, %v1326, -inf
      %1349 = vmax.xlane.f32.xlu0 %v1348
      %v1350 = vpop.xlane.xlu0 %1349
      %v1351 = vsub.f32 %v1319, %v1329
      %v1352 = vsub.f32 %v1320, %v1332
      %v1353 = vsub.f32 %v1321, %v1335
      %v1354 = vsub.f32 %v1322, %v1338
      %v1355 = vsub.f32 %v1323, %v1341
      %v1356 = vsub.f32 %v1324, %v1344
      %v1357 = vsub.f32 %v1325, %v1347
      %v1358 = vsub.f32 %v1326, %v1350
      %v1359 = vmul.f32 %v1351, 1.442695
      %v1360 = vpow.pop %v1359
      %v1361 = vmul.f32 %v1352, 1.442695
      %v1362 = vpow.pop %v1361
      %v1363 = vmul.f32 %v1353, 1.442695
      %v1364 = vpow.pop %v1363
      %v1365 = vmul.f32 %v1354, 1.442695
      %v1366 = vpow.pop %v1365
      %v1367 = vmul.f32 %v1355, 1.442695
      %v1368 = vpow.pop %v1367
      %v1369 = vmul.f32 %v1356, 1.442695
      %v1370 = vpow.pop %v1369
      %v1371 = vmul.f32 %v1357, 1.442695
      %v1372 = vpow.pop %v1371
      %v1373 = vmul.f32 %v1358, 1.442695
      %v1374 = vpow.pop %v1373
      %v1375 = vsel %vm563, %v1360, 0.0
      %1376 = vadd.xlane.f32.xlu0 %v1375
      %v1377 = vpop.xlane.xlu0 %1376
      %v1378 = vsel %vm563, %v1362, 0.0
      %1379 = vadd.xlane.f32.xlu0 %v1378
      %v1380 = vpop.xlane.xlu0 %1379
      %v1381 = vsel %vm563, %v1364, 0.0
      %1382 = vadd.xlane.f32.xlu0 %v1381
      %v1383 = vpop.xlane.xlu0 %1382
      %v1384 = vsel %vm563, %v1366, 0.0
      %1385 = vadd.xlane.f32.xlu0 %v1384
      %v1386 = vpop.xlane.xlu0 %1385
      %v1387 = vsel %vm563, %v1368, 0.0
      %1388 = vadd.xlane.f32.xlu0 %v1387
      %v1389 = vpop.xlane.xlu0 %1388
      %v1390 = vsel %vm563, %v1370, 0.0
      %1391 = vadd.xlane.f32.xlu0 %v1390
      %v1392 = vpop.xlane.xlu0 %1391
      %v1393 = vsel %vm563, %v1372, 0.0
      %1394 = vadd.xlane.f32.xlu0 %v1393
      %v1395 = vpop.xlane.xlu0 %1394
      %v1396 = vsel %vm563, %v1374, 0.0
      %1397 = vadd.xlane.f32.xlu0 %v1396
      %v1398 = vpop.xlane.xlu0 %1397
      %v1399 = vrcp.pop %v1377
      %v1400 = vmul.f32 %v1360, %v1399
      %v1401 = vrcp.pop %v1380
      %v1402 = vmul.f32 %v1362, %v1401
      %v1403 = vrcp.pop %v1383
      %v1404 = vmul.f32 %v1364, %v1403
      %v1405 = vrcp.pop %v1386
      %v1406 = vmul.f32 %v1366, %v1405
      %v1407 = vrcp.pop %v1389
      %v1408 = vmul.f32 %v1368, %v1407
      %v1409 = vrcp.pop %v1392
      %v1410 = vmul.f32 %v1370, %v1409
      %v1411 = vrcp.pop %v1395
      %v1412 = vmul.f32 %v1372, %v1411
      %v1413 = vrcp.pop %v1398
      %v1414 = vmul.f32 %v1374, %v1413
      %v1415 = vpack.c.bf16 %v1402, %v1400
      %v1416 = vpack.c.bf16 %v1406, %v1404
      %v1417 = vpack.c.bf16 %v1410, %v1408
      %v1418 = vpack.c.bf16 %v1414, %v1412
      %1419 = vrot.lane.b32.xlu0 %v333, 104
      %v1420 = vpop.permute.xlu0 %1419
      %1421 = vrot.lane.b32.xlu0 %v334, 104
      %v1422 = vpop.permute.xlu0 %1421
      %1423 = vrot.lane.b32.xlu0 %v335, 104
      %v1424 = vpop.permute.xlu0 %1423
      %1425 = vrot.lane.b32.xlu0 %v336, 104
      %v1426 = vpop.permute.xlu0 %1425
      %v1432 = vsel %vm563, %v1415, 0
      %v1435 = vsel %vm563, %v1416, 0
      %v1438 = vsel %vm563, %v1417, 0
      %v1441 = vsel %vm563, %v1418, 0
      %1443 = vmatprep.subr.bf16.mxu0 0
      %1444 = vmatpush1.bf16.msra.mxu0 0
      %1445 = vmatprep.subr.bf16.mxu0 0
      %1446 = vmatpush1.bf16.msra.mxu0 0
      %1447 = vmatprep.subr.bf16.mxu0 0
      %1448 = vmatpush1.bf16.msra.mxu0 0
      %1449 = vmatprep.subr.bf16.mxu0 0
      %1450 = vmatpush1.bf16.msra.mxu0 0
      %1451 = vmatprep.subr.bf16.mxu0 0
      %1452 = vmatpush1.bf16.msra.mxu0 %v1426
      %1453 = vmatprep.subr.bf16.mxu0 0
      %1454 = vmatpush1.bf16.msra.mxu0 %v1424
      %1455 = vmatprep.subr.bf16.mxu0 0
      %1456 = vmatpush1.bf16.msra.mxu0 %v1422
      %1457 = vmatprep.subr.bf16.mxu0 0
      %1458 = vmatpush1.bf16.msra.mxu0 %v1420
      %1459 = vmatprep.subr.bf16.mxu0 0
      %1460 = vmatpush2.bf16.msra.mxu0 0
      %1461 = vmatprep.subr.bf16.mxu0 0
      %1462 = vmatpush2.bf16.msra.mxu0 0
      %1463 = vmatprep.subr.bf16.mxu0 0
      %1464 = vmatpush2.bf16.msra.mxu0 0
      %1465 = vmatprep.subr.bf16.mxu0 0
      %1466 = vmatpush2.bf16.msra.mxu0 0
      %1467 = vmatprep.subr.bf16.mxu0 0
      %1468 = vmatpush2.bf16.msra.mxu0 0
      %1469 = vmatprep.subr.bf16.mxu0 0
      %1470 = vmatpush2.bf16.msra.mxu0 0
      %1471 = vmatprep.subr.bf16.mxu0 0
      %1472 = vmatpush2.bf16.msra.mxu0 0
      %1473 = vmatprep.subr.bf16.mxu0 0
      %1474 = vmatpush2.bf16.msra.mxu0 0
      %1475 = vmatprep.mubr.bf16.mxu0 0
      %1476 = vmatmul.mubr.bf16.gmra.mxu0 %v1432
      %v1477 = vpop.f32.mrf.mxu0
      %v1478 = vadd.f32 0.0, %v1477
      %v1479 = vpop.f32.mrf.mxu0
      %v1480 = vpop.f32.mrf.mxu0
      %v1481 = vadd.f32 0.0, %v1480
      %v1482 = vpop.f32.mrf.mxu0
      %1483 = vmatprep.mubr.bf16.mxu0 0
      %1484 = vmatmul.mubr.bf16.gmra.mxu0 %v1435
      %v1485 = vpop.f32.mrf.mxu0
      %v1486 = vadd.f32 0.0, %v1485
      %v1487 = vpop.f32.mrf.mxu0
      %v1488 = vpop.f32.mrf.mxu0
      %v1489 = vadd.f32 0.0, %v1488
      %v1490 = vpop.f32.mrf.mxu0
      %1491 = vmatprep.mubr.bf16.mxu0 0
      %1492 = vmatmul.mubr.bf16.gmra.mxu0 %v1438
      %v1493 = vpop.f32.mrf.mxu0
      %v1494 = vadd.f32 0.0, %v1493
      %v1495 = vpop.f32.mrf.mxu0
      %v1496 = vpop.f32.mrf.mxu0
      %v1497 = vadd.f32 0.0, %v1496
      %v1498 = vpop.f32.mrf.mxu0
      %1499 = vmatprep.mubr.bf16.mxu0 0
      %1500 = vmatmul.mubr.bf16.gmra.mxu0 %v1441
      %v1501 = vpop.f32.mrf.mxu0
      %v1502 = vadd.f32 0.0, %v1501
      %v1503 = vpop.f32.mrf.mxu0
      %v1504 = vpop.f32.mrf.mxu0
      %v1505 = vadd.f32 0.0, %v1504
      %v1506 = vpop.f32.mrf.mxu0
      %1507 = vdwg.mxu0
      %1516 = vrot.lane.b32.xlu0 %v964, 8
      %v1517 = vpop.permute.xlu0 %1516
      %1518 = vrot.lane.b32.xlu0 %v967, 8
      %v1519 = vpop.permute.xlu0 %1518
      %1520 = vrot.lane.b32.xlu0 %v972, 8
      %v1521 = vpop.permute.xlu0 %1520
      %1522 = vrot.lane.b32.xlu0 %v975, 8
      %v1523 = vpop.permute.xlu0 %1522
      %1524 = vrot.lane.b32.xlu0 %v980, 8
      %v1525 = vpop.permute.xlu0 %1524
      %1526 = vrot.lane.b32.xlu0 %v983, 8
      %v1527 = vpop.permute.xlu0 %1526
      %1528 = vrot.lane.b32.xlu0 %v988, 8
      %v1529 = vpop.permute.xlu0 %1528
      %1530 = vrot.lane.b32.xlu0 %v991, 8
      %v1531 = vpop.permute.xlu0 %1530
      %1548 = vrot.lane.b32.xlu0 %v1221, 16
      %v1549 = vpop.permute.xlu0 %1548
      %1550 = vrot.lane.b32.xlu0 %v1224, 16
      %v1551 = vpop.permute.xlu0 %1550
      %1552 = vrot.lane.b32.xlu0 %v1229, 16
      %v1553 = vpop.permute.xlu0 %1552
      %1554 = vrot.lane.b32.xlu0 %v1232, 16
      %v1555 = vpop.permute.xlu0 %1554
      %1556 = vrot.lane.b32.xlu0 %v1237, 16
      %v1557 = vpop.permute.xlu0 %1556
      %1558 = vrot.lane.b32.xlu0 %v1240, 16
      %v1559 = vpop.permute.xlu0 %1558
      %1560 = vrot.lane.b32.xlu0 %v1245, 16
      %v1561 = vpop.permute.xlu0 %1560
      %1562 = vrot.lane.b32.xlu0 %v1248, 16
      %v1563 = vpop.permute.xlu0 %1562
      %1580 = vrot.lane.b32.xlu0 %v1478, 24
      %v1581 = vpop.permute.xlu0 %1580
      %1582 = vrot.lane.b32.xlu0 %v1481, 24
      %v1583 = vpop.permute.xlu0 %1582
      %1584 = vrot.lane.b32.xlu0 %v1486, 24
      %v1585 = vpop.permute.xlu0 %1584
      %1586 = vrot.lane.b32.xlu0 %v1489, 24
      %v1587 = vpop.permute.xlu0 %1586
      %1588 = vrot.lane.b32.xlu0 %v1494, 24
      %v1589 = vpop.permute.xlu0 %1588
      %1590 = vrot.lane.b32.xlu0 %v1497, 24
      %v1591 = vpop.permute.xlu0 %1590
      %1592 = vrot.lane.b32.xlu0 %v1502, 24
      %v1593 = vpop.permute.xlu0 %1592
      %1594 = vrot.lane.b32.xlu0 %v1505, 24
      %v1595 = vpop.permute.xlu0 %1594
      %vm1604 = vcmask 64512
      %v1605 = vsel %vm1604, %v703, %v1517
      %v1606 = vsel %vm1604, %v706, %v1519
      %v1607 = vsel %vm1604, %v711, %v1521
      %v1608 = vsel %vm1604, %v714, %v1523
      %v1609 = vsel %vm1604, %v719, %v1525
      %v1610 = vsel %vm1604, %v722, %v1527
      %v1611 = vsel %vm1604, %v727, %v1529
      %v1612 = vsel %vm1604, %v730, %v1531
      %v1613 = vsel %vm255, %v1605, %v1549
      %v1614 = vsel %vm255, %v1606, %v1551
      %v1615 = vsel %vm255, %v1607, %v1553
      %v1616 = vsel %vm255, %v1608, %v1555
      %v1617 = vsel %vm255, %v1609, %v1557
      %v1618 = vsel %vm255, %v1610, %v1559
      %v1619 = vsel %vm255, %v1611, %v1561
      %v1620 = vsel %vm255, %v1612, %v1563
      %vm1621 = vcmask 195584
      %v1622 = vsel %vm1621, %v1613, %v1581
      %v1623 = vsel %vm1621, %v1614, %v1583
      %v1624 = vsel %vm1621, %v1615, %v1585
      %v1625 = vsel %vm1621, %v1616, %v1587
      %v1626 = vsel %vm1621, %v1617, %v1589
      %v1627 = vsel %vm1621, %v1618, %v1591
      %v1628 = vsel %vm1621, %v1619, %v1593
      %v1629 = vsel %vm1621, %v1620, %v1595
      %1638 = vrot.lane.b32.xlu0 %v303, 96
      %v1639 = vpop.permute.xlu0 %1638
      %1640 = vrot.lane.b32.xlu0 %v306, 96
      %v1641 = vpop.permute.xlu0 %1640
      %1642 = vrot.lane.b32.xlu0 %v311, 96
      %v1643 = vpop.permute.xlu0 %1642
      %1644 = vrot.lane.b32.xlu0 %v314, 96
      %v1645 = vpop.permute.xlu0 %1644
      %1646 = vrot.lane.b32.xlu0 %v319, 96
      %v1647 = vpop.permute.xlu0 %1646
      %1648 = vrot.lane.b32.xlu0 %v322, 96
      %v1649 = vpop.permute.xlu0 %1648
      %1650 = vrot.lane.b32.xlu0 %v327, 96
      %v1651 = vpop.permute.xlu0 %1650
      %1652 = vrot.lane.b32.xlu0 %v330, 96
      %v1653 = vpop.permute.xlu0 %1652
      %v1662 = vadd.f32 %v1622, %v1639
      %v1663 = vadd.f32 %v1623, %v1641
      %v1664 = vadd.f32 %v1624, %v1643
      %v1665 = vadd.f32 %v1625, %v1645
      %v1666 = vadd.f32 %v1626, %v1647
      %v1667 = vadd.f32 %v1627, %v1649
      %v1668 = vadd.f32 %v1628, %v1651
      %v1669 = vadd.f32 %v1629, %v1653
      %v1670 = vmax.f32 %v1662, 0.0
      %v1671 = vmax.f32 %v1663, 0.0
      %v1672 = vmax.f32 %v1664, 0.0
      %v1673 = vmax.f32 %v1665, 0.0
      %v1674 = vmax.f32 %v1666, 0.0
      %v1675 = vmax.f32 %v1667, 0.0
      %v1676 = vmax.f32 %v1668, 0.0
      %v1677 = vmax.f32 %v1669, 0.0
      %1678 = vst.msk [vmem:[%s217] sm:$0xff] %vm361, %v1670
      %1679 = vst.msk [vmem:[%s217 + $0x8] sm:$0xff] %vm361, %v1671
      %1680 = vst.msk [vmem:[%s217 + $0x10] sm:$0xff] %vm361, %v1672
      %1681 = vst.msk [vmem:[%s217 + $0x18] sm:$0xff] %vm361, %v1673
      %1682 = vst.msk [vmem:[%s217 + $0x20] sm:$0xff] %vm361, %v1674
      %1683 = vst.msk [vmem:[%s217 + $0x28] sm:$0xff] %vm361, %v1675
      %1684 = vst.msk [vmem:[%s217 + $0x30] sm:$0xff] %vm361, %v1676
      %1685 = vst.msk [vmem:[%s217 + $0x38] sm:$0xff] %vm361, %v1677
      %p1686 = scmp.lt.s32.totalorder %s15, 1
      %s1687 = scalar_select %p1686, %s15, 1
      %s1688 = smul.addr %s1687, 8
      %s1689 = smul.addr %s1688, 8
      %s1690 = scalar_lea.vmem %s4, %s1689
      // Predicated region
      $region37: #{gmae_forward.7} parent=35 // pred_check
        %p1691 = pneg %p127
      $region38: #{gmae_forward.7} parent=35 // pred_check_branch
        %1693 = sbr.rel (%p1691) target = $region40
      $region39: #{gmae_forward.7} parent=35 // pred_region
        _
      $region40: #{gmae_forward.7} parent=35 // pred_fallthru
        _
    $region36: #{gmae_forward.7} parent=5 // pred_fallthru
      _
    %p1694 = scmp.le.s32.totalorder 2, %s10
    // Predicated region
    $region41: #{gmae_forward.7} parent=5 // pred_check
      %p1695 = pneg %p1694
    $region42: #{gmae_forward.7} parent=5 // pred_check_branch
      %1697 = sbr.rel (%p1695) target = $region44
    $region43: #{gmae_forward.7} parent=5 // pred_region
      %s1698 = ssub.s32 %s10, 2
      // Predicated region
      $region45: #{gmae_forward.7} parent=43 // pred_check
        %p1699 = pneg %p133
      $region46: #{gmae_forward.7} parent=43 // pred_check_branch
        %1701 = sbr.rel (%p1699) target = $region48
      $region47: #{gmae_forward.7} parent=43 // pred_region
        %p1702 = scmp.lt.s32.totalorder %s16, 1
        %s1703 = scalar_select %p1702, %s16, 1
        %s1704 = smul.addr %s1703, 8
        %s1705 = smul.addr %s1704, 8
        %s1706 = scalar_lea.vmem %s4, %s1705
      $region48: #{gmae_forward.7} parent=43 // pred_fallthru
        _
    $region44: #{gmae_forward.7} parent=5 // pred_fallthru
      _
  $region6: #{gmae_forward.7} parent=0 // loop_footer
    %s14 = sadd.s32 1, %s10
  $region7: #{gmae_forward.7} parent=0 // loop_footer_branch
    %9 = sbr.rel target = $region3
  $region8: #{gmae_forward.7} parent=0 // loop_exit
    _

// kernel: gmae_forward.11
$region0: #{gmae_forward.11}
  #allocation0 [shape = 'u32[]', space=smem, size = 0x4, offset = 0x4, fixed_abs, tag = 'smem constant byte address 0x4 - core index']
  #allocation1 [shape = 'u32[144,128]{1,0:T(1,128)}', space=vmem, size = 0x12000, scoped, tag = 'internal scratch']
  %s0 = inlined_call_operand.vmem [shape: bf16[64,64], index: 0, kind: input, shape index: {}]
  %s1 = inlined_call_operand.vmem [shape: bf16[64,32], index: 1, kind: input, shape index: {}]
  %s2 = inlined_call_operand.vmem [shape: f32[1,32], index: 2, kind: input, shape index: {}]
  %s3 = inlined_call_operand.vmem [shape: f32[32,2], index: 3, kind: input, shape index: {}]
  %s4 = inlined_call_operand.vmem [shape: f32[1,2], index: 4, kind: input, shape index: {}]
  %s5 = inlined_call_operand.hbm [shape: f32[1,1], index: 5, kind: output, shape index: {}]
  %s6 = sld [smem:[#allocation0]]
  $region30: #{gmae_forward.11} parent=0
    _
  %s8 = ssub.s32 1, %s6
  %s9 = scalar_select 0, %s8, %s6
  $region1: #{gmae_forward.11} parent=0
    #allocation2 [shape = 'u8[512]{0}', space=vmem, size = 0x400, scoped, tag = 'output window, operand 0, single buffered']
    #allocation3 [shape = 's32[1]{0}', space=sflag, size = 0x4, scoped, tag = 'scoped memory for gmae_forward.11']
    %10 = vsyncpa [#allocation3], 0
    // Predicated region
    $region2: #{gmae_forward.11} parent=1 // pred_check
      _
    $region3: #{gmae_forward.11} parent=1 // pred_check_branch
      %12 = sbr.rel (0) target = $region5
    $region4: #{gmae_forward.11} parent=1 // pred_region
      _
    $region5: #{gmae_forward.11} parent=1 // pred_fallthru
      _
    // Predicated region
    $region6: #{gmae_forward.11} parent=1 // pred_check
      _
    $region7: #{gmae_forward.11} parent=1 // pred_check_branch
      %14 = sbr.rel (0) target = $region9
    $region8: #{gmae_forward.11} parent=1 // pred_region
      _
    $region9: #{gmae_forward.11} parent=1 // pred_fallthru
      _
    // Predicated region
    $region10: #{gmae_forward.11} parent=1 // pred_check
      _
    $region11: #{gmae_forward.11} parent=1 // pred_check_branch
      %16 = sbr.rel (0) target = $region13
    $region12: #{gmae_forward.11} parent=1 // pred_region
      _
    $region13: #{gmae_forward.11} parent=1 // pred_fallthru
      _
    // Predicated region
    $region14: #{gmae_forward.11} parent=1 // pred_check
      _
    $region15: #{gmae_forward.11} parent=1 // pred_check_branch
      %18 = sbr.rel (0) target = $region17
    $region16: #{gmae_forward.11} parent=1 // pred_region
      _
    $region17: #{gmae_forward.11} parent=1 // pred_fallthru
      _
    // Predicated region
    $region18: #{gmae_forward.11} parent=1 // pred_check
      _
    $region19: #{gmae_forward.11} parent=1 // pred_check_branch
      %20 = sbr.rel (0) target = $region21
    $region20: #{gmae_forward.11} parent=1 // pred_region
      _
    $region21: #{gmae_forward.11} parent=1 // pred_fallthru
      _
    %v22 = vld [vmem:[%s0] sm:$0xf]
    %v23 = vld [vmem:[%s0 + $0x4] sm:$0xf]
    %v24 = vld [vmem:[%s0 + $0x8] sm:$0xf]
    %v25 = vld [vmem:[%s0 + $0xc] sm:$0xf]
    %v26 = vld [vmem:[%s0 + $0x10] sm:$0xf]
    %v27 = vld [vmem:[%s0 + $0x14] sm:$0xf]
    %v28 = vld [vmem:[%s0 + $0x18] sm:$0xf]
    %v29 = vld [vmem:[%s0 + $0x1c] sm:$0xf]
    %v30 = vld [vmem:[%s1] sm:$0xf]
    %v31 = vld [vmem:[%s1 + $0x4] sm:$0xf]
    %v32 = vld [vmem:[%s1 + $0x8] sm:$0xf]
    %v33 = vld [vmem:[%s1 + $0xc] sm:$0xf]
    %v34 = vld [vmem:[%s1 + $0x10] sm:$0xf]
    %v35 = vld [vmem:[%s1 + $0x14] sm:$0xf]
    %v36 = vld [vmem:[%s1 + $0x18] sm:$0xf]
    %v37 = vld [vmem:[%s1 + $0x1c] sm:$0xf]
    %v38 = vld [vmem:[%s2] sm:$0x1]
    %v40 = vlaneseq
    %v41 = vshrl.u32 %v40, 7
    %v42 = vsub.s32 0, %v41
    %v43 = vrot.slane %v38, %v42
    %v53 = vunpack.c.l.b16 %v22
    %v54 = vunpack.c.l.b16 %v23
    %v55 = vunpack.c.l.b16 %v24
    %v56 = vunpack.c.l.b16 %v25
    %v57 = vunpack.c.l.b16 %v26
    %v58 = vunpack.c.l.b16 %v27
    %v59 = vunpack.c.l.b16 %v28
    %v60 = vunpack.c.l.b16 %v29
    %v61 = vpack.c.b16 %v54, %v53
    %v62 = vpack.c.b16 %v56, %v55
    %v63 = vpack.c.b16 %v58, %v57
    %v64 = vpack.c.b16 %v60, %v59
    %v73 = vunpack.c.l.b16 %v30
    %v74 = vunpack.c.l.b16 %v31
    %v75 = vunpack.c.l.b16 %v32
    %v76 = vunpack.c.l.b16 %v33
    %v77 = vunpack.c.l.b16 %v34
    %v78 = vunpack.c.l.b16 %v35
    %v79 = vunpack.c.l.b16 %v36
    %v80 = vunpack.c.l.b16 %v37
    %v81 = vpack.c.b16 %v74, %v73
    %v82 = vpack.c.b16 %v76, %v75
    %v83 = vpack.c.b16 %v78, %v77
    %v84 = vpack.c.b16 %v80, %v79
    %vm89 = vcmask 523264
    %v91 = vsel %vm89, %v61, 0
    %v94 = vsel %vm89, %v62, 0
    %v97 = vsel %vm89, %v63, 0
    %v100 = vsel %vm89, %v64, 0
    %102 = vmatprep.subr.bf16.mxu0 0
    %103 = vmatpush1.bf16.msra.mxu0 0
    %104 = vmatprep.subr.bf16.mxu0 0
    %105 = vmatpush1.bf16.msra.mxu0 0
    %106 = vmatprep.subr.bf16.mxu0 0
    %107 = vmatpush1.bf16.msra.mxu0 0
    %108 = vmatprep.subr.bf16.mxu0 0
    %109 = vmatpush1.bf16.msra.mxu0 0
    %110 = vmatprep.subr.bf16.mxu0 0
    %111 = vmatpush1.bf16.msra.mxu0 %v84
    %112 = vmatprep.subr.bf16.mxu0 0
    %113 = vmatpush1.bf16.msra.mxu0 %v83
    %114 = vmatprep.subr.bf16.mxu0 0
    %115 = vmatpush1.bf16.msra.mxu0 %v82
    %116 = vmatprep.subr.bf16.mxu0 0
    %117 = vmatpush1.bf16.msra.mxu0 %v81
    %118 = vmatprep.subr.bf16.mxu0 0
    %119 = vmatpush2.bf16.msra.mxu0 0
    %120 = vmatprep.subr.bf16.mxu0 0
    %121 = vmatpush2.bf16.msra.mxu0 0
    %122 = vmatprep.subr.bf16.mxu0 0
    %123 = vmatpush2.bf16.msra.mxu0 0
    %124 = vmatprep.subr.bf16.mxu0 0
    %125 = vmatpush2.bf16.msra.mxu0 0
    %126 = vmatprep.subr.bf16.mxu0 0
    %127 = vmatpush2.bf16.msra.mxu0 0
    %128 = vmatprep.subr.bf16.mxu0 0
    %129 = vmatpush2.bf16.msra.mxu0 0
    %130 = vmatprep.subr.bf16.mxu0 0
    %131 = vmatpush2.bf16.msra.mxu0 0
    %132 = vmatprep.subr.bf16.mxu0 0
    %133 = vmatpush2.bf16.msra.mxu0 0
    %134 = vmatprep.mubr.bf16.mxu0 0
    %135 = vmatmul.mubr.bf16.gmra.mxu0 %v91
    %v136 = vpop.f32.mrf.mxu0
    %v137 = vadd.f32 %v43, %v136
    %v138 = vpop.f32.mrf.mxu0
    %v139 = vpop.f32.mrf.mxu0
    %v140 = vadd.f32 %v43, %v139
    %v141 = vpop.f32.mrf.mxu0
    %142 = vmatprep.mubr.bf16.mxu0 0
    %143 = vmatmul.mubr.bf16.gmra.mxu0 %v94
    %v144 = vpop.f32.mrf.mxu0
    %v145 = vadd.f32 %v43, %v144
    %v146 = vpop.f32.mrf.mxu0
    %v147 = vpop.f32.mrf.mxu0
    %v148 = vadd.f32 %v43, %v147
    %v149 = vpop.f32.mrf.mxu0
    %150 = vmatprep.mubr.bf16.mxu0 0
    %151 = vmatmul.mubr.bf16.gmra.mxu0 %v97
    %v152 = vpop.f32.mrf.mxu0
    %v153 = vadd.f32 %v43, %v152
    %v154 = vpop.f32.mrf.mxu0
    %v155 = vpop.f32.mrf.mxu0
    %v156 = vadd.f32 %v43, %v155
    %v157 = vpop.f32.mrf.mxu0
    %158 = vmatprep.mubr.bf16.mxu0 0
    %159 = vmatmul.mubr.bf16.gmra.mxu0 %v100
    %v160 = vpop.f32.mrf.mxu0
    %v161 = vadd.f32 %v43, %v160
    %v162 = vpop.f32.mrf.mxu0
    %v163 = vpop.f32.mrf.mxu0
    %v164 = vadd.f32 %v43, %v163
    %v165 = vpop.f32.mrf.mxu0
    %166 = vdwg.mxu0
    %v167 = vmax.f32 %v137, 0.0
    %v168 = vmax.f32 %v140, 0.0
    %v169 = vmax.f32 %v145, 0.0
    %v170 = vmax.f32 %v148, 0.0
    %v171 = vmax.f32 %v153, 0.0
    %v172 = vmax.f32 %v156, 0.0
    %v173 = vmax.f32 %v161, 0.0
    %v174 = vmax.f32 %v164, 0.0
    %v175 = vld [vmem:[%s3] sm:$0xff]
    %v176 = vld [vmem:[%s3 + $0x8] sm:$0xff]
    %v177 = vld [vmem:[%s3 + $0x10] sm:$0xff]
    %v178 = vld [vmem:[%s3 + $0x18] sm:$0xff]
    %v179 = vld [vmem:[%s4] sm:$0x1]
    %v181 = vlaneseq
    %v182 = vshrl.u32 %v181, 7
    %v183 = vsub.s32 0, %v182
    %v184 = vrot.slane %v179, %v183
    %vm186 = vcmask 261120
    %v188 = vsel %vm186, %v167, 0
    %v191 = vsel %vm186, %v168, 0
    %v194 = vsel %vm186, %v169, 0
    %v197 = vsel %vm186, %v170, 0
    %v200 = vsel %vm186, %v171, 0
    %v203 = vsel %vm186, %v172, 0
    %v206 = vsel %vm186, %v173, 0
    %v209 = vsel %vm186, %v174, 0
    %211 = vmatprep.subr.mxu0 0.0
    %212 = vmatpush1.msra.mxu0 0.0
    %213 = vmatprep.subr.mxu0 0.0
    %214 = vmatpush1.msra.mxu0 0.0
    %215 = vmatprep.subr.mxu0 0.0
    %216 = vmatpush1.msra.mxu0 0.0
    %217 = vmatprep.subr.mxu0 0.0
    %218 = vmatpush1.msra.mxu0 0.0
    %219 = vmatprep.subr.mxu0 0.0
    %220 = vmatpush1.msra.mxu0 0.0
    %221 = vmatprep.subr.mxu0 0.0
    %222 = vmatpush1.msra.mxu0 0.0
    %223 = vmatprep.subr.mxu0 0.0
    %224 = vmatpush1.msra.mxu0 0.0
    %225 = vmatprep.subr.mxu0 0.0
    %226 = vmatpush1.msra.mxu0 0.0
    %227 = vmatprep.subr.mxu0 0.0
    %228 = vmatpush1.msra.mxu0 0.0
    %229 = vmatprep.subr.mxu0 0.0
    %230 = vmatpush1.msra.mxu0 0.0
    %231 = vmatprep.subr.mxu0 0.0
    %232 = vmatpush1.msra.mxu0 0.0
    %233 = vmatprep.subr.mxu0 0.0
    %234 = vmatpush1.msra.mxu0 0.0
    %235 = vmatprep.subr.mxu0 0.0
    %236 = vmatpush1.msra.mxu0 %v178
    %237 = vmatprep.subr.mxu0 0.0
    %238 = vmatpush1.msra.mxu0 %v177
    %239 = vmatprep.subr.mxu0 0.0
    %240 = vmatpush1.msra.mxu0 %v176
    %241 = vmatprep.subr.mxu0 0.0
    %242 = vmatpush1.msra.mxu0 %v175
    %243 = vmatprep.subr.mxu0 0.0
    %244 = vmatpush2.msra.mxu0 0.0
    %245 = vmatprep.subr.mxu0 0.0
    %246 = vmatpush2.msra.mxu0 0.0
    %247 = vmatprep.subr.mxu0 0.0
    %248 = vmatpush2.msra.mxu0 0.0
    %249 = vmatprep.subr.mxu0 0.0
    %250 = vmatpush2.msra.mxu0 0.0
    %251 = vmatprep.subr.mxu0 0.0
    %252 = vmatpush2.msra.mxu0 0.0
    %253 = vmatprep.subr.mxu0 0.0
    %254 = vmatpush2.msra.mxu0 0.0
    %255 = vmatprep.subr.mxu0 0.0
    %256 = vmatpush2.msra.mxu0 0.0
    %257 = vmatprep.subr.mxu0 0.0
    %258 = vmatpush2.msra.mxu0 0.0
    %259 = vmatprep.subr.mxu0 0.0
    %260 = vmatpush2.msra.mxu0 0.0
    %261 = vmatprep.subr.mxu0 0.0
    %262 = vmatpush2.msra.mxu0 0.0
    %263 = vmatprep.subr.mxu0 0.0
    %264 = vmatpush2.msra.mxu0 0.0
    %265 = vmatprep.subr.mxu0 0.0
    %266 = vmatpush2.msra.mxu0 0.0
    %267 = vmatprep.subr.mxu0 0.0
    %268 = vmatpush2.msra.mxu0 0.0
    %269 = vmatprep.subr.mxu0 0.0
    %270 = vmatpush2.msra.mxu0 0.0
    %271 = vmatprep.subr.mxu0 0.0
    %272 = vmatpush2.msra.mxu0 0.0
    %273 = vmatprep.subr.mxu0 0.0
    %274 = vmatpush2.msra.mxu0 0.0
    %275 = vmatprep.mubr.f32.mxu0 0.0
    %276 = vmatmul.mubr.f32.gmra.mxu0 %v188
    %v277 = vpop.f32.mrf.mxu0
    %v278 = vadd.f32 %v184, %v277
    %v279 = vpop.f32.mrf.mxu0
    %280 = vmatprep.mubr.f32.mxu0 0.0
    %281 = vmatmul.mubr.f32.gmra.mxu0 %v191
    %v282 = vpop.f32.mrf.mxu0
    %v283 = vadd.f32 %v184, %v282
    %v284 = vpop.f32.mrf.mxu0
    %285 = vmatprep.mubr.f32.mxu0 0.0
    %286 = vmatmul.mubr.f32.gmra.mxu0 %v194
    %v287 = vpop.f32.mrf.mxu0
    %v288 = vadd.f32 %v184, %v287
    %v289 = vpop.f32.mrf.mxu0
    %290 = vmatprep.mubr.f32.mxu0 0.0
    %291 = vmatmul.mubr.f32.gmra.mxu0 %v197
    %v292 = vpop.f32.mrf.mxu0
    %v293 = vadd.f32 %v184, %v292
    %v294 = vpop.f32.mrf.mxu0
    %295 = vmatprep.mubr.f32.mxu0 0.0
    %296 = vmatmul.mubr.f32.gmra.mxu0 %v200
    %v297 = vpop.f32.mrf.mxu0
    %v298 = vadd.f32 %v184, %v297
    %v299 = vpop.f32.mrf.mxu0
    %300 = vmatprep.mubr.f32.mxu0 0.0
    %301 = vmatmul.mubr.f32.gmra.mxu0 %v203
    %v302 = vpop.f32.mrf.mxu0
    %v303 = vadd.f32 %v184, %v302
    %v304 = vpop.f32.mrf.mxu0
    %305 = vmatprep.mubr.f32.mxu0 0.0
    %306 = vmatmul.mubr.f32.gmra.mxu0 %v206
    %v307 = vpop.f32.mrf.mxu0
    %v308 = vadd.f32 %v184, %v307
    %v309 = vpop.f32.mrf.mxu0
    %310 = vmatprep.mubr.f32.mxu0 0.0
    %311 = vmatmul.mubr.f32.gmra.mxu0 %v209
    %v312 = vpop.f32.mrf.mxu0
    %v313 = vadd.f32 %v184, %v312
    %v314 = vpop.f32.mrf.mxu0
    %315 = vdwg.mxu0
    %vm316 = vcmask 15360
    %v317 = vsel %vm316, %v278, -inf
    %318 = vmax.xlane.f32.xlu0 %v317
    %v319 = vpop.xlane.xlu0 %318
    %v320 = vsel %vm316, %v283, -inf
    %321 = vmax.xlane.f32.xlu0 %v320
    %v322 = vpop.xlane.xlu0 %321
    %v323 = vsel %vm316, %v288, -inf
    %324 = vmax.xlane.f32.xlu0 %v323
    %v325 = vpop.xlane.xlu0 %324
    %v326 = vsel %vm316, %v293, -inf
    %327 = vmax.xlane.f32.xlu0 %v326
    %v328 = vpop.xlane.xlu0 %327
    %v329 = vsel %vm316, %v298, -inf
    %330 = vmax.xlane.f32.xlu0 %v329
    %v331 = vpop.xlane.xlu0 %330
    %v332 = vsel %vm316, %v303, -inf
    %333 = vmax.xlane.f32.xlu0 %v332
    %v334 = vpop.xlane.xlu0 %333
    %v335 = vsel %vm316, %v308, -inf
    %336 = vmax.xlane.f32.xlu0 %v335
    %v337 = vpop.xlane.xlu0 %336
    %v338 = vsel %vm316, %v313, -inf
    %339 = vmax.xlane.f32.xlu0 %v338
    %v340 = vpop.xlane.xlu0 %339
    %v341 = vsub.f32 %v278, %v319
    %v342 = vsub.f32 %v283, %v322
    %v343 = vsub.f32 %v288, %v325
    %v344 = vsub.f32 %v293, %v328
    %v345 = vsub.f32 %v298, %v331
    %v346 = vsub.f32 %v303, %v334
    %v347 = vsub.f32 %v308, %v337
    %v348 = vsub.f32 %v313, %v340
    %v349 = vmul.f32 %v341, 1.442695
    %v350 = vpow.pop %v349
    %v351 = vmul.f32 %v342, 1.442695
    %v352 = vpow.pop %v351
    %v353 = vmul.f32 %v343, 1.442695
    %v354 = vpow.pop %v353
    %v355 = vmul.f32 %v344, 1.442695
    %v356 = vpow.pop %v355
    %v357 = vmul.f32 %v345, 1.442695
    %v358 = vpow.pop %v357
    %v359 = vmul.f32 %v346, 1.442695
    %v360 = vpow.pop %v359
    %v361 = vmul.f32 %v347, 1.442695
    %v362 = vpow.pop %v361
    %v363 = vmul.f32 %v348, 1.442695
    %v364 = vpow.pop %v363
    %v365 = vsel %vm316, %v350, 0.0
    %366 = vadd.xlane.f32.xlu0 %v365
    %v367 = vpop.xlane.xlu0 %366
    %v368 = vsel %vm316, %v352, 0.0
    %369 = vadd.xlane.f32.xlu0 %v368
    %v370 = vpop.xlane.xlu0 %369
    %v371 = vsel %vm316, %v354, 0.0
    %372 = vadd.xlane.f32.xlu0 %v371
    %v373 = vpop.xlane.xlu0 %372
    %v374 = vsel %vm316, %v356, 0.0
    %375 = vadd.xlane.f32.xlu0 %v374
    %v376 = vpop.xlane.xlu0 %375
    %v377 = vsel %vm316, %v358, 0.0
    %378 = vadd.xlane.f32.xlu0 %v377
    %v379 = vpop.xlane.xlu0 %378
    %v380 = vsel %vm316, %v360, 0.0
    %381 = vadd.xlane.f32.xlu0 %v380
    %v382 = vpop.xlane.xlu0 %381
    %v383 = vsel %vm316, %v362, 0.0
    %384 = vadd.xlane.f32.xlu0 %v383
    %v385 = vpop.xlane.xlu0 %384
    %v386 = vsel %vm316, %v364, 0.0
    %387 = vadd.xlane.f32.xlu0 %v386
    %v388 = vpop.xlane.xlu0 %387
    %v389 = vlog2.pop %v367
    %v390 = vmul.f32 %v389, 0.6931472
    %v391 = vlog2.pop %v370
    %v392 = vmul.f32 %v391, 0.6931472
    %v393 = vlog2.pop %v373
    %v394 = vmul.f32 %v393, 0.6931472
    %v395 = vlog2.pop %v376
    %v396 = vmul.f32 %v395, 0.6931472
    %v397 = vlog2.pop %v379
    %v398 = vmul.f32 %v397, 0.6931472
    %v399 = vlog2.pop %v382
    %v400 = vmul.f32 %v399, 0.6931472
    %v401 = vlog2.pop %v385
    %v402 = vmul.f32 %v401, 0.6931472
    %v403 = vlog2.pop %v388
    %v404 = vmul.f32 %v403, 0.6931472
    %v405 = vadd.f32 %v319, %v390
    %v406 = vadd.f32 %v322, %v392
    %v407 = vadd.f32 %v325, %v394
    %v408 = vadd.f32 %v328, %v396
    %v409 = vadd.f32 %v331, %v398
    %v410 = vadd.f32 %v334, %v400
    %v411 = vadd.f32 %v337, %v402
    %v412 = vadd.f32 %v340, %v404
    %v413 = vsub.f32 %v278, %v405
    %v414 = vsub.f32 %v283, %v406
    %v415 = vsub.f32 %v288, %v407
    %v416 = vsub.f32 %v293, %v408
    %v417 = vsub.f32 %v298, %v409
    %v418 = vsub.f32 %v303, %v410
    %v419 = vsub.f32 %v308, %v411
    %v420 = vsub.f32 %v313, %v412
    %429 = vrot.lane.b32.xlu0 %v413, 127
    %v430 = vpop.permute.xlu0 %429
    %431 = vrot.lane.b32.xlu0 %v414, 127
    %v432 = vpop.permute.xlu0 %431
    %433 = vrot.lane.b32.xlu0 %v415, 127
    %v434 = vpop.permute.xlu0 %433
    %435 = vrot.lane.b32.xlu0 %v416, 127
    %v436 = vpop.permute.xlu0 %435
    %437 = vrot.lane.b32.xlu0 %v417, 127
    %v438 = vpop.permute.xlu0 %437
    %439 = vrot.lane.b32.xlu0 %v418, 127
    %v440 = vpop.permute.xlu0 %439
    %441 = vrot.lane.b32.xlu0 %v419, 127
    %v442 = vpop.permute.xlu0 %441
    %443 = vrot.lane.b32.xlu0 %v420, 127
    %v444 = vpop.permute.xlu0 %443
    %vm453 = vcmask 7168
    %v454 = vsel %vm453, %v430, 0.0
    %v455 = vsel %vm453, %v432, 0.0
    %v456 = vadd.f32 %v454, %v455
    %v457 = vsel %vm453, %v434, 0.0
    %v458 = vadd.f32 %v456, %v457
    %v459 = vsel %vm453, %v436, 0.0
    %v460 = vadd.f32 %v458, %v459
    %v461 = vsel %vm453, %v438, 0.0
    %v462 = vadd.f32 %v460, %v461
    %v463 = vsel %vm453, %v440, 0.0
    %v464 = vadd.f32 %v462, %v463
    %v465 = vsel %vm453, %v442, 0.0
    %v466 = vadd.f32 %v464, %v465
    %v467 = vsel %vm453, %v444, 0.0
    %v468 = vadd.f32 %v466, %v467
    %469 = vadd.xlane.f32.xlu0 %v468
    %v470 = vpop.xlane.xlu0 %469
    %v471 = vrot.slane %v470, 4
    %v472 = vadd.f32 %v470, %v471
    %v473 = vrot.slane %v472, 2
    %v474 = vadd.f32 %v472, %v473
    %v475 = vrot.slane %v474, 1
    %v476 = vadd.f32 %v474, %v475
    %s477 = vtos %v476
    %v478 = vstv %s477
    %v479 = vsub.f32 0.0, %v478
    %v480 = vrcp.pop 64.0
    %v481 = vmul.f32 %v479, %v480
    %vm482 = vcmask 0
    %483 = vst.msk [vmem:[#allocation2] sm:$0x1] %vm482, %v481
    // Predicated region
    $region22: #{gmae_forward.11} parent=1 // pred_check
      _
    $region23: #{gmae_forward.11} parent=1 // pred_check_branch
      %485 = sbr.rel (0) target = $region25
    $region24: #{gmae_forward.11} parent=1 // pred_region
      %s487 = ssub.s32 16, 16
      %488 = vsyncadd [#allocation3], %s487
      %s490 = sshll.u32 [#allocation2], 4
      %s491 = int_to_ptr.vmem [resolvable:$true] %s490
      %493 = dma.vmem_to_hbm [thread:$0]  %s491, 16, %s5, [#allocation3]
    $region25: #{gmae_forward.11} parent=1 // pred_fallthru
      _
    // Predicated region
    $region26: #{gmae_forward.11} parent=1 // pred_check
      _
    $region27: #{gmae_forward.11} parent=1 // pred_check_branch
      %495 = sbr.rel (0) target = $region29
    $region28: #{gmae_forward.11} parent=1 // pred_region
      %496 = dma.done [#allocation3], 16
    $region29: #{gmae_forward.11} parent=1 // pred_fallthru
      _
    %497 = vsyncpa [#allocation3], 1

// kernel: gmae_forward.10
$region0: #{gmae_forward.10}
  #allocation0 [shape = 'u32[]', space=smem, size = 0x4, offset = 0x4, fixed_abs, tag = 'smem constant byte address 0x4 - core index']
  #allocation1 [shape = 'u32[144,128]{1,0:T(1,128)}', space=vmem, size = 0x12000, scoped, tag = 'internal scratch']
  #allocation2 [shape = 'f32[1,1]{1,0:T(1,128)S(1)}', space=vmem, size = 0x200, scoped, tag = 'scoped memory for gmae_forward.10']
  %s0 = inlined_call_operand.vmem [shape: bf16[128,128], index: 0, kind: input, shape index: {}]
  %s1 = inlined_call_operand.vmem [shape: bf16[128,32], index: 1, kind: input, shape index: {}]
  %s2 = inlined_call_operand.vmem [shape: f32[1,32], index: 2, kind: input, shape index: {}]
  %s3 = inlined_call_operand.vmem [shape: f32[1,32], index: 3, kind: input, shape index: {}]
  %s4 = inlined_call_operand.<no memory space> [shape: f32[1,1], index: 4, kind: input, shape index: {}]
  %s5 = inlined_call_operand.hbm [shape: f32[1,1], index: 5, kind: output, shape index: {}]
  %s6 = sld [smem:[#allocation0]]
  $region30: #{gmae_forward.10} parent=0
    _
  %s8 = ssub.s32 1, %s6
  %s9 = scalar_select 0, %s8, %s6
  %v10 = vstv %s4
  %11 = vst [vmem:[#allocation2] sm:$0x1] %v10
  $region1: #{gmae_forward.10} parent=0
    #allocation3 [shape = 'u8[512]{0}', space=vmem, size = 0x400, scoped, tag = 'output window, operand 0, single buffered']
    #allocation4 [shape = 's32[1]{0}', space=sflag, size = 0x4, scoped, tag = 'scoped memory for gmae_forward.10']
    %12 = vsyncpa [#allocation4], 0
    // Predicated region
    $region2: #{gmae_forward.10} parent=1 // pred_check
      _
    $region3: #{gmae_forward.10} parent=1 // pred_check_branch
      %14 = sbr.rel (0) target = $region5
    $region4: #{gmae_forward.10} parent=1 // pred_region
      _
    $region5: #{gmae_forward.10} parent=1 // pred_fallthru
      _
    // Predicated region
    $region6: #{gmae_forward.10} parent=1 // pred_check
      _
    $region7: #{gmae_forward.10} parent=1 // pred_check_branch
      %16 = sbr.rel (0) target = $region9
    $region8: #{gmae_forward.10} parent=1 // pred_region
      _
    $region9: #{gmae_forward.10} parent=1 // pred_fallthru
      _
    // Predicated region
    $region10: #{gmae_forward.10} parent=1 // pred_check
      _
    $region11: #{gmae_forward.10} parent=1 // pred_check_branch
      %18 = sbr.rel (0) target = $region13
    $region12: #{gmae_forward.10} parent=1 // pred_region
      _
    $region13: #{gmae_forward.10} parent=1 // pred_fallthru
      _
    // Predicated region
    $region14: #{gmae_forward.10} parent=1 // pred_check
      _
    $region15: #{gmae_forward.10} parent=1 // pred_check_branch
      %20 = sbr.rel (0) target = $region17
    $region16: #{gmae_forward.10} parent=1 // pred_region
      _
    $region17: #{gmae_forward.10} parent=1 // pred_fallthru
      _
    // Predicated region
    $region18: #{gmae_forward.10} parent=1 // pred_check
      _
    $region19: #{gmae_forward.10} parent=1 // pred_check_branch
      %22 = sbr.rel (0) target = $region21
    $region20: #{gmae_forward.10} parent=1 // pred_region
      _
    $region21: #{gmae_forward.10} parent=1 // pred_fallthru
      _
    %v24 = vld [vmem:[%s0] sm:$0xf]
    %v25 = vld [vmem:[%s0 + $0x4] sm:$0xf]
    %v26 = vld [vmem:[%s0 + $0x8] sm:$0xf]
    %v27 = vld [vmem:[%s0 + $0xc] sm:$0xf]
    %v28 = vld [vmem:[%s0 + $0x10] sm:$0xf]
    %v29 = vld [vmem:[%s0 + $0x14] sm:$0xf]
    %v30 = vld [vmem:[%s0 + $0x18] sm:$0xf]
    %v31 = vld [vmem:[%s0 + $0x1c] sm:$0xf]
    %v32 = vld [vmem:[%s0 + $0x20] sm:$0xf]
    %v33 = vld [vmem:[%s0 + $0x24] sm:$0xf]
    %v34 = vld [vmem:[%s0 + $0x28] sm:$0xf]
    %v35 = vld [vmem:[%s0 + $0x2c] sm:$0xf]
    %v36 = vld [vmem:[%s0 + $0x30] sm:$0xf]
    %v37 = vld [vmem:[%s0 + $0x34] sm:$0xf]
    %v38 = vld [vmem:[%s0 + $0x38] sm:$0xf]
    %v39 = vld [vmem:[%s0 + $0x3c] sm:$0xf]
    %v40 = vld [vmem:[%s1] sm:$0xf]
    %v41 = vld [vmem:[%s1 + $0x4] sm:$0xf]
    %v42 = vld [vmem:[%s1 + $0x8] sm:$0xf]
    %v43 = vld [vmem:[%s1 + $0xc] sm:$0xf]
    %v44 = vld [vmem:[%s1 + $0x10] sm:$0xf]
    %v45 = vld [vmem:[%s1 + $0x14] sm:$0xf]
    %v46 = vld [vmem:[%s1 + $0x18] sm:$0xf]
    %v47 = vld [vmem:[%s1 + $0x1c] sm:$0xf]
    %v48 = vld [vmem:[%s1 + $0x20] sm:$0xf]
    %v49 = vld [vmem:[%s1 + $0x24] sm:$0xf]
    %v50 = vld [vmem:[%s1 + $0x28] sm:$0xf]
    %v51 = vld [vmem:[%s1 + $0x2c] sm:$0xf]
    %v52 = vld [vmem:[%s1 + $0x30] sm:$0xf]
    %v53 = vld [vmem:[%s1 + $0x34] sm:$0xf]
    %v54 = vld [vmem:[%s1 + $0x38] sm:$0xf]
    %v55 = vld [vmem:[%s1 + $0x3c] sm:$0xf]
    %v56 = vld [vmem:[%s2] sm:$0x1]
    %v58 = vlaneseq
    %v59 = vshrl.u32 %v58, 7
    %v60 = vsub.s32 0, %v59
    %v61 = vrot.slane %v56, %v60
    %v79 = vunpack.c.l.b16 %v24
    %v80 = vunpack.c.l.b16 %v25
    %v81 = vunpack.c.l.b16 %v26
    %v82 = vunpack.c.l.b16 %v27
    %v83 = vunpack.c.l.b16 %v28
    %v84 = vunpack.c.l.b16 %v29
    %v85 = vunpack.c.l.b16 %v30
    %v86 = vunpack.c.l.b16 %v31
    %v87 = vunpack.c.l.b16 %v32
    %v88 = vunpack.c.l.b16 %v33
    %v89 = vunpack.c.l.b16 %v34
    %v90 = vunpack.c.l.b16 %v35
    %v91 = vunpack.c.l.b16 %v36
    %v92 = vunpack.c.l.b16 %v37
    %v93 = vunpack.c.l.b16 %v38
    %v94 = vunpack.c.l.b16 %v39
    %v95 = vpack.c.b16 %v80, %v79
    %v96 = vpack.c.b16 %v82, %v81
    %v97 = vpack.c.b16 %v84, %v83
    %v98 = vpack.c.b16 %v86, %v85
    %v99 = vpack.c.b16 %v88, %v87
    %v100 = vpack.c.b16 %v90, %v89
    %v101 = vpack.c.b16 %v92, %v91
    %v102 = vpack.c.b16 %v94, %v93
    %v127 = vunpack.c.l.b16 %v40
    %v128 = vunpack.c.l.b16 %v41
    %v129 = vunpack.c.l.b16 %v42
    %v130 = vunpack.c.l.b16 %v43
    %v131 = vunpack.c.l.b16 %v44
    %v132 = vunpack.c.l.b16 %v45
    %v133 = vunpack.c.l.b16 %v46
    %v134 = vunpack.c.l.b16 %v47
    %v135 = vunpack.c.l.b16 %v48
    %v136 = vunpack.c.l.b16 %v49
    %v137 = vunpack.c.l.b16 %v50
    %v138 = vunpack.c.l.b16 %v51
    %v139 = vunpack.c.l.b16 %v52
    %v140 = vunpack.c.l.b16 %v53
    %v141 = vunpack.c.l.b16 %v54
    %v142 = vunpack.c.l.b16 %v55
    %v143 = vpack.c.b16 %v128, %v127
    %v144 = vpack.c.b16 %v130, %v129
    %v145 = vpack.c.b16 %v132, %v131
    %v146 = vpack.c.b16 %v134, %v133
    %v147 = vpack.c.b16 %v136, %v135
    %v148 = vpack.c.b16 %v138, %v137
    %v149 = vpack.c.b16 %v140, %v139
    %v150 = vpack.c.b16 %v142, %v141
    %159 = vmatprep.subr.bf16.mxu0 0
    %160 = vmatpush1.bf16.msra.mxu0 %v150
    %161 = vmatprep.subr.bf16.mxu0 0
    %162 = vmatpush1.bf16.msra.mxu0 %v149
    %163 = vmatprep.subr.bf16.mxu0 0
    %164 = vmatpush1.bf16.msra.mxu0 %v148
    %165 = vmatprep.subr.bf16.mxu0 0
    %166 = vmatpush1.bf16.msra.mxu0 %v147
    %167 = vmatprep.subr.bf16.mxu0 0
    %168 = vmatpush1.bf16.msra.mxu0 %v146
    %169 = vmatprep.subr.bf16.mxu0 0
    %170 = vmatpush1.bf16.msra.mxu0 %v145
    %171 = vmatprep.subr.bf16.mxu0 0
    %172 = vmatpush1.bf16.msra.mxu0 %v144
    %173 = vmatprep.subr.bf16.mxu0 0
    %174 = vmatpush1.bf16.msra.mxu0 %v143
    %175 = vmatprep.subr.bf16.mxu0 0
    %176 = vmatpush2.bf16.msra.mxu0 0
    %177 = vmatprep.subr.bf16.mxu0 0
    %178 = vmatpush2.bf16.msra.mxu0 0
    %179 = vmatprep.subr.bf16.mxu0 0
    %180 = vmatpush2.bf16.msra.mxu0 0
    %181 = vmatprep.subr.bf16.mxu0 0
    %182 = vmatpush2.bf16.msra.mxu0 0
    %183 = vmatprep.subr.bf16.mxu0 0
    %184 = vmatpush2.bf16.msra.mxu0 0
    %185 = vmatprep.subr.bf16.mxu0 0
    %186 = vmatpush2.bf16.msra.mxu0 0
    %187 = vmatprep.subr.bf16.mxu0 0
    %188 = vmatpush2.bf16.msra.mxu0 0
    %189 = vmatprep.subr.bf16.mxu0 0
    %190 = vmatpush2.bf16.msra.mxu0 0
    %191 = vmatprep.mubr.bf16.mxu0 0
    %192 = vmatmul.mubr.bf16.gmra.mxu0 %v95
    %v193 = vpop.f32.mrf.mxu0
    %v194 = vadd.f32 %v61, %v193
    %v195 = vpop.f32.mrf.mxu0
    %v196 = vpop.f32.mrf.mxu0
    %v197 = vadd.f32 %v61, %v196
    %v198 = vpop.f32.mrf.mxu0
    %199 = vmatprep.mubr.bf16.mxu0 0
    %200 = vmatmul.mubr.bf16.gmra.mxu0 %v96
    %v201 = vpop.f32.mrf.mxu0
    %v202 = vadd.f32 %v61, %v201
    %v203 = vpop.f32.mrf.mxu0
    %v204 = vpop.f32.mrf.mxu0
    %v205 = vadd.f32 %v61, %v204
    %v206 = vpop.f32.mrf.mxu0
    %207 = vmatprep.mubr.bf16.mxu0 0
    %208 = vmatmul.mubr.bf16.gmra.mxu0 %v97
    %v209 = vpop.f32.mrf.mxu0
    %v210 = vadd.f32 %v61, %v209
    %v211 = vpop.f32.mrf.mxu0
    %v212 = vpop.f32.mrf.mxu0
    %v213 = vadd.f32 %v61, %v212
    %v214 = vpop.f32.mrf.mxu0
    %215 = vmatprep.mubr.bf16.mxu0 0
    %216 = vmatmul.mubr.bf16.gmra.mxu0 %v98
    %v217 = vpop.f32.mrf.mxu0
    %v218 = vadd.f32 %v61, %v217
    %v219 = vpop.f32.mrf.mxu0
    %v220 = vpop.f32.mrf.mxu0
    %v221 = vadd.f32 %v61, %v220
    %v222 = vpop.f32.mrf.mxu0
    %223 = vmatprep.mubr.bf16.mxu0 0
    %224 = vmatmul.mubr.bf16.gmra.mxu0 %v99
    %v225 = vpop.f32.mrf.mxu0
    %v226 = vadd.f32 %v61, %v225
    %v227 = vpop.f32.mrf.mxu0
    %v228 = vpop.f32.mrf.mxu0
    %v229 = vadd.f32 %v61, %v228
    %v230 = vpop.f32.mrf.mxu0
    %231 = vmatprep.mubr.bf16.mxu0 0
    %232 = vmatmul.mubr.bf16.gmra.mxu0 %v100
    %v233 = vpop.f32.mrf.mxu0
    %v234 = vadd.f32 %v61, %v233
    %v235 = vpop.f32.mrf.mxu0
    %v236 = vpop.f32.mrf.mxu0
    %v237 = vadd.f32 %v61, %v236
    %v238 = vpop.f32.mrf.mxu0
    %239 = vmatprep.mubr.bf16.mxu0 0
    %240 = vmatmul.mubr.bf16.gmra.mxu0 %v101
    %v241 = vpop.f32.mrf.mxu0
    %v242 = vadd.f32 %v61, %v241
    %v243 = vpop.f32.mrf.mxu0
    %v244 = vpop.f32.mrf.mxu0
    %v245 = vadd.f32 %v61, %v244
    %v246 = vpop.f32.mrf.mxu0
    %247 = vmatprep.mubr.bf16.mxu0 0
    %248 = vmatmul.mubr.bf16.gmra.mxu0 %v102
    %v249 = vpop.f32.mrf.mxu0
    %v250 = vadd.f32 %v61, %v249
    %v251 = vpop.f32.mrf.mxu0
    %v252 = vpop.f32.mrf.mxu0
    %v253 = vadd.f32 %v61, %v252
    %v254 = vpop.f32.mrf.mxu0
    %255 = vdwg.mxu0
    %vm256 = vcmp.gt.f32.partialorder %v194, 0.0
    %vm257 = vcmp.gt.f32.partialorder %v197, 0.0
    %vm258 = vcmp.gt.f32.partialorder %v202, 0.0
    %vm259 = vcmp.gt.f32.partialorder %v205, 0.0
    %vm260 = vcmp.gt.f32.partialorder %v210, 0.0
    %vm261 = vcmp.gt.f32.partialorder %v213, 0.0
    %vm262 = vcmp.gt.f32.partialorder %v218, 0.0
    %vm263 = vcmp.gt.f32.partialorder %v221, 0.0
    %vm264 = vcmp.gt.f32.partialorder %v226, 0.0
    %vm265 = vcmp.gt.f32.partialorder %v229, 0.0
    %vm266 = vcmp.gt.f32.partialorder %v234, 0.0
    %vm267 = vcmp.gt.f32.partialorder %v237, 0.0
    %vm268 = vcmp.gt.f32.partialorder %v242, 0.0
    %vm269 = vcmp.gt.f32.partialorder %v245, 0.0
    %vm270 = vcmp.gt.f32.partialorder %v250, 0.0
    %vm271 = vcmp.gt.f32.partialorder %v253, 0.0
    %v272 = vmul.f32 %v194, 0.2
    %v273 = vmul.f32 %v197, 0.2
    %v274 = vmul.f32 %v202, 0.2
    %v275 = vmul.f32 %v205, 0.2
    %v276 = vmul.f32 %v210, 0.2
    %v277 = vmul.f32 %v213, 0.2
    %v278 = vmul.f32 %v218, 0.2
    %v279 = vmul.f32 %v221, 0.2
    %v280 = vmul.f32 %v226, 0.2
    %v281 = vmul.f32 %v229, 0.2
    %v282 = vmul.f32 %v234, 0.2
    %v283 = vmul.f32 %v237, 0.2
    %v284 = vmul.f32 %v242, 0.2
    %v285 = vmul.f32 %v245, 0.2
    %v286 = vmul.f32 %v250, 0.2
    %v287 = vmul.f32 %v253, 0.2
    %v288 = vsel %vm256, %v194, %v272
    %v289 = vsel %vm257, %v197, %v273
    %v290 = vsel %vm258, %v202, %v274
    %v291 = vsel %vm259, %v205, %v275
    %v292 = vsel %vm260, %v210, %v276
    %v293 = vsel %vm261, %v213, %v277
    %v294 = vsel %vm262, %v218, %v278
    %v295 = vsel %vm263, %v221, %v279
    %v296 = vsel %vm264, %v226, %v280
    %v297 = vsel %vm265, %v229, %v281
    %v298 = vsel %vm266, %v234, %v282
    %v299 = vsel %vm267, %v237, %v283
    %v300 = vsel %vm268, %v242, %v284
    %v301 = vsel %vm269, %v245, %v285
    %v302 = vsel %vm270, %v250, %v286
    %v303 = vsel %vm271, %v253, %v287
    %v304 = vld [vmem:[%s3] sm:$0x1]
    %v306 = vlaneseq
    %v307 = vshrl.u32 %v306, 7
    %v308 = vsub.s32 0, %v307
    %v309 = vrot.slane %v304, %v308
    %v311 = vmul.f32 %v288, %v309
    %v312 = vmul.f32 %v289, %v309
    %v313 = vmul.f32 %v290, %v309
    %v314 = vmul.f32 %v291, %v309
    %v315 = vmul.f32 %v292, %v309
    %v316 = vmul.f32 %v293, %v309
    %v317 = vmul.f32 %v294, %v309
    %v318 = vmul.f32 %v295, %v309
    %v319 = vmul.f32 %v296, %v309
    %v320 = vmul.f32 %v297, %v309
    %v321 = vmul.f32 %v298, %v309
    %v322 = vmul.f32 %v299, %v309
    %v323 = vmul.f32 %v300, %v309
    %v324 = vmul.f32 %v301, %v309
    %v325 = vmul.f32 %v302, %v309
    %v326 = vmul.f32 %v303, %v309
    %vm327 = vcmask 261120
    %v328 = vsel %vm327, %v311, 0.0
    %329 = vadd.xlane.f32.xlu0 %v328
    %v330 = vpop.xlane.xlu0 %329
    %v331 = vsel %vm327, %v312, 0.0
    %332 = vadd.xlane.f32.xlu0 %v331
    %v333 = vpop.xlane.xlu0 %332
    %v334 = vsel %vm327, %v313, 0.0
    %335 = vadd.xlane.f32.xlu0 %v334
    %v336 = vpop.xlane.xlu0 %335
    %v337 = vsel %vm327, %v314, 0.0
    %338 = vadd.xlane.f32.xlu0 %v337
    %v339 = vpop.xlane.xlu0 %338
    %v340 = vsel %vm327, %v315, 0.0
    %341 = vadd.xlane.f32.xlu0 %v340
    %v342 = vpop.xlane.xlu0 %341
    %v343 = vsel %vm327, %v316, 0.0
    %344 = vadd.xlane.f32.xlu0 %v343
    %v345 = vpop.xlane.xlu0 %344
    %v346 = vsel %vm327, %v317, 0.0
    %347 = vadd.xlane.f32.xlu0 %v346
    %v348 = vpop.xlane.xlu0 %347
    %v349 = vsel %vm327, %v318, 0.0
    %350 = vadd.xlane.f32.xlu0 %v349
    %v351 = vpop.xlane.xlu0 %350
    %v352 = vsel %vm327, %v319, 0.0
    %353 = vadd.xlane.f32.xlu0 %v352
    %v354 = vpop.xlane.xlu0 %353
    %v355 = vsel %vm327, %v320, 0.0
    %356 = vadd.xlane.f32.xlu0 %v355
    %v357 = vpop.xlane.xlu0 %356
    %v358 = vsel %vm327, %v321, 0.0
    %359 = vadd.xlane.f32.xlu0 %v358
    %v360 = vpop.xlane.xlu0 %359
    %v361 = vsel %vm327, %v322, 0.0
    %362 = vadd.xlane.f32.xlu0 %v361
    %v363 = vpop.xlane.xlu0 %362
    %v364 = vsel %vm327, %v323, 0.0
    %365 = vadd.xlane.f32.xlu0 %v364
    %v366 = vpop.xlane.xlu0 %365
    %v367 = vsel %vm327, %v324, 0.0
    %368 = vadd.xlane.f32.xlu0 %v367
    %v369 = vpop.xlane.xlu0 %368
    %v370 = vsel %vm327, %v325, 0.0
    %371 = vadd.xlane.f32.xlu0 %v370
    %v372 = vpop.xlane.xlu0 %371
    %v373 = vsel %vm327, %v326, 0.0
    %374 = vadd.xlane.f32.xlu0 %v373
    %v375 = vpop.xlane.xlu0 %374
    %v376 = vld [vmem:[#allocation2] sm:$0x1]
    %v378 = vlaneseq
    %v379 = vshrl.u32 %v378, 7
    %v380 = vsub.s32 0, %v379
    %v381 = vrot.slane %v376, %v380
    %v383 = vadd.f32 %v330, %v381
    %v384 = vadd.f32 %v333, %v381
    %v385 = vadd.f32 %v336, %v381
    %v386 = vadd.f32 %v339, %v381
    %v387 = vadd.f32 %v342, %v381
    %v388 = vadd.f32 %v345, %v381
    %v389 = vadd.f32 %v348, %v381
    %v390 = vadd.f32 %v351, %v381
    %v391 = vadd.f32 %v354, %v381
    %v392 = vadd.f32 %v357, %v381
    %v393 = vadd.f32 %v360, %v381
    %v394 = vadd.f32 %v363, %v381
    %v395 = vadd.f32 %v366, %v381
    %v396 = vadd.f32 %v369, %v381
    %v397 = vadd.f32 %v372, %v381
    %v398 = vadd.f32 %v375, %v381
    %v399 = vxor.u32 %v383, 2147483648
    %v400 = vxor.u32 %v384, 2147483648
    %v401 = vxor.u32 %v385, 2147483648
    %v402 = vxor.u32 %v386, 2147483648
    %v403 = vxor.u32 %v387, 2147483648
    %v404 = vxor.u32 %v388, 2147483648
    %v405 = vxor.u32 %v389, 2147483648
    %v406 = vxor.u32 %v390, 2147483648
    %v407 = vxor.u32 %v391, 2147483648
    %v408 = vxor.u32 %v392, 2147483648
    %v409 = vxor.u32 %v393, 2147483648
    %v410 = vxor.u32 %v394, 2147483648
    %v411 = vxor.u32 %v395, 2147483648
    %v412 = vxor.u32 %v396, 2147483648
    %v413 = vxor.u32 %v397, 2147483648
    %v414 = vxor.u32 %v398, 2147483648
    %v415 = vmul.f32 %v399, 1.442695
    %v416 = vpow.pop %v415
    %v417 = vmul.f32 %v400, 1.442695
    %v418 = vpow.pop %v417
    %v419 = vmul.f32 %v401, 1.442695
    %v420 = vpow.pop %v419
    %v421 = vmul.f32 %v402, 1.442695
    %v422 = vpow.pop %v421
    %v423 = vmul.f32 %v403, 1.442695
    %v424 = vpow.pop %v423
    %v425 = vmul.f32 %v404, 1.442695
    %v426 = vpow.pop %v425
    %v427 = vmul.f32 %v405, 1.442695
    %v428 = vpow.pop %v427
    %v429 = vmul.f32 %v406, 1.442695
    %v430 = vpow.pop %v429
    %v431 = vmul.f32 %v407, 1.442695
    %v432 = vpow.pop %v431
    %v433 = vmul.f32 %v408, 1.442695
    %v434 = vpow.pop %v433
    %v435 = vmul.f32 %v409, 1.442695
    %v436 = vpow.pop %v435
    %v437 = vmul.f32 %v410, 1.442695
    %v438 = vpow.pop %v437
    %v439 = vmul.f32 %v411, 1.442695
    %v440 = vpow.pop %v439
    %v441 = vmul.f32 %v412, 1.442695
    %v442 = vpow.pop %v441
    %v443 = vmul.f32 %v413, 1.442695
    %v444 = vpow.pop %v443
    %v445 = vmul.f32 %v414, 1.442695
    %v446 = vpow.pop %v445
    %v447 = vadd.f32 %v416, 1.0
    %v448 = vadd.f32 %v418, 1.0
    %v449 = vadd.f32 %v420, 1.0
    %v450 = vadd.f32 %v422, 1.0
    %v451 = vadd.f32 %v424, 1.0
    %v452 = vadd.f32 %v426, 1.0
    %v453 = vadd.f32 %v428, 1.0
    %v454 = vadd.f32 %v430, 1.0
    %v455 = vadd.f32 %v432, 1.0
    %v456 = vadd.f32 %v434, 1.0
    %v457 = vadd.f32 %v436, 1.0
    %v458 = vadd.f32 %v438, 1.0
    %v459 = vadd.f32 %v440, 1.0
    %v460 = vadd.f32 %v442, 1.0
    %v461 = vadd.f32 %v444, 1.0
    %v462 = vadd.f32 %v446, 1.0
    %v463 = vrcp.pop %v447
    %v464 = vmul.f32 1.0, %v463
    %v465 = vrcp.pop %v448
    %v466 = vmul.f32 1.0, %v465
    %v467 = vrcp.pop %v449
    %v468 = vmul.f32 1.0, %v467
    %v469 = vrcp.pop %v450
    %v470 = vmul.f32 1.0, %v469
    %v471 = vrcp.pop %v451
    %v472 = vmul.f32 1.0, %v471
    %v473 = vrcp.pop %v452
    %v474 = vmul.f32 1.0, %v473
    %v475 = vrcp.pop %v453
    %v476 = vmul.f32 1.0, %v475
    %v477 = vrcp.pop %v454
    %v478 = vmul.f32 1.0, %v477
    %v479 = vrcp.pop %v455
    %v480 = vmul.f32 1.0, %v479
    %v481 = vrcp.pop %v456
    %v482 = vmul.f32 1.0, %v481
    %v483 = vrcp.pop %v457
    %v484 = vmul.f32 1.0, %v483
    %v485 = vrcp.pop %v458
    %v486 = vmul.f32 1.0, %v485
    %v487 = vrcp.pop %v459
    %v488 = vmul.f32 1.0, %v487
    %v489 = vrcp.pop %v460
    %v490 = vmul.f32 1.0, %v489
    %v491 = vrcp.pop %v461
    %v492 = vmul.f32 1.0, %v491
    %v493 = vrcp.pop %v462
    %v494 = vmul.f32 1.0, %v493
    %v495 = vmax.f32 %v464, 1e-12
    %v496 = vmax.f32 %v466, 1e-12
    %v497 = vmax.f32 %v468, 1e-12
    %v498 = vmax.f32 %v470, 1e-12
    %v499 = vmax.f32 %v472, 1e-12
    %v500 = vmax.f32 %v474, 1e-12
    %v501 = vmax.f32 %v476, 1e-12
    %v502 = vmax.f32 %v478, 1e-12
    %v503 = vmax.f32 %v480, 1e-12
    %v504 = vmax.f32 %v482, 1e-12
    %v505 = vmax.f32 %v484, 1e-12
    %v506 = vmax.f32 %v486, 1e-12
    %v507 = vmax.f32 %v488, 1e-12
    %v508 = vmax.f32 %v490, 1e-12
    %v509 = vmax.f32 %v492, 1e-12
    %v510 = vmax.f32 %v494, 1e-12
    %v511 = vmin.f32 %v495, 1.0
    %v512 = vmin.f32 %v496, 1.0
    %v513 = vmin.f32 %v497, 1.0
    %v514 = vmin.f32 %v498, 1.0
    %v515 = vmin.f32 %v499, 1.0
    %v516 = vmin.f32 %v500, 1.0
    %v517 = vmin.f32 %v501, 1.0
    %v518 = vmin.f32 %v502, 1.0
    %v519 = vmin.f32 %v503, 1.0
    %v520 = vmin.f32 %v504, 1.0
    %v521 = vmin.f32 %v505, 1.0
    %v522 = vmin.f32 %v506, 1.0
    %v523 = vmin.f32 %v507, 1.0
    %v524 = vmin.f32 %v508, 1.0
    %v525 = vmin.f32 %v509, 1.0
    %v526 = vmin.f32 %v510, 1.0
    %v527 = vlaneseq
    %v528 = vshrl.u32 %v527, 7
    %v529 = vadd.s32 %v528, 8
    %v530 = vadd.s32 %v528, 16
    %v531 = vadd.s32 %v528, 24
    %v532 = vadd.s32 %v528, 32
    %v533 = vadd.s32 %v528, 40
    %v534 = vadd.s32 %v528, 48
    %v535 = vadd.s32 %v528, 56
    %v536 = vadd.s32 %v528, 64
    %v537 = vadd.s32 %v528, 72
    %v538 = vadd.s32 %v528, 80
    %v539 = vadd.s32 %v528, 88
    %v540 = vadd.s32 %v528, 96
    %v541 = vadd.s32 %v528, 104
    %v542 = vadd.s32 %v528, 112
    %v543 = vadd.s32 %v528, 120
    %vm544 = vcmp.lt.s32.totalorder %v528, 64
    %vm545 = vcmp.lt.s32.totalorder %v529, 64
    %vm546 = vcmp.lt.s32.totalorder %v530, 64
    %vm547 = vcmp.lt.s32.totalorder %v531, 64
    %vm548 = vcmp.lt.s32.totalorder %v532, 64
    %vm549 = vcmp.lt.s32.totalorder %v533, 64
    %vm550 = vcmp.lt.s32.totalorder %v534, 64
    %vm551 = vcmp.lt.s32.totalorder %v535, 64
    %vm552 = vcmp.lt.s32.totalorder %v536, 64
    %vm553 = vcmp.lt.s32.totalorder %v537, 64
    %vm554 = vcmp.lt.s32.totalorder %v538, 64
    %vm555 = vcmp.lt.s32.totalorder %v539, 64
    %vm556 = vcmp.lt.s32.totalorder %v540, 64
    %vm557 = vcmp.lt.s32.totalorder %v541, 64
    %vm558 = vcmp.lt.s32.totalorder %v542, 64
    %vm559 = vcmp.lt.s32.totalorder %v543, 64
    %v560 = vsel %vm544, 1.0, 0.0
    %v561 = vsel %vm545, 1.0, 0.0
    %v562 = vsel %vm546, 1.0, 0.0
    %v563 = vsel %vm547, 1.0, 0.0
    %v564 = vsel %vm548, 1.0, 0.0
    %v565 = vsel %vm549, 1.0, 0.0
    %v566 = vsel %vm550, 1.0, 0.0
    %v567 = vsel %vm551, 1.0, 0.0
    %v568 = vsel %vm552, 1.0, 0.0
    %v569 = vsel %vm553, 1.0, 0.0
    %v570 = vsel %vm554, 1.0, 0.0
    %v571 = vsel %vm555, 1.0, 0.0
    %v572 = vsel %vm556, 1.0, 0.0
    %v573 = vsel %vm557, 1.0, 0.0
    %v574 = vsel %vm558, 1.0, 0.0
    %v575 = vsel %vm559, 1.0, 0.0
    %v576 = vlog2.pop %v511
    %v577 = vmul.f32 %v576, 0.6931472
    %v578 = vlog2.pop %v512
    %v579 = vmul.f32 %v578, 0.6931472
    %v580 = vlog2.pop %v513
    %v581 = vmul.f32 %v580, 0.6931472
    %v582 = vlog2.pop %v514
    %v583 = vmul.f32 %v582, 0.6931472
    %v584 = vlog2.pop %v515
    %v585 = vmul.f32 %v584, 0.6931472
    %v586 = vlog2.pop %v516
    %v587 = vmul.f32 %v586, 0.6931472
    %v588 = vlog2.pop %v517
    %v589 = vmul.f32 %v588, 0.6931472
    %v590 = vlog2.pop %v518
    %v591 = vmul.f32 %v590, 0.6931472
    %v592 = vlog2.pop %v519
    %v593 = vmul.f32 %v592, 0.6931472
    %v594 = vlog2.pop %v520
    %v595 = vmul.f32 %v594, 0.6931472
    %v596 = vlog2.pop %v521
    %v597 = vmul.f32 %v596, 0.6931472
    %v598 = vlog2.pop %v522
    %v599 = vmul.f32 %v598, 0.6931472
    %v600 = vlog2.pop %v523
    %v601 = vmul.f32 %v600, 0.6931472
    %v602 = vlog2.pop %v524
    %v603 = vmul.f32 %v602, 0.6931472
    %v604 = vlog2.pop %v525
    %v605 = vmul.f32 %v604, 0.6931472
    %v606 = vlog2.pop %v526
    %v607 = vmul.f32 %v606, 0.6931472
    %v608 = vmul.f32 %v560, %v577
    %v609 = vmul.f32 %v561, %v579
    %v610 = vmul.f32 %v562, %v581
    %v611 = vmul.f32 %v563, %v583
    %v612 = vmul.f32 %v564, %v585
    %v613 = vmul.f32 %v565, %v587
    %v614 = vmul.f32 %v566, %v589
    %v615 = vmul.f32 %v567, %v591
    %v616 = vmul.f32 %v568, %v593
    %v617 = vmul.f32 %v569, %v595
    %v618 = vmul.f32 %v570, %v597
    %v619 = vmul.f32 %v571, %v599
    %v620 = vmul.f32 %v572, %v601
    %v621 = vmul.f32 %v573, %v603
    %v622 = vmul.f32 %v574, %v605
    %v623 = vmul.f32 %v575, %v607
    %v624 = vsub.f32 1.0, %v560
    %v625 = vsub.f32 1.0, %v561
    %v626 = vsub.f32 1.0, %v562
    %v627 = vsub.f32 1.0, %v563
    %v628 = vsub.f32 1.0, %v564
    %v629 = vsub.f32 1.0, %v565
    %v630 = vsub.f32 1.0, %v566
    %v631 = vsub.f32 1.0, %v567
    %v632 = vsub.f32 1.0, %v568
    %v633 = vsub.f32 1.0, %v569
    %v634 = vsub.f32 1.0, %v570
    %v635 = vsub.f32 1.0, %v571
    %v636 = vsub.f32 1.0, %v572
    %v637 = vsub.f32 1.0, %v573
    %v638 = vsub.f32 1.0, %v574
    %v639 = vsub.f32 1.0, %v575
    %v640 = vsub.f32 1.0, %v511
    %v641 = vsub.f32 1.0, %v512
    %v642 = vsub.f32 1.0, %v513
    %v643 = vsub.f32 1.0, %v514
    %v644 = vsub.f32 1.0, %v515
    %v645 = vsub.f32 1.0, %v516
    %v646 = vsub.f32 1.0, %v517
    %v647 = vsub.f32 1.0, %v518
    %v648 = vsub.f32 1.0, %v519
    %v649 = vsub.f32 1.0, %v520
    %v650 = vsub.f32 1.0, %v521
    %v651 = vsub.f32 1.0, %v522
    %v652 = vsub.f32 1.0, %v523
    %v653 = vsub.f32 1.0, %v524
    %v654 = vsub.f32 1.0, %v525
    %v655 = vsub.f32 1.0, %v526
    %v656 = vlog2.pop %v640
    %v657 = vmul.f32 %v656, 0.6931472
    %v658 = vlog2.pop %v641
    %v659 = vmul.f32 %v658, 0.6931472
    %v660 = vlog2.pop %v642
    %v661 = vmul.f32 %v660, 0.6931472
    %v662 = vlog2.pop %v643
    %v663 = vmul.f32 %v662, 0.6931472
    %v664 = vlog2.pop %v644
    %v665 = vmul.f32 %v664, 0.6931472
    %v666 = vlog2.pop %v645
    %v667 = vmul.f32 %v666, 0.6931472
    %v668 = vlog2.pop %v646
    %v669 = vmul.f32 %v668, 0.6931472
    %v670 = vlog2.pop %v647
    %v671 = vmul.f32 %v670, 0.6931472
    %v672 = vlog2.pop %v648
    %v673 = vmul.f32 %v672, 0.6931472
    %v674 = vlog2.pop %v649
    %v675 = vmul.f32 %v674, 0.6931472
    %v676 = vlog2.pop %v650
    %v677 = vmul.f32 %v676, 0.6931472
    %v678 = vlog2.pop %v651
    %v679 = vmul.f32 %v678, 0.6931472
    %v680 = vlog2.pop %v652
    %v681 = vmul.f32 %v680, 0.6931472
    %v682 = vlog2.pop %v653
    %v683 = vmul.f32 %v682, 0.6931472
    %v684 = vlog2.pop %v654
    %v685 = vmul.f32 %v684, 0.6931472
    %v686 = vlog2.pop %v655
    %v687 = vmul.f32 %v686, 0.6931472
    %v688 = vmul.f32 %v624, %v657
    %v689 = vmul.f32 %v625, %v659
    %v690 = vmul.f32 %v626, %v661
    %v691 = vmul.f32 %v627, %v663
    %v692 = vmul.f32 %v628, %v665
    %v693 = vmul.f32 %v629, %v667
    %v694 = vmul.f32 %v630, %v669
    %v695 = vmul.f32 %v631, %v671
    %v696 = vmul.f32 %v632, %v673
    %v697 = vmul.f32 %v633, %v675
    %v698 = vmul.f32 %v634, %v677
    %v699 = vmul.f32 %v635, %v679
    %v700 = vmul.f32 %v636, %v681
    %v701 = vmul.f32 %v637, %v683
    %v702 = vmul.f32 %v638, %v685
    %v703 = vmul.f32 %v639, %v687
    %v704 = vadd.f32 %v608, %v688
    %v705 = vadd.f32 %v609, %v689
    %v706 = vadd.f32 %v610, %v690
    %v707 = vadd.f32 %v611, %v691
    %v708 = vadd.f32 %v612, %v692
    %v709 = vadd.f32 %v613, %v693
    %v710 = vadd.f32 %v614, %v694
    %v711 = vadd.f32 %v615, %v695
    %v712 = vadd.f32 %v616, %v696
    %v713 = vadd.f32 %v617, %v697
    %v714 = vadd.f32 %v618, %v698
    %v715 = vadd.f32 %v619, %v699
    %v716 = vadd.f32 %v620, %v700
    %v717 = vadd.f32 %v621, %v701
    %v718 = vadd.f32 %v622, %v702
    %v719 = vadd.f32 %v623, %v703
    %v720 = vsub.f32 0.0, %v704
    %v721 = vsub.f32 0.0, %v705
    %v722 = vsub.f32 0.0, %v706
    %v723 = vsub.f32 0.0, %v707
    %v724 = vsub.f32 0.0, %v708
    %v725 = vsub.f32 0.0, %v709
    %v726 = vsub.f32 0.0, %v710
    %v727 = vsub.f32 0.0, %v711
    %v728 = vsub.f32 0.0, %v712
    %v729 = vsub.f32 0.0, %v713
    %v730 = vsub.f32 0.0, %v714
    %v731 = vsub.f32 0.0, %v715
    %v732 = vsub.f32 0.0, %v716
    %v733 = vsub.f32 0.0, %v717
    %v734 = vsub.f32 0.0, %v718
    %v735 = vsub.f32 0.0, %v719
    %vm736 = vcmask 7168
    %v737 = vsel %vm736, %v720, 0.0
    %v738 = vsel %vm736, %v721, 0.0
    %v739 = vadd.f32 %v737, %v738
    %v740 = vsel %vm736, %v722, 0.0
    %v741 = vadd.f32 %v739, %v740
    %v742 = vsel %vm736, %v723, 0.0
    %v743 = vadd.f32 %v741, %v742
    %v744 = vsel %vm736, %v724, 0.0
    %v745 = vadd.f32 %v743, %v744
    %v746 = vsel %vm736, %v725, 0.0
    %v747 = vadd.f32 %v745, %v746
    %v748 = vsel %vm736, %v726, 0.0
    %v749 = vadd.f32 %v747, %v748
    %v750 = vsel %vm736, %v727, 0.0
    %v751 = vadd.f32 %v749, %v750
    %v752 = vsel %vm736, %v728, 0.0
    %v753 = vadd.f32 %v751, %v752
    %v754 = vsel %vm736, %v729, 0.0
    %v755 = vadd.f32 %v753, %v754
    %v756 = vsel %vm736, %v730, 0.0
    %v757 = vadd.f32 %v755, %v756
    %v758 = vsel %vm736, %v731, 0.0
    %v759 = vadd.f32 %v757, %v758
    %v760 = vsel %vm736, %v732, 0.0
    %v761 = vadd.f32 %v759, %v760
    %v762 = vsel %vm736, %v733, 0.0
    %v763 = vadd.f32 %v761, %v762
    %v764 = vsel %vm736, %v734, 0.0
    %v765 = vadd.f32 %v763, %v764
    %v766 = vsel %vm736, %v735, 0.0
    %v767 = vadd.f32 %v765, %v766
    %768 = vadd.xlane.f32.xlu0 %v767
    %v769 = vpop.xlane.xlu0 %768
    %v770 = vrot.slane %v769, 4
    %v771 = vadd.f32 %v769, %v770
    %v772 = vrot.slane %v771, 2
    %v773 = vadd.f32 %v771, %v772
    %v774 = vrot.slane %v773, 1
    %v775 = vadd.f32 %v773, %v774
    %s776 = vtos %v775
    %v777 = vstv %s776
    %v778 = vrcp.pop 128.0
    %v779 = vmul.f32 %v777, %v778
    %vm780 = vcmask 0
    %781 = vst.msk [vmem:[#allocation3] sm:$0x1] %vm780, %v779
    // Predicated region
    $region22: #{gmae_forward.10} parent=1 // pred_check
      _
    $region23: #{gmae_forward.10} parent=1 // pred_check_branch
      %783 = sbr.rel (0) target = $region25
    $region24: #{gmae_forward.10} parent=1 // pred_region
      %s785 = ssub.s32 16, 16
      %786 = vsyncadd [#allocation4], %s785
      %s788 = sshll.u32 [#allocation3], 4
      %s789 = int_to_ptr.vmem [resolvable:$true] %s788
      %791 = dma.vmem_to_hbm [thread:$0]  %s789, 16, %s5, [#allocation4]
    $region25: #{gmae_forward.10} parent=1 // pred_fallthru
      _
    // Predicated region
    $region26: #{gmae_forward.10} parent=1 // pred_check
      _
    $region27: #{gmae_forward.10} parent=1 // pred_check_branch
      %793 = sbr.rel (0) target = $region29
    $region28: #{gmae_forward.10} parent=1 // pred_region
      %794 = dma.done [#allocation4], 16
    $region29: #{gmae_forward.10} parent=1 // pred_fallthru
      _
    %795 = vsyncpa [#allocation4], 1

</llo_original>
